<compile_context>
chip_gen: v5e
topology: v5e:2x2
jax: 0.10.0
libtpu: 0.0.40
codegen_flags: <defaults>
</compile_context>

<pallas_src>
import jax
import jax.numpy as jnp
from jax.experimental import pallas as pl
from jax.experimental.pallas import tpu as pltpu

# ---- small synthetic config (stands in for PubMedBERT: D=768, L=12, S=256) ----
B = 2            # batch
S = 8            # sequence length (module's max_length=256, shrunk)
D = 128          # hidden size (lane-dense: multiple of 128)
H = 4            # attention heads
HD = D // H      # head dim
L = 2            # transformer layers
MLP = 4 * D      # FFN inner dim (BERT ratio)
VOCAB = 64       # vocab size
PAD_ID = 0
LN_EPS = 1e-12
SCALE = 1.0 / float(HD) ** 0.5


def _layernorm(v, g, b):
    mu = jnp.mean(v, axis=-1, keepdims=True)
    var = jnp.mean(jnp.square(v - mu), axis=-1, keepdims=True)
    return (v - mu) * jax.lax.rsqrt(var + LN_EPS) * g + b


def encoder_kernel(
    x_ref,      # (1, S, D)   f32 embedded tokens (per-batch, constant over l)
    bias_ref,   # (1, 1, S)   f32 additive key mask (-1e9 at pad positions)
    embg_ref,   # (1, D)      embedding LN gamma
    embb_ref,   # (1, D)      embedding LN beta
    wq_ref,     # (1, H, D, HD)  bf16   -- streamed per layer
    bq_ref,     # (1, H, 1, HD)  f32
    wk_ref,     # (1, H, D, HD)  bf16
    bk_ref,     # (1, H, 1, HD)  f32
    wv_ref,     # (1, H, D, HD)  bf16
    bv_ref,     # (1, H, 1, HD)  f32
    wo_ref,     # (1, H, HD, D)  bf16
    bo_ref,     # (1, 1, D)      f32
    ln1g_ref,   # (1, 1, D)
    ln1b_ref,   # (1, 1, D)
    w1_ref,     # (1, D, MLP)    bf16
    b1_ref,     # (1, 1, MLP)    f32
    w2_ref,     # (1, MLP, D)    bf16
    b2_ref,     # (1, 1, D)      f32
    ln2g_ref,   # (1, 1, D)
    ln2b_ref,   # (1, 1, D)
    o_ref,      # (1, S, D)   f32 running hidden state, resident across layer axis
):
    l = pl.program_id(1)

    # Embedding LayerNorm once per batch element; result lives in the output
    # block, which stays resident in VMEM across the (arbitrary) layer axis.
    @pl.when(l == 0)
    def _():
        o_ref[0] = _layernorm(x_ref[0], embg_ref[...], embb_ref[...])

    x = o_ref[0]                                              # (S, D) f32
    xb = jnp.broadcast_to(x.astype(jnp.bfloat16)[None], (H, S, D))

    # ---- multi-head self-attention (head-batched, no per-head loop) ----
    q = jnp.einsum("hsd,hdf->hsf", xb, wq_ref[0],
                   preferred_element_type=jnp.float32) + bq_ref[0]
    q = q * SCALE                                             # scale folded into Q
    k = jnp.einsum("hsd,hdf->hsf", xb, wk_ref[0],
                   preferred_element_type=jnp.float32) + bk_ref[0]
    v = jnp.einsum("hsd,hdf->hsf", xb, wv_ref[0],
                   preferred_element_type=jnp.float32) + bv_ref[0]

    sc = jnp.einsum("hqd,hkd->hqk", q.astype(jnp.bfloat16), k.astype(jnp.bfloat16),
                    preferred_element_type=jnp.float32)       # (H, S, S)
    sc = sc + bias_ref[0]                                     # mask padded keys

    m = jnp.max(sc, axis=-1, keepdims=True)
    p = jnp.exp(sc - m)                                       # EUP
    p = p * pl.reciprocal(jnp.sum(p, axis=-1, keepdims=True), approx=True)

    ctx = jnp.einsum("hqk,hkd->hqd", p.astype(jnp.bfloat16), v.astype(jnp.bfloat16),
                     preferred_element_type=jnp.float32)      # (H, S, HD)
    attn_h = jnp.einsum("hqd,hdf->hqf", ctx.astype(jnp.bfloat16), wo_ref[0],
                        preferred_element_type=jnp.float32)   # (H, S, D)
    attn = jnp.sum(attn_h, axis=0) + bo_ref[0]                # (S, D)
    x = _layernorm(x + attn, ln1g_ref[0], ln1b_ref[0])        # post-LN residual

    # ---- feed-forward (GELU) ----
    hdn = jnp.dot(x.astype(jnp.bfloat16), w1_ref[0],
                  preferred_element_type=jnp.float32) + b1_ref[0]
    # TODO(synk): HF PubMedBERT uses exact erf GELU; tanh approximation kept
    # here for guaranteed Mosaic lowering.
    hdn = jax.nn.gelu(hdn)
    hdn = jnp.dot(hdn.astype(jnp.bfloat16), w2_ref[0],
                  preferred_element_type=jnp.float32) + b2_ref[0]
    x = _layernorm(x + hdn, ln2g_ref[0], ln2b_ref[0])

    o_ref[0] = x


def biomedclip_text_tokens(x_emb, attn_bias, params):
    """Run the Pallas encoder. Returns per-token hidden states (B, S, D) f32."""

    def layer3(d1, d2):  # one layer's block of a (L, d1, d2) tensor
        return pl.BlockSpec((1, d1, d2), lambda b, l: (l, 0, 0))

    def layer4(d1, d2, d3):  # one layer's block of a (L, d1, d2, d3) tensor
        return pl.BlockSpec((1, d1, d2, d3), lambda b, l: (l, 0, 0, 0))

    in_specs = [
        pl.BlockSpec((1, S, D), lambda b, l: (b, 0, 0)),   # x_emb (const over l)
        pl.BlockSpec((1, 1, S), lambda b, l: (b, 0, 0)),   # attn bias
        pl.BlockSpec((1, D), lambda b, l: (0, 0)),         # emb LN gamma
        pl.BlockSpec((1, D), lambda b, l: (0, 0)),         # emb LN beta
        layer4(H, D, HD),   # wq
        layer4(H, 1, HD),   # bq
        layer4(H, D, HD),   # wk
        layer4(H, 1, HD),   # bk
        layer4(H, D, HD),   # wv
        layer4(H, 1, HD),   # bv
        layer4(H, HD, D),   # wo (head-major)
        layer3(1, D),       # bo
        layer3(1, D),       # ln1 gamma
        layer3(1, D),       # ln1 beta
        layer3(D, MLP),     # w1
        layer3(1, MLP),     # b1
        layer3(MLP, D),     # w2
        layer3(1, D),       # b2
        layer3(1, D),       # ln2 gamma
        layer3(1, D),       # ln2 beta
    ]
    # Output block index constant in l -> hidden state resident across layers;
    # layer axis innermost + "arbitrary", batch axis "parallel" (feeds both TCs
    # on v7x; neutral on v5e/v6e).
    out_spec = pl.BlockSpec((1, S, D), lambda b, l: (b, 0, 0))
    return pl.pallas_call(
        encoder_kernel,
        out_shape=jax.ShapeDtypeStruct((B, S, D), jnp.float32),
        grid=(B, L),
        in_specs=in_specs,
        out_specs=out_spec,
        compiler_params=pltpu.CompilerParams(
            dimension_semantics=("parallel", "arbitrary"),
            # At real scale (D=768, MLP=3072) one bf16 layer is ~14 MB; x2
            # double-buffering + activations needs an explicit budget,
            # especially on v7x (64 MiB physical VMEM).
            vmem_limit_bytes=48 * 1024 * 1024,
        ),
    )(x_emb, attn_bias, *params)


def init_params(key):
    ks = jax.random.split(key, 10)
    sd = 0.02
    tok_emb = jax.random.normal(ks[0], (VOCAB, D), jnp.float32) * sd
    pos_emb = jax.random.normal(ks[1], (S, D), jnp.float32) * sd
    typ_emb = jax.random.normal(ks[2], (2, D), jnp.float32) * sd

    emb_g = jnp.ones((1, D), jnp.float32)
    emb_b = jnp.zeros((1, D), jnp.float32)

    wqkv = jax.random.normal(ks[3], (L, D, 3 * D), jnp.float32) * sd
    bqkv = jax.random.normal(ks[4], (L, 3 * D), jnp.float32) * sd
    wo = jax.random.normal(ks[5], (L, D, D), jnp.float32) * sd
    bo = jax.random.normal(ks[6], (L, D), jnp.float32) * sd
    w1 = jax.random.normal(ks[7], (L, D, MLP), jnp.float32) * sd
    b1 = jnp.zeros((L, MLP), jnp.float32)
    w2 = jax.random.normal(ks[8], (L, MLP, D), jnp.float32) * sd
    b2 = jnp.zeros((L, D), jnp.float32)
    ln1_g = jnp.ones((L, D), jnp.float32)
    ln1_b = jnp.zeros((L, D), jnp.float32)
    ln2_g = jnp.ones((L, D), jnp.float32)
    ln2_b = jnp.zeros((L, D), jnp.float32)

    # --- host-side repack (free): head-major layout + bf16 matmul weights ---
    wq = wqkv[:, :, 0 * D:1 * D].reshape(L, D, H, HD).transpose(0, 2, 1, 3)
    wk = wqkv[:, :, 1 * D:2 * D].reshape(L, D, H, HD).transpose(0, 2, 1, 3)
    wv = wqkv[:, :, 2 * D:3 * D].reshape(L, D, H, HD).transpose(0, 2, 1, 3)
    bq = bqkv[:, 0 * D:1 * D].reshape(L, H, 1, HD)
    bk = bqkv[:, 1 * D:2 * D].reshape(L, H, 1, HD)
    bv = bqkv[:, 2 * D:3 * D].reshape(L, H, 1, HD)
    wo_h = wo.reshape(L, H, HD, D)          # rows grouped by head (concat order)

    bf = lambda a: a.astype(jnp.bfloat16)
    kernel_params = (
        emb_g, emb_b,
        bf(wq), bq, bf(wk), bk, bf(wv), bv,
        bf(wo_h), bo.reshape(L, 1, D),
        ln1_g.reshape(L, 1, D), ln1_b.reshape(L, 1, D),
        bf(w1), b1.reshape(L, 1, MLP),
        bf(w2), b2.reshape(L, 1, D),
        ln2_g.reshape(L, 1, D), ln2_b.reshape(L, 1, D),
    )
    return tok_emb, pos_emb, typ_emb, kernel_params


if __name__ == "__main__":
    key = jax.random.PRNGKey(0)
    k_ids, k_params = jax.random.split(key)

    tok_emb, pos_emb, typ_emb, kernel_params = init_params(k_params)

    # "tokenizer" output: integer token ids padded to context length.
    # TODO(synk): the real module runs the HF WordPiece tokenizer on raw
    # strings; there is no Pallas equivalent, so we start from token ids.
    token_ids = jax.random.randint(k_ids, (B, S), 1, VOCAB)
    token_ids = token_ids.at[1, S - 2:].set(PAD_ID)  # exercise padding mask

    # glue: embedding lookups stay in plain JAX (gather); token_type ids are
    # all zeros for a single text segment.
    x_emb = tok_emb[token_ids] + pos_emb[None, :, :] + typ_emb[0][None, None, :]
    attn_bias = jnp.where(token_ids == PAD_ID, -1e9, 0.0)     # (B, S)
    attn_bias = attn_bias.astype(jnp.float32).reshape(B, 1, S)

    z = biomedclip_text_tokens(x_emb, attn_bias, kernel_params)
    z = jax.block_until_ready(z)
    assert z.shape == (B, S, D) and z.dtype == jnp.float32
    assert bool(jnp.all(jnp.isfinite(z)))
    print("KERNEL_OK")
</pallas_src>

<mosaic_0001>
module attributes {stable_mosaic.version = 11 : i64} {
  func.func @encoder_kernel(%arg0: i32, %arg1: i32, %arg2: memref<1x8x128xf32, #tpu.memory_space<vmem>>, %arg3: memref<1x1x8xf32, #tpu.memory_space<vmem>>, %arg4: memref<1x128xf32, #tpu.memory_space<vmem>>, %arg5: memref<1x128xf32, #tpu.memory_space<vmem>>, %arg6: memref<1x4x128x32xbf16, #tpu.memory_space<vmem>>, %arg7: memref<1x4x1x32xf32, #tpu.memory_space<vmem>>, %arg8: memref<1x4x128x32xbf16, #tpu.memory_space<vmem>>, %arg9: memref<1x4x1x32xf32, #tpu.memory_space<vmem>>, %arg10: memref<1x4x128x32xbf16, #tpu.memory_space<vmem>>, %arg11: memref<1x4x1x32xf32, #tpu.memory_space<vmem>>, %arg12: memref<1x4x32x128xbf16, #tpu.memory_space<vmem>>, %arg13: memref<1x1x128xf32, #tpu.memory_space<vmem>>, %arg14: memref<1x1x128xf32, #tpu.memory_space<vmem>>, %arg15: memref<1x1x128xf32, #tpu.memory_space<vmem>>, %arg16: memref<1x128x512xbf16, #tpu.memory_space<vmem>>, %arg17: memref<1x1x512xf32, #tpu.memory_space<vmem>>, %arg18: memref<1x512x128xbf16, #tpu.memory_space<vmem>>, %arg19: memref<1x1x128xf32, #tpu.memory_space<vmem>>, %arg20: memref<1x1x128xf32, #tpu.memory_space<vmem>>, %arg21: memref<1x1x128xf32, #tpu.memory_space<vmem>>, %arg22: memref<1x8x128xf32, #tpu.memory_space<vmem>>) attributes {dimension_semantics = [#tpu.dimension_semantics<parallel>, #tpu.dimension_semantics<arbitrary>], iteration_bounds = array<i64: 2, 2>, scalar_prefetch = 0 : i64, scratch_operands = 0 : i64, tpu.core_type = #tpu.core_type<tc>, window_params = [{transform_indices = @transform_0, window_bounds = array<i64: 1, 8, 128>}, {transform_indices = @transform_1, window_bounds = array<i64: 1, 1, 8>}, {pipeline_mode = #tpu.pipeline_mode<synchronous>, transform_indices = @transform_2, window_bounds = array<i64: 1, 128>}, {pipeline_mode = #tpu.pipeline_mode<synchronous>, transform_indices = @transform_3, window_bounds = array<i64: 1, 128>}, {transform_indices = @transform_4, window_bounds = array<i64: 1, 4, 128, 32>}, {transform_indices = @transform_5, window_bounds = array<i64: 1, 4, 1, 32>}, {transform_indices = @transform_6, window_bounds = array<i64: 1, 4, 128, 32>}, {transform_indices = @transform_7, window_bounds = array<i64: 1, 4, 1, 32>}, {transform_indices = @transform_8, window_bounds = array<i64: 1, 4, 128, 32>}, {transform_indices = @transform_9, window_bounds = array<i64: 1, 4, 1, 32>}, {transform_indices = @transform_10, window_bounds = array<i64: 1, 4, 32, 128>}, {transform_indices = @transform_11, window_bounds = array<i64: 1, 1, 128>}, {transform_indices = @transform_12, window_bounds = array<i64: 1, 1, 128>}, {transform_indices = @transform_13, window_bounds = array<i64: 1, 1, 128>}, {transform_indices = @transform_14, window_bounds = array<i64: 1, 128, 512>}, {transform_indices = @transform_15, window_bounds = array<i64: 1, 1, 512>}, {transform_indices = @transform_16, window_bounds = array<i64: 1, 512, 128>}, {transform_indices = @transform_17, window_bounds = array<i64: 1, 1, 128>}, {transform_indices = @transform_18, window_bounds = array<i64: 1, 1, 128>}, {transform_indices = @transform_19, window_bounds = array<i64: 1, 1, 128>}, {transform_indices = @transform_20, window_bounds = array<i64: 1, 8, 128>}]} {
    %c0_i32 = arith.constant 0 : i32
    %0 = arith.cmpi eq, %arg1, %c0_i32 : i32
    %1 = arith.extui %0 : i1 to i32
    %c0_i32_0 = arith.constant 0 : i32
    %2 = arith.cmpi ne, %1, %c0_i32_0 : i32
    scf.if %2 {
      %c0_89 = arith.constant 0 : index
      %c0_90 = arith.constant 0 : index
      %c0_91 = arith.constant 0 : index
      %148 = vector.load %arg2[%c0_89, %c0_90, %c0_91] : memref<1x8x128xf32, #tpu.memory_space<vmem>>, vector<1x8x128xf32>
      %149 = vector.shape_cast %148 : vector<1x8x128xf32> to vector<8x128xf32>
      %c0_92 = arith.constant 0 : index
      %c0_93 = arith.constant 0 : index
      %150 = vector.load %arg4[%c0_92, %c0_93] : memref<1x128xf32, #tpu.memory_space<vmem>>, vector<1x128xf32>
      %c0_94 = arith.constant 0 : index
      %c0_95 = arith.constant 0 : index
      %151 = vector.load %arg5[%c0_94, %c0_95] : memref<1x128xf32, #tpu.memory_space<vmem>>, vector<1x128xf32>
      %cst_96 = arith.constant dense<0.000000e+00> : vector<8xf32>
      %152 = vector.multi_reduction <add>, %149, %cst_96 [1] : vector<8x128xf32> to vector<8xf32>
      %153 = vector.shape_cast %152 : vector<8xf32> to vector<8x1xf32>
      %cst_97 = arith.constant 1.280000e+02 : f32
      %154 = vector.broadcast %cst_97 : f32 to vector<8x1xf32>
      %155 = arith.divf %153, %154 : vector<8x1xf32>
      %156 = vector.broadcast %155 : vector<8x1xf32> to vector<8x128xf32>
      %157 = arith.subf %149, %156 : vector<8x128xf32>
      %158 = arith.mulf %157, %157 : vector<8x128xf32>
      %cst_98 = arith.constant dense<0.000000e+00> : vector<8xf32>
      %159 = vector.multi_reduction <add>, %158, %cst_98 [1] : vector<8x128xf32> to vector<8xf32>
      %160 = vector.shape_cast %159 : vector<8xf32> to vector<8x1xf32>
      %cst_99 = arith.constant 1.280000e+02 : f32
      %161 = vector.broadcast %cst_99 : f32 to vector<8x1xf32>
      %162 = arith.divf %160, %161 : vector<8x1xf32>
      %163 = vector.broadcast %155 : vector<8x1xf32> to vector<8x128xf32>
      %164 = arith.subf %149, %163 : vector<8x128xf32>
      %cst_100 = arith.constant 9.99999996E-13 : f32
      %165 = vector.broadcast %cst_100 : f32 to vector<8x1xf32>
      %166 = arith.addf %162, %165 : vector<8x1xf32>
      %167 = math.rsqrt %166 : vector<8x1xf32>
      %168 = vector.broadcast %167 : vector<8x1xf32> to vector<8x128xf32>
      %169 = arith.mulf %164, %168 : vector<8x128xf32>
      %170 = vector.broadcast %150 : vector<1x128xf32> to vector<8x128xf32>
      %171 = arith.mulf %169, %170 : vector<8x128xf32>
      %172 = vector.broadcast %151 : vector<1x128xf32> to vector<8x128xf32>
      %173 = arith.addf %171, %172 : vector<8x128xf32>
      %c0_101 = arith.constant 0 : index
      %c0_102 = arith.constant 0 : index
      %c0_103 = arith.constant 0 : index
      %174 = vector.load %arg22[%c0_101, %c0_102, %c0_103] : memref<1x8x128xf32, #tpu.memory_space<vmem>>, vector<1x8x128xf32>
      %175 = vector.shape_cast %174 : vector<1x8x128xf32> to vector<8x128xf32>
      %176 = vector.shape_cast %173 : vector<8x128xf32> to vector<1x8x128xf32>
      tpu.vector_store %arg22[%c0_101, %c0_102, %c0_103], %176 {strides = array<i32>} : memref<1x8x128xf32, #tpu.memory_space<vmem>>, vector<1x8x128xf32>,
    } else {
    }
    %c0 = arith.constant 0 : index
    %c0_1 = arith.constant 0 : index
    %c0_2 = arith.constant 0 : index
    %3 = vector.load %arg22[%c0, %c0_1, %c0_2] : memref<1x8x128xf32, #tpu.memory_space<vmem>>, vector<1x8x128xf32>
    %4 = vector.shape_cast %3 : vector<1x8x128xf32> to vector<8x128xf32>
    %5 = arith.truncf %4 : vector<8x128xf32> to vector<8x128xbf16>
    %6 = vector.shape_cast %5 : vector<8x128xbf16> to vector<1x8x128xbf16>
    %7 = vector.shape_cast %6 : vector<1x8x128xbf16> to vector<1x8x128xbf16>
    %8 = vector.broadcast %7 : vector<1x8x128xbf16> to vector<4x8x128xbf16>
    %c0_3 = arith.constant 0 : index
    %c0_4 = arith.constant 0 : index
    %c0_5 = arith.constant 0 : index
    %c0_6 = arith.constant 0 : index
    %9 = vector.load %arg6[%c0_3, %c0_4, %c0_5, %c0_6] : memref<1x4x128x32xbf16, #tpu.memory_space<vmem>>, vector<1x4x128x32xbf16>
    %10 = vector.shape_cast %9 : vector<1x4x128x32xbf16> to vector<4x128x32xbf16>
    "tpu.trace_start"() <{level = 10 : i32, message = "hsd,hdf->hsf"}> : () -> ()
    %cst = arith.constant dense<0.000000e+00> : vector<4x8x32xf32>
    %11 = tpu.matmul %8, %10, %cst {dimension_numbers = #tpu.dot_dimension_numbers<[2], [1], [1], [2], [0, 0, 0, 1, 1, 2], [0], [0]>} : vector<4x8x128xbf16>, vector<4x128x32xbf16>, vector<4x8x32xf32> -> vector<4x8x32xf32>
    "tpu.trace_stop"() : () -> ()
    %c0_7 = arith.constant 0 : index
    %c0_8 = arith.constant 0 : index
    %c0_9 = arith.constant 0 : index
    %c0_10 = arith.constant 0 : index
    %12 = vector.load %arg7[%c0_7, %c0_8, %c0_9, %c0_10] : memref<1x4x1x32xf32, #tpu.memory_space<vmem>>, vector<1x4x1x32xf32>
    %13 = vector.shape_cast %12 : vector<1x4x1x32xf32> to vector<4x1x32xf32>
    %14 = vector.broadcast %13 : vector<4x1x32xf32> to vector<4x8x32xf32>
    %15 = arith.addf %11, %14 : vector<4x8x32xf32>
    %cst_11 = arith.constant 0.176776692 : f32
    %16 = vector.broadcast %cst_11 : f32 to vector<4x8x32xf32>
    %17 = arith.mulf %15, %16 : vector<4x8x32xf32>
    %c0_12 = arith.constant 0 : index
    %c0_13 = arith.constant 0 : index
    %c0_14 = arith.constant 0 : index
    %c0_15 = arith.constant 0 : index
    %18 = vector.load %arg8[%c0_12, %c0_13, %c0_14, %c0_15] : memref<1x4x128x32xbf16, #tpu.memory_space<vmem>>, vector<1x4x128x32xbf16>
    %19 = vector.shape_cast %18 : vector<1x4x128x32xbf16> to vector<4x128x32xbf16>
    "tpu.trace_start"() <{level = 10 : i32, message = "hsd,hdf->hsf"}> : () -> ()
    %cst_16 = arith.constant dense<0.000000e+00> : vector<4x8x32xf32>
    %20 = tpu.matmul %8, %19, %cst_16 {dimension_numbers = #tpu.dot_dimension_numbers<[2], [1], [1], [2], [0, 0, 0, 1, 1, 2], [0], [0]>} : vector<4x8x128xbf16>, vector<4x128x32xbf16>, vector<4x8x32xf32> -> vector<4x8x32xf32>
    "tpu.trace_stop"() : () -> ()
    %c0_17 = arith.constant 0 : index
    %c0_18 = arith.constant 0 : index
    %c0_19 = arith.constant 0 : index
    %c0_20 = arith.constant 0 : index
    %21 = vector.load %arg9[%c0_17, %c0_18, %c0_19, %c0_20] : memref<1x4x1x32xf32, #tpu.memory_space<vmem>>, vector<1x4x1x32xf32>
    %22 = vector.shape_cast %21 : vector<1x4x1x32xf32> to vector<4x1x32xf32>
    %23 = vector.broadcast %22 : vector<4x1x32xf32> to vector<4x8x32xf32>
    %24 = arith.addf %20, %23 : vector<4x8x32xf32>
    %c0_21 = arith.constant 0 : index
    %c0_22 = arith.constant 0 : index
    %c0_23 = arith.constant 0 : index
    %c0_24 = arith.constant 0 : index
    %25 = vector.load %arg10[%c0_21, %c0_22, %c0_23, %c0_24] : memref<1x4x128x32xbf16, #tpu.memory_space<vmem>>, vector<1x4x128x32xbf16>
    %26 = vector.shape_cast %25 : vector<1x4x128x32xbf16> to vector<4x128x32xbf16>
    "tpu.trace_start"() <{level = 10 : i32, message = "hsd,hdf->hsf"}> : () -> ()
    %cst_25 = arith.constant dense<0.000000e+00> : vector<4x8x32xf32>
    %27 = tpu.matmul %8, %26, %cst_25 {dimension_numbers = #tpu.dot_dimension_numbers<[2], [1], [1], [2], [0, 0, 0, 1, 1, 2], [0], [0]>} : vector<4x8x128xbf16>, vector<4x128x32xbf16>, vector<4x8x32xf32> -> vector<4x8x32xf32>
    "tpu.trace_stop"() : () -> ()
    %c0_26 = arith.constant 0 : index
    %c0_27 = arith.constant 0 : index
    %c0_28 = arith.constant 0 : index
    %c0_29 = arith.constant 0 : index
    %28 = vector.load %arg11[%c0_26, %c0_27, %c0_28, %c0_29] : memref<1x4x1x32xf32, #tpu.memory_space<vmem>>, vector<1x4x1x32xf32>
    %29 = vector.shape_cast %28 : vector<1x4x1x32xf32> to vector<4x1x32xf32>
    %30 = vector.broadcast %29 : vector<4x1x32xf32> to vector<4x8x32xf32>
    %31 = arith.addf %27, %30 : vector<4x8x32xf32>
    %32 = arith.truncf %17 : vector<4x8x32xf32> to vector<4x8x32xbf16>
    %33 = arith.truncf %24 : vector<4x8x32xf32> to vector<4x8x32xbf16>
    "tpu.trace_start"() <{level = 10 : i32, message = "hqd,hkd->hqk"}> : () -> ()
    %cst_30 = arith.constant dense<0.000000e+00> : vector<4x8x8xf32>
    %34 = tpu.matmul %32, %33, %cst_30 {dimension_numbers = #tpu.dot_dimension_numbers<[2], [2], [1], [1], [0, 0, 0, 1, 1, 1], [0], [0]>} : vector<4x8x32xbf16>, vector<4x8x32xbf16>, vector<4x8x8xf32> -> vector<4x8x8xf32>
    "tpu.trace_stop"() : () -> ()
    %c0_31 = arith.constant 0 : index
    %c0_32 = arith.constant 0 : index
    %c0_33 = arith.constant 0 : index
    %35 = vector.load %arg3[%c0_31, %c0_32, %c0_33] : memref<1x1x8xf32, #tpu.memory_space<vmem>>, vector<1x1x8xf32>
    %36 = vector.shape_cast %35 : vector<1x1x8xf32> to vector<1x8xf32>
    %37 = vector.shape_cast %36 : vector<1x8xf32> to vector<1x1x8xf32>
    %38 = vector.broadcast %37 : vector<1x1x8xf32> to vector<4x8x8xf32>
    %39 = arith.addf %34, %38 : vector<4x8x8xf32>
    %cst_34 = arith.constant dense<0xFF800000> : vector<4x8xf32>
    %40 = vector.multi_reduction <maximumf>, %39, %cst_34 [2] : vector<4x8x8xf32> to vector<4x8xf32>
    %41 = vector.shape_cast %40 : vector<4x8xf32> to vector<4x8x1xf32>
    %42 = vector.broadcast %41 : vector<4x8x1xf32> to vector<4x8x8xf32>
    %43 = arith.subf %39, %42 : vector<4x8x8xf32>
    %44 = math.exp %43 : vector<4x8x8xf32>
    %cst_35 = arith.constant dense<0.000000e+00> : vector<4x8xf32>
    %45 = vector.multi_reduction <add>, %44, %cst_35 [2] : vector<4x8x8xf32> to vector<4x8xf32>
    %46 = vector.shape_cast %45 : vector<4x8xf32> to vector<4x8x1xf32>
    %47 = tpu.reciprocal %46 {approx = true} : vector<4x8x1xf32> -> vector<4x8x1xf32>
    %48 = vector.broadcast %47 : vector<4x8x1xf32> to vector<4x8x8xf32>
    %49 = arith.mulf %44, %48 : vector<4x8x8xf32>
    %50 = arith.truncf %49 : vector<4x8x8xf32> to vector<4x8x8xbf16>
    %51 = arith.truncf %31 : vector<4x8x32xf32> to vector<4x8x32xbf16>
    "tpu.trace_start"() <{level = 10 : i32, message = "hqk,hkd->hqd"}> : () -> ()
    %cst_36 = arith.constant dense<0.000000e+00> : vector<4x8x32xf32>
    %52 = tpu.matmul %50, %51, %cst_36 {dimension_numbers = #tpu.dot_dimension_numbers<[2], [1], [1], [2], [0, 0, 0, 1, 1, 2], [0], [0]>} : vector<4x8x8xbf16>, vector<4x8x32xbf16>, vector<4x8x32xf32> -> vector<4x8x32xf32>
    "tpu.trace_stop"() : () -> ()
    %53 = arith.truncf %52 : vector<4x8x32xf32> to vector<4x8x32xbf16>
    %c0_37 = arith.constant 0 : index
    %c0_38 = arith.constant 0 : index
    %c0_39 = arith.constant 0 : index
    %c0_40 = arith.constant 0 : index
    %54 = vector.load %arg12[%c0_37, %c0_38, %c0_39, %c0_40] : memref<1x4x32x128xbf16, #tpu.memory_space<vmem>>, vector<1x4x32x128xbf16>
    %55 = vector.shape_cast %54 : vector<1x4x32x128xbf16> to vector<4x32x128xbf16>
    "tpu.trace_start"() <{level = 10 : i32, message = "hqd,hdf->hqf"}> : () -> ()
    %cst_41 = arith.constant dense<0.000000e+00> : vector<4x8x128xf32>
    %56 = tpu.matmul %53, %55, %cst_41 {dimension_numbers = #tpu.dot_dimension_numbers<[2], [1], [1], [2], [0, 0, 0, 1, 1, 2], [0], [0]>} : vector<4x8x32xbf16>, vector<4x32x128xbf16>, vector<4x8x128xf32> -> vector<4x8x128xf32>
    "tpu.trace_stop"() : () -> ()
    %cst_42 = arith.constant dense<0.000000e+00> : vector<8x128xf32>
    %57 = vector.multi_reduction <add>, %56, %cst_42 [0] : vector<4x8x128xf32> to vector<8x128xf32>
    %c0_43 = arith.constant 0 : index
    %c0_44 = arith.constant 0 : index
    %c0_45 = arith.constant 0 : index
    %58 = vector.load %arg13[%c0_43, %c0_44, %c0_45] : memref<1x1x128xf32, #tpu.memory_space<vmem>>, vector<1x1x128xf32>
    %59 = vector.shape_cast %58 : vector<1x1x128xf32> to vector<1x128xf32>
    %60 = vector.broadcast %59 : vector<1x128xf32> to vector<8x128xf32>
    %61 = arith.addf %57, %60 : vector<8x128xf32>
    %62 = arith.addf %4, %61 : vector<8x128xf32>
    %c0_46 = arith.constant 0 : index
    %c0_47 = arith.constant 0 : index
    %c0_48 = arith.constant 0 : index
    %63 = vector.load %arg14[%c0_46, %c0_47, %c0_48] : memref<1x1x128xf32, #tpu.memory_space<vmem>>, vector<1x1x128xf32>
    %64 = vector.shape_cast %63 : vector<1x1x128xf32> to vector<1x128xf32>
    %c0_49 = arith.constant 0 : index
    %c0_50 = arith.constant 0 : index
    %c0_51 = arith.constant 0 : index
    %65 = vector.load %arg15[%c0_49, %c0_50, %c0_51] : memref<1x1x128xf32, #tpu.memory_space<vmem>>, vector<1x1x128xf32>
    %66 = vector.shape_cast %65 : vector<1x1x128xf32> to vector<1x128xf32>
    %cst_52 = arith.constant dense<0.000000e+00> : vector<8xf32>
    %67 = vector.multi_reduction <add>, %62, %cst_52 [1] : vector<8x128xf32> to vector<8xf32>
    %68 = vector.shape_cast %67 : vector<8xf32> to vector<8x1xf32>
    %cst_53 = arith.constant 1.280000e+02 : f32
    %69 = vector.broadcast %cst_53 : f32 to vector<8x1xf32>
    %70 = arith.divf %68, %69 : vector<8x1xf32>
    %71 = vector.broadcast %70 : vector<8x1xf32> to vector<8x128xf32>
    %72 = arith.subf %62, %71 : vector<8x128xf32>
    %73 = arith.mulf %72, %72 : vector<8x128xf32>
    %cst_54 = arith.constant dense<0.000000e+00> : vector<8xf32>
    %74 = vector.multi_reduction <add>, %73, %cst_54 [1] : vector<8x128xf32> to vector<8xf32>
    %75 = vector.shape_cast %74 : vector<8xf32> to vector<8x1xf32>
    %cst_55 = arith.constant 1.280000e+02 : f32
    %76 = vector.broadcast %cst_55 : f32 to vector<8x1xf32>
    %77 = arith.divf %75, %76 : vector<8x1xf32>
    %78 = vector.broadcast %70 : vector<8x1xf32> to vector<8x128xf32>
    %79 = arith.subf %62, %78 : vector<8x128xf32>
    %cst_56 = arith.constant 9.99999996E-13 : f32
    %80 = vector.broadcast %cst_56 : f32 to vector<8x1xf32>
    %81 = arith.addf %77, %80 : vector<8x1xf32>
    %82 = math.rsqrt %81 : vector<8x1xf32>
    %83 = vector.broadcast %82 : vector<8x1xf32> to vector<8x128xf32>
    %84 = arith.mulf %79, %83 : vector<8x128xf32>
    %85 = vector.broadcast %64 : vector<1x128xf32> to vector<8x128xf32>
    %86 = arith.mulf %84, %85 : vector<8x128xf32>
    %87 = vector.broadcast %66 : vector<1x128xf32> to vector<8x128xf32>
    %88 = arith.addf %86, %87 : vector<8x128xf32>
    %89 = arith.truncf %88 : vector<8x128xf32> to vector<8x128xbf16>
    %c0_57 = arith.constant 0 : index
    %c0_58 = arith.constant 0 : index
    %c0_59 = arith.constant 0 : index
    %90 = vector.load %arg16[%c0_57, %c0_58, %c0_59] : memref<1x128x512xbf16, #tpu.memory_space<vmem>>, vector<1x128x512xbf16>
    %91 = vector.shape_cast %90 : vector<1x128x512xbf16> to vector<128x512xbf16>
    %cst_60 = arith.constant dense<0.000000e+00> : vector<8x512xf32>
    %92 = tpu.matmul %89, %91, %cst_60 {dimension_numbers = #tpu.dot_dimension_numbers<[1], [0], [0], [1], [0, 0, 1, 1], [], []>} : vector<8x128xbf16>, vector<128x512xbf16>, vector<8x512xf32> -> vector<8x512xf32>
    %c0_61 = arith.constant 0 : index
    %c0_62 = arith.constant 0 : index
    %c0_63 = arith.constant 0 : index
    %93 = vector.load %arg17[%c0_61, %c0_62, %c0_63] : memref<1x1x512xf32, #tpu.memory_space<vmem>>, vector<1x1x512xf32>
    %94 = vector.shape_cast %93 : vector<1x1x512xf32> to vector<1x512xf32>
    %95 = vector.broadcast %94 : vector<1x512xf32> to vector<8x512xf32>
    %96 = arith.addf %92, %95 : vector<8x512xf32>
    %97 = arith.mulf %96, %96 : vector<8x512xf32>
    %98 = arith.mulf %96, %97 : vector<8x512xf32>
    %cst_64 = arith.constant 4.471500e-02 : f32
    %99 = vector.broadcast %cst_64 : f32 to vector<8x512xf32>
    %100 = arith.mulf %99, %98 : vector<8x512xf32>
    %101 = arith.addf %96, %100 : vector<8x512xf32>
    %cst_65 = arith.constant 0.797884583 : f32
    %102 = vector.broadcast %cst_65 : f32 to vector<8x512xf32>
    %103 = arith.mulf %102, %101 : vector<8x512xf32>
    %104 = math.tanh %103 : vector<8x512xf32>
    %cst_66 = arith.constant 1.000000e+00 : f32
    %105 = vector.broadcast %cst_66 : f32 to vector<8x512xf32>
    %106 = arith.addf %105, %104 : vector<8x512xf32>
    %cst_67 = arith.constant 5.000000e-01 : f32
    %107 = vector.broadcast %cst_67 : f32 to vector<8x512xf32>
    %108 = arith.mulf %107, %106 : vector<8x512xf32>
    %109 = arith.mulf %96, %108 : vector<8x512xf32>
    %110 = arith.truncf %109 : vector<8x512xf32> to vector<8x512xbf16>
    %c0_68 = arith.constant 0 : index
    %c0_69 = arith.constant 0 : index
    %c0_70 = arith.constant 0 : index
    %111 = vector.load %arg18[%c0_68, %c0_69, %c0_70] : memref<1x512x128xbf16, #tpu.memory_space<vmem>>, vector<1x512x128xbf16>
    %112 = vector.shape_cast %111 : vector<1x512x128xbf16> to vector<512x128xbf16>
    %cst_71 = arith.constant dense<0.000000e+00> : vector<8x128xf32>
    %113 = tpu.matmul %110, %112, %cst_71 {dimension_numbers = #tpu.dot_dimension_numbers<[1], [0], [0], [1], [0, 0, 1, 1], [], []>} : vector<8x512xbf16>, vector<512x128xbf16>, vector<8x128xf32> -> vector<8x128xf32>
    %c0_72 = arith.constant 0 : index
    %c0_73 = arith.constant 0 : index
    %c0_74 = arith.constant 0 : index
    %114 = vector.load %arg19[%c0_72, %c0_73, %c0_74] : memref<1x1x128xf32, #tpu.memory_space<vmem>>, vector<1x1x128xf32>
    %115 = vector.shape_cast %114 : vector<1x1x128xf32> to vector<1x128xf32>
    %116 = vector.broadcast %115 : vector<1x128xf32> to vector<8x128xf32>
    %117 = arith.addf %113, %116 : vector<8x128xf32>
    %118 = arith.addf %88, %117 : vector<8x128xf32>
    %c0_75 = arith.constant 0 : index
    %c0_76 = arith.constant 0 : index
    %c0_77 = arith.constant 0 : index
    %119 = vector.load %arg20[%c0_75, %c0_76, %c0_77] : memref<1x1x128xf32, #tpu.memory_space<vmem>>, vector<1x1x128xf32>
    %120 = vector.shape_cast %119 : vector<1x1x128xf32> to vector<1x128xf32>
    %c0_78 = arith.constant 0 : index
    %c0_79 = arith.constant 0 : index
    %c0_80 = arith.constant 0 : index
    %121 = vector.load %arg21[%c0_78, %c0_79, %c0_80] : memref<1x1x128xf32, #tpu.memory_space<vmem>>, vector<1x1x128xf32>
    %122 = vector.shape_cast %121 : vector<1x1x128xf32> to vector<1x128xf32>
    %cst_81 = arith.constant dense<0.000000e+00> : vector<8xf32>
    %123 = vector.multi_reduction <add>, %118, %cst_81 [1] : vector<8x128xf32> to vector<8xf32>
    %124 = vector.shape_cast %123 : vector<8xf32> to vector<8x1xf32>
    %cst_82 = arith.constant 1.280000e+02 : f32
    %125 = vector.broadcast %cst_82 : f32 to vector<8x1xf32>
    %126 = arith.divf %124, %125 : vector<8x1xf32>
    %127 = vector.broadcast %126 : vector<8x1xf32> to vector<8x128xf32>
    %128 = arith.subf %118, %127 : vector<8x128xf32>
    %129 = arith.mulf %128, %128 : vector<8x128xf32>
    %cst_83 = arith.constant dense<0.000000e+00> : vector<8xf32>
    %130 = vector.multi_reduction <add>, %129, %cst_83 [1] : vector<8x128xf32> to vector<8xf32>
    %131 = vector.shape_cast %130 : vector<8xf32> to vector<8x1xf32>
    %cst_84 = arith.constant 1.280000e+02 : f32
    %132 = vector.broadcast %cst_84 : f32 to vector<8x1xf32>
    %133 = arith.divf %131, %132 : vector<8x1xf32>
    %134 = vector.broadcast %126 : vector<8x1xf32> to vector<8x128xf32>
    %135 = arith.subf %118, %134 : vector<8x128xf32>
    %cst_85 = arith.constant 9.99999996E-13 : f32
    %136 = vector.broadcast %cst_85 : f32 to vector<8x1xf32>
    %137 = arith.addf %133, %136 : vector<8x1xf32>
    %138 = math.rsqrt %137 : vector<8x1xf32>
    %139 = vector.broadcast %138 : vector<8x1xf32> to vector<8x128xf32>
    %140 = arith.mulf %135, %139 : vector<8x128xf32>
    %141 = vector.broadcast %120 : vector<1x128xf32> to vector<8x128xf32>
    %142 = arith.mulf %140, %141 : vector<8x128xf32>
    %143 = vector.broadcast %122 : vector<1x128xf32> to vector<8x128xf32>
    %144 = arith.addf %142, %143 : vector<8x128xf32>
    %c0_86 = arith.constant 0 : index
    %c0_87 = arith.constant 0 : index
    %c0_88 = arith.constant 0 : index
    %145 = vector.load %arg22[%c0_86, %c0_87, %c0_88] : memref<1x8x128xf32, #tpu.memory_space<vmem>>, vector<1x8x128xf32>
    %146 = vector.shape_cast %145 : vector<1x8x128xf32> to vector<8x128xf32>
    %147 = vector.shape_cast %144 : vector<8x128xf32> to vector<1x8x128xf32>
    tpu.vector_store %arg22[%c0_86, %c0_87, %c0_88], %147 {strides = array<i32>} : memref<1x8x128xf32, #tpu.memory_space<vmem>>, vector<1x8x128xf32>,
    return
  }
  func.func @transform_0(%arg0: i32, %arg1: i32) -> (i32, i32, i32) {
    %c0_i32 = arith.constant 0 : i32
    %c0_i32_0 = arith.constant 0 : i32
    %c0_i32_1 = arith.constant 0 : i32
    return %arg0, %c0_i32, %c0_i32_0 : i32, i32, i32
  }
  func.func @transform_1(%arg0: i32, %arg1: i32) -> (i32, i32, i32) {
    %c0_i32 = arith.constant 0 : i32
    %c0_i32_0 = arith.constant 0 : i32
    %c0_i32_1 = arith.constant 0 : i32
    return %arg0, %c0_i32, %c0_i32_0 : i32, i32, i32
  }
  func.func @transform_2(%arg0: i32, %arg1: i32) -> (i32, i32) {
    %c0_i32 = arith.constant 0 : i32
    %c0_i32_0 = arith.constant 0 : i32
    %c0_i32_1 = arith.constant 0 : i32
    return %c0_i32, %c0_i32_0 : i32, i32
  }
  func.func @transform_3(%arg0: i32, %arg1: i32) -> (i32, i32) {
    %c0_i32 = arith.constant 0 : i32
    %c0_i32_0 = arith.constant 0 : i32
    %c0_i32_1 = arith.constant 0 : i32
    return %c0_i32, %c0_i32_0 : i32, i32
  }
  func.func @transform_4(%arg0: i32, %arg1: i32) -> (i32, i32, i32, i32) {
    %c0_i32 = arith.constant 0 : i32
    %c0_i32_0 = arith.constant 0 : i32
    %c0_i32_1 = arith.constant 0 : i32
    %c0_i32_2 = arith.constant 0 : i32
    return %arg1, %c0_i32, %c0_i32_0, %c0_i32_1 : i32, i32, i32, i32
  }
  func.func @transform_5(%arg0: i32, %arg1: i32) -> (i32, i32, i32, i32) {
    %c0_i32 = arith.constant 0 : i32
    %c0_i32_0 = arith.constant 0 : i32
    %c0_i32_1 = arith.constant 0 : i32
    %c0_i32_2 = arith.constant 0 : i32
    return %arg1, %c0_i32, %c0_i32_0, %c0_i32_1 : i32, i32, i32, i32
  }
  func.func @transform_6(%arg0: i32, %arg1: i32) -> (i32, i32, i32, i32) {
    %c0_i32 = arith.constant 0 : i32
    %c0_i32_0 = arith.constant 0 : i32
    %c0_i32_1 = arith.constant 0 : i32
    %c0_i32_2 = arith.constant 0 : i32
    return %arg1, %c0_i32, %c0_i32_0, %c0_i32_1 : i32, i32, i32, i32
  }
  func.func @transform_7(%arg0: i32, %arg1: i32) -> (i32, i32, i32, i32) {
    %c0_i32 = arith.constant 0 : i32
    %c0_i32_0 = arith.constant 0 : i32
    %c0_i32_1 = arith.constant 0 : i32
    %c0_i32_2 = arith.constant 0 : i32
    return %arg1, %c0_i32, %c0_i32_0, %c0_i32_1 : i32, i32, i32, i32
  }
  func.func @transform_8(%arg0: i32, %arg1: i32) -> (i32, i32, i32, i32) {
    %c0_i32 = arith.constant 0 : i32
    %c0_i32_0 = arith.constant 0 : i32
    %c0_i32_1 = arith.constant 0 : i32
    %c0_i32_2 = arith.constant 0 : i32
    return %arg1, %c0_i32, %c0_i32_0, %c0_i32_1 : i32, i32, i32, i32
  }
  func.func @transform_9(%arg0: i32, %arg1: i32) -> (i32, i32, i32, i32) {
    %c0_i32 = arith.constant 0 : i32
    %c0_i32_0 = arith.constant 0 : i32
    %c0_i32_1 = arith.constant 0 : i32
    %c0_i32_2 = arith.constant 0 : i32
    return %arg1, %c0_i32, %c0_i32_0, %c0_i32_1 : i32, i32, i32, i32
  }
  func.func @transform_10(%arg0: i32, %arg1: i32) -> (i32, i32, i32, i32) {
    %c0_i32 = arith.constant 0 : i32
    %c0_i32_0 = arith.constant 0 : i32
    %c0_i32_1 = arith.constant 0 : i32
    %c0_i32_2 = arith.constant 0 : i32
    return %arg1, %c0_i32, %c0_i32_0, %c0_i32_1 : i32, i32, i32, i32
  }
  func.func @transform_11(%arg0: i32, %arg1: i32) -> (i32, i32, i32) {
    %c0_i32 = arith.constant 0 : i32
    %c0_i32_0 = arith.constant 0 : i32
    %c0_i32_1 = arith.constant 0 : i32
    return %arg1, %c0_i32, %c0_i32_0 : i32, i32, i32
  }
  func.func @transform_12(%arg0: i32, %arg1: i32) -> (i32, i32, i32) {
    %c0_i32 = arith.constant 0 : i32
    %c0_i32_0 = arith.constant 0 : i32
    %c0_i32_1 = arith.constant 0 : i32
    return %arg1, %c0_i32, %c0_i32_0 : i32, i32, i32
  }
  func.func @transform_13(%arg0: i32, %arg1: i32) -> (i32, i32, i32) {
    %c0_i32 = arith.constant 0 : i32
    %c0_i32_0 = arith.constant 0 : i32
    %c0_i32_1 = arith.constant 0 : i32
    return %arg1, %c0_i32, %c0_i32_0 : i32, i32, i32
  }
  func.func @transform_14(%arg0: i32, %arg1: i32) -> (i32, i32, i32) {
    %c0_i32 = arith.constant 0 : i32
    %c0_i32_0 = arith.constant 0 : i32
    %c0_i32_1 = arith.constant 0 : i32
    return %arg1, %c0_i32, %c0_i32_0 : i32, i32, i32
  }
  func.func @transform_15(%arg0: i32, %arg1: i32) -> (i32, i32, i32) {
    %c0_i32 = arith.constant 0 : i32
    %c0_i32_0 = arith.constant 0 : i32
    %c0_i32_1 = arith.constant 0 : i32
    return %arg1, %c0_i32, %c0_i32_0 : i32, i32, i32
  }
  func.func @transform_16(%arg0: i32, %arg1: i32) -> (i32, i32, i32) {
    %c0_i32 = arith.constant 0 : i32
    %c0_i32_0 = arith.constant 0 : i32
    %c0_i32_1 = arith.constant 0 : i32
    return %arg1, %c0_i32, %c0_i32_0 : i32, i32, i32
  }
  func.func @transform_17(%arg0: i32, %arg1: i32) -> (i32, i32, i32) {
    %c0_i32 = arith.constant 0 : i32
    %c0_i32_0 = arith.constant 0 : i32
    %c0_i32_1 = arith.constant 0 : i32
    return %arg1, %c0_i32, %c0_i32_0 : i32, i32, i32
  }
  func.func @transform_18(%arg0: i32, %arg1: i32) -> (i32, i32, i32) {
    %c0_i32 = arith.constant 0 : i32
    %c0_i32_0 = arith.constant 0 : i32
    %c0_i32_1 = arith.constant 0 : i32
    return %arg1, %c0_i32, %c0_i32_0 : i32, i32, i32
  }
  func.func @transform_19(%arg0: i32, %arg1: i32) -> (i32, i32, i32) {
    %c0_i32 = arith.constant 0 : i32
    %c0_i32_0 = arith.constant 0 : i32
    %c0_i32_1 = arith.constant 0 : i32
    return %arg1, %c0_i32, %c0_i32_0 : i32, i32, i32
  }
  func.func @transform_20(%arg0: i32, %arg1: i32) -> (i32, i32, i32) {
    %c0_i32 = arith.constant 0 : i32
    %c0_i32_0 = arith.constant 0 : i32
    %c0_i32_1 = arith.constant 0 : i32
    return %arg0, %c0_i32, %c0_i32_0 : i32, i32, i32
  }
}

</mosaic_0001>

<llo_original>
// kernel: tpu_custom_call.1
$region0: #{tpu_custom_call.1}
  #allocation0 [shape = 'u32[]', space=smem, size = 0x4, offset = 0x4, fixed_abs, tag = 'smem constant byte address 0x4 - core index']
  #allocation1 [shape = 'u32[72,128]{1,0:T(1,128)}', space=vmem, size = 0x9000, scoped, tag = 'internal scratch']
  %s0 = inlined_call_operand.vmem [shape: f32[2,8,128], index: 0, kind: input, shape index: {}]
  %s1 = inlined_call_operand.vmem [shape: f32[2,1,8], index: 1, kind: input, shape index: {}]
  %s2 = inlined_call_operand.vmem [shape: f32[1,128], index: 2, kind: input, shape index: {}]
  %s3 = inlined_call_operand.vmem [shape: f32[1,128], index: 3, kind: input, shape index: {}]
  %s4 = inlined_call_operand.vmem [shape: bf16[2,4,128,32], index: 4, kind: input, shape index: {}]
  %s5 = inlined_call_operand.vmem [shape: f32[2,4,1,32], index: 5, kind: input, shape index: {}]
  %s6 = inlined_call_operand.vmem [shape: bf16[2,4,128,32], index: 6, kind: input, shape index: {}]
  %s7 = inlined_call_operand.vmem [shape: f32[2,4,1,32], index: 7, kind: input, shape index: {}]
  %s8 = inlined_call_operand.vmem [shape: bf16[2,4,128,32], index: 8, kind: input, shape index: {}]
  %s9 = inlined_call_operand.vmem [shape: f32[2,4,1,32], index: 9, kind: input, shape index: {}]
  %s10 = inlined_call_operand.vmem [shape: bf16[2,4,32,128], index: 10, kind: input, shape index: {}]
  %s11 = inlined_call_operand.vmem [shape: f32[2,1,128], index: 11, kind: input, shape index: {}]
  %s12 = inlined_call_operand.vmem [shape: f32[2,1,128], index: 12, kind: input, shape index: {}]
  %s13 = inlined_call_operand.vmem [shape: f32[2,1,128], index: 13, kind: input, shape index: {}]
  %s14 = inlined_call_operand.vmem [shape: bf16[2,128,512], index: 14, kind: input, shape index: {}]
  %s15 = inlined_call_operand.vmem [shape: f32[2,1,512], index: 15, kind: input, shape index: {}]
  %s16 = inlined_call_operand.vmem [shape: bf16[2,512,128], index: 16, kind: input, shape index: {}]
  %s17 = inlined_call_operand.vmem [shape: f32[2,1,128], index: 17, kind: input, shape index: {}]
  %s18 = inlined_call_operand.vmem [shape: f32[2,1,128], index: 18, kind: input, shape index: {}]
  %s19 = inlined_call_operand.vmem [shape: f32[2,1,128], index: 19, kind: input, shape index: {}]
  %s20 = inlined_call_operand.hbm [shape: f32[2,8,128], index: 20, kind: output, shape index: {}]
  %s21 = sld [smem:[#allocation0]]
  $region117: #{tpu_custom_call.1} parent=0
    _
  %s23 = ssub.s32 1, %s21
  %s24 = scalar_select 0, %s23, %s21
  $region1: #{tpu_custom_call.1} parent=0
    #allocation2 [shape = 'u8[8192]{0}', space=vmem, size = 0x2000, scoped, tag = 'output window, operand 0']
    #allocation3 [shape = 's32[2]{0}', space=sflag, size = 0x8, scoped, tag = 'scoped memory for tpu_custom_call.1']
    %25 = vsyncpa [#allocation3], 0
    %s26 = scalar_lea.sflag [#allocation3], 1
    %27 = vsyncpa %s26, 0
    loop: start=0, step=1, limit=6
    $region2: #{tpu_custom_call.1} parent=1 // loop_pre_header
      _
    $region3: #{tpu_custom_call.1} parent=1 // loop_header
      %s29 = sphi 0, %s33
      %p30 = scmp.ge.s32.totalorder %s29, 6
      %s36 = sphi 0, %s48
      %s37 = sphi 0, %s44
      %s38 = sphi 0, %s36
      %s39 = sphi 0, %s37
      %s40 = sphi 0, %s38
      %s41 = sphi 0, %s39
      %s51 = sphi 0, %s53
      %s54 = sphi 0, %s51
      %s55 = sphi 0, %s54
      %s71 = sphi 0, %s55
      %s77 = sphi 0, %s79
      %s80 = sphi 0, %s77
      %s81 = sphi 0, %s80
      %s97 = sphi 0, %s81
      %s101 = sphi 0, %s101
      %s103 = sphi 0, %s101
      %s104 = sphi 0, %s103
      %s118 = sphi 0, %s104
      %s122 = sphi 0, %s122
      %s124 = sphi 0, %s122
      %s125 = sphi 0, %s124
      %s139 = sphi 0, %s125
      %s145 = sphi 0, %s147
      %s148 = sphi 0, %s145
      %s149 = sphi 0, %s148
      %s165 = sphi 0, %s149
      %s171 = sphi 0, %s173
      %s174 = sphi 0, %s171
      %s175 = sphi 0, %s174
      %s191 = sphi 0, %s175
      %s197 = sphi 0, %s199
      %s200 = sphi 0, %s197
      %s201 = sphi 0, %s200
      %s217 = sphi 0, %s201
      %s223 = sphi 0, %s225
      %s226 = sphi 0, %s223
      %s227 = sphi 0, %s226
      %s243 = sphi 0, %s227
      %s249 = sphi 0, %s251
      %s252 = sphi 0, %s249
      %s253 = sphi 0, %s252
      %s269 = sphi 0, %s253
      %s275 = sphi 0, %s277
      %s278 = sphi 0, %s275
      %s279 = sphi 0, %s278
      %s295 = sphi 0, %s279
      %s301 = sphi 0, %s303
      %s304 = sphi 0, %s301
      %s305 = sphi 0, %s304
      %s321 = sphi 0, %s305
      %s327 = sphi 0, %s329
      %s330 = sphi 0, %s327
      %s331 = sphi 0, %s330
      %s347 = sphi 0, %s331
      %s353 = sphi 0, %s355
      %s356 = sphi 0, %s353
      %s357 = sphi 0, %s356
      %s373 = sphi 0, %s357
      %s379 = sphi 0, %s381
      %s382 = sphi 0, %s379
      %s383 = sphi 0, %s382
      %s399 = sphi 0, %s383
      %s405 = sphi 0, %s407
      %s408 = sphi 0, %s405
      %s409 = sphi 0, %s408
      %s425 = sphi 0, %s409
      %s431 = sphi 0, %s433
      %s434 = sphi 0, %s431
      %s435 = sphi 0, %s434
      %s451 = sphi 0, %s435
      %s457 = sphi 0, %s459
      %s460 = sphi 0, %s457
      %s461 = sphi 0, %s460
      %s477 = sphi 0, %s461
      %s483 = sphi 0, %s485
      %s486 = sphi 0, %s483
      %s487 = sphi 0, %s486
      %s503 = sphi 0, %s487
      %s509 = sphi 0, %s511
      %s512 = sphi 0, %s509
      %s513 = sphi 0, %s512
      %s529 = sphi 0, %s513
      %s535 = sphi 0, %s537
      %s538 = sphi 0, %s535
      %s539 = sphi 0, %s538
      %s555 = sphi 0, %s539
      %s561 = sphi 0, %s563
      %s564 = sphi 0, %s561
      %s565 = sphi 0, %s564
      %s581 = sphi 0, %s565
    $region4: #{tpu_custom_call.1} parent=1 // loop_header_branch
      %32 = sbr.rel (%p30) target = $region8
    $region5: #{tpu_custom_call.1} parent=1 // loop_body
      %s34 = ssub.s32 %s29, 1
      %s35 = ssub.s32 %s29, 2
      %s42 = sadd.s32 1, %s37
      %p43 = scmp.ge.s32.totalorder %s42, 2
      %s44 = scalar_select %p43, 0, %s42
      %s45 = sadd.s32 1, %s36
      %s46 = scalar_select %p43, %s45, %s36
      %p47 = scmp.ge.s32.totalorder %s46, 2
      %s48 = scalar_select %p47, 0, %s46
      %s49 = ssub.s32 %s36, %s48
      %p50 = scmp.eq.s32.totalorder %s49, 0
      %s52 = sadd.s32 %s51, 1
      %s53 = scalar_select %p50, %s51, %s52
      %p56 = pneg %p50
      %p57 = scmp.eq.s32.totalorder %s29, 3
      %p58 = por %p56, %p57
      %p59 = scmp.ne.s32.totalorder %s51, %s54
      %p60 = scmp.eq.s32.totalorder %s29, 0
      %p61 = por %p59, %p60
      %p62 = scmp.ne.s32.totalorder %s51, %s54
      %p63 = scmp.eq.s32.totalorder %s34, 3
      %p64 = por %p62, %p63
      %p65 = scmp.ne.s32.totalorder %s54, %s55
      %p66 = scmp.eq.s32.totalorder %s34, 0
      %p67 = por %p65, %p66
      %p68 = scmp.ne.s32.totalorder %s54, %s55
      %p69 = scmp.eq.s32.totalorder %s35, 3
      %p70 = por %p68, %p69
      %p72 = scmp.ne.s32.totalorder %s55, %s71
      %p73 = scmp.eq.s32.totalorder %s35, 0
      %p74 = por %p72, %p73
      %s75 = ssub.s32 %s36, %s48
      %p76 = scmp.eq.s32.totalorder %s75, 0
      %s78 = sadd.s32 %s77, 1
      %s79 = scalar_select %p76, %s77, %s78
      %p82 = pneg %p76
      %p83 = scmp.eq.s32.totalorder %s29, 3
      %p84 = por %p82, %p83
      %p85 = scmp.ne.s32.totalorder %s77, %s80
      %p86 = scmp.eq.s32.totalorder %s29, 0
      %p87 = por %p85, %p86
      %p88 = scmp.ne.s32.totalorder %s77, %s80
      %p89 = scmp.eq.s32.totalorder %s34, 3
      %p90 = por %p88, %p89
      %p91 = scmp.ne.s32.totalorder %s80, %s81
      %p92 = scmp.eq.s32.totalorder %s34, 0
      %p93 = por %p91, %p92
      %p94 = scmp.ne.s32.totalorder %s80, %s81
      %p95 = scmp.eq.s32.totalorder %s35, 3
      %p96 = por %p94, %p95
      %p98 = scmp.ne.s32.totalorder %s81, %s97
      %p99 = scmp.eq.s32.totalorder %s35, 0
      %p100 = por %p98, %p99
      %s102 = sadd.s32 %s101, 1
      %p105 = scmp.eq.s32.totalorder %s29, 3
      %p106 = scmp.ne.s32.totalorder %s101, %s103
      %p107 = scmp.eq.s32.totalorder %s29, 0
      %p108 = por %p106, %p107
      %p109 = scmp.ne.s32.totalorder %s101, %s103
      %p110 = scmp.eq.s32.totalorder %s34, 3
      %p111 = por %p109, %p110
      %p112 = scmp.ne.s32.totalorder %s103, %s104
      %p113 = scmp.eq.s32.totalorder %s34, 0
      %p114 = por %p112, %p113
      %p115 = scmp.ne.s32.totalorder %s103, %s104
      %p116 = scmp.eq.s32.totalorder %s35, 3
      %p117 = por %p115, %p116
      %p119 = scmp.ne.s32.totalorder %s104, %s118
      %p120 = scmp.eq.s32.totalorder %s35, 0
      %p121 = por %p119, %p120
      %s123 = sadd.s32 %s122, 1
      %p126 = scmp.eq.s32.totalorder %s29, 3
      %p127 = scmp.ne.s32.totalorder %s122, %s124
      %p128 = scmp.eq.s32.totalorder %s29, 0
      %p129 = por %p127, %p128
      %p130 = scmp.ne.s32.totalorder %s122, %s124
      %p131 = scmp.eq.s32.totalorder %s34, 3
      %p132 = por %p130, %p131
      %p133 = scmp.ne.s32.totalorder %s124, %s125
      %p134 = scmp.eq.s32.totalorder %s34, 0
      %p135 = por %p133, %p134
      %p136 = scmp.ne.s32.totalorder %s124, %s125
      %p137 = scmp.eq.s32.totalorder %s35, 3
      %p138 = por %p136, %p137
      %p140 = scmp.ne.s32.totalorder %s125, %s139
      %p141 = scmp.eq.s32.totalorder %s35, 0
      %p142 = por %p140, %p141
      %s143 = ssub.s32 %s37, %s44
      %p144 = scmp.eq.s32.totalorder %s143, 0
      %s146 = sadd.s32 %s145, 1
      %s147 = scalar_select %p144, %s145, %s146
      %p150 = pneg %p144
      %p151 = scmp.eq.s32.totalorder %s29, 3
      %p152 = por %p150, %p151
      %p153 = scmp.ne.s32.totalorder %s145, %s148
      %p154 = scmp.eq.s32.totalorder %s29, 0
      %p155 = por %p153, %p154
      %p156 = scmp.ne.s32.totalorder %s145, %s148
      %p157 = scmp.eq.s32.totalorder %s34, 3
      %p158 = por %p156, %p157
      %p159 = scmp.ne.s32.totalorder %s148, %s149
      %p160 = scmp.eq.s32.totalorder %s34, 0
      %p161 = por %p159, %p160
      %p162 = scmp.ne.s32.totalorder %s148, %s149
      %p163 = scmp.eq.s32.totalorder %s35, 3
      %p164 = por %p162, %p163
      %p166 = scmp.ne.s32.totalorder %s149, %s165
      %p167 = scmp.eq.s32.totalorder %s35, 0
      %p168 = por %p166, %p167
      %s169 = ssub.s32 %s37, %s44
      %p170 = scmp.eq.s32.totalorder %s169, 0
      %s172 = sadd.s32 %s171, 1
      %s173 = scalar_select %p170, %s171, %s172
      %p176 = pneg %p170
      %p177 = scmp.eq.s32.totalorder %s29, 3
      %p178 = por %p176, %p177
      %p179 = scmp.ne.s32.totalorder %s171, %s174
      %p180 = scmp.eq.s32.totalorder %s29, 0
      %p181 = por %p179, %p180
      %p182 = scmp.ne.s32.totalorder %s171, %s174
      %p183 = scmp.eq.s32.totalorder %s34, 3
      %p184 = por %p182, %p183
      %p185 = scmp.ne.s32.totalorder %s174, %s175
      %p186 = scmp.eq.s32.totalorder %s34, 0
      %p187 = por %p185, %p186
      %p188 = scmp.ne.s32.totalorder %s174, %s175
      %p189 = scmp.eq.s32.totalorder %s35, 3
      %p190 = por %p188, %p189
      %p192 = scmp.ne.s32.totalorder %s175, %s191
      %p193 = scmp.eq.s32.totalorder %s35, 0
      %p194 = por %p192, %p193
      %s195 = ssub.s32 %s37, %s44
      %p196 = scmp.eq.s32.totalorder %s195, 0
      %s198 = sadd.s32 %s197, 1
      %s199 = scalar_select %p196, %s197, %s198
      %p202 = pneg %p196
      %p203 = scmp.eq.s32.totalorder %s29, 3
      %p204 = por %p202, %p203
      %p205 = scmp.ne.s32.totalorder %s197, %s200
      %p206 = scmp.eq.s32.totalorder %s29, 0
      %p207 = por %p205, %p206
      %p208 = scmp.ne.s32.totalorder %s197, %s200
      %p209 = scmp.eq.s32.totalorder %s34, 3
      %p210 = por %p208, %p209
      %p211 = scmp.ne.s32.totalorder %s200, %s201
      %p212 = scmp.eq.s32.totalorder %s34, 0
      %p213 = por %p211, %p212
      %p214 = scmp.ne.s32.totalorder %s200, %s201
      %p215 = scmp.eq.s32.totalorder %s35, 3
      %p216 = por %p214, %p215
      %p218 = scmp.ne.s32.totalorder %s201, %s217
      %p219 = scmp.eq.s32.totalorder %s35, 0
      %p220 = por %p218, %p219
      %s221 = ssub.s32 %s37, %s44
      %p222 = scmp.eq.s32.totalorder %s221, 0
      %s224 = sadd.s32 %s223, 1
      %s225 = scalar_select %p222, %s223, %s224
      %p228 = pneg %p222
      %p229 = scmp.eq.s32.totalorder %s29, 3
      %p230 = por %p228, %p229
      %p231 = scmp.ne.s32.totalorder %s223, %s226
      %p232 = scmp.eq.s32.totalorder %s29, 0
      %p233 = por %p231, %p232
      %p234 = scmp.ne.s32.totalorder %s223, %s226
      %p235 = scmp.eq.s32.totalorder %s34, 3
      %p236 = por %p234, %p235
      %p237 = scmp.ne.s32.totalorder %s226, %s227
      %p238 = scmp.eq.s32.totalorder %s34, 0
      %p239 = por %p237, %p238
      %p240 = scmp.ne.s32.totalorder %s226, %s227
      %p241 = scmp.eq.s32.totalorder %s35, 3
      %p242 = por %p240, %p241
      %p244 = scmp.ne.s32.totalorder %s227, %s243
      %p245 = scmp.eq.s32.totalorder %s35, 0
      %p246 = por %p244, %p245
      %s247 = ssub.s32 %s37, %s44
      %p248 = scmp.eq.s32.totalorder %s247, 0
      %s250 = sadd.s32 %s249, 1
      %s251 = scalar_select %p248, %s249, %s250
      %p254 = pneg %p248
      %p255 = scmp.eq.s32.totalorder %s29, 3
      %p256 = por %p254, %p255
      %p257 = scmp.ne.s32.totalorder %s249, %s252
      %p258 = scmp.eq.s32.totalorder %s29, 0
      %p259 = por %p257, %p258
      %p260 = scmp.ne.s32.totalorder %s249, %s252
      %p261 = scmp.eq.s32.totalorder %s34, 3
      %p262 = por %p260, %p261
      %p263 = scmp.ne.s32.totalorder %s252, %s253
      %p264 = scmp.eq.s32.totalorder %s34, 0
      %p265 = por %p263, %p264
      %p266 = scmp.ne.s32.totalorder %s252, %s253
      %p267 = scmp.eq.s32.totalorder %s35, 3
      %p268 = por %p266, %p267
      %p270 = scmp.ne.s32.totalorder %s253, %s269
      %p271 = scmp.eq.s32.totalorder %s35, 0
      %p272 = por %p270, %p271
      %s273 = ssub.s32 %s37, %s44
      %p274 = scmp.eq.s32.totalorder %s273, 0
      %s276 = sadd.s32 %s275, 1
      %s277 = scalar_select %p274, %s275, %s276
      %p280 = pneg %p274
      %p281 = scmp.eq.s32.totalorder %s29, 3
      %p282 = por %p280, %p281
      %p283 = scmp.ne.s32.totalorder %s275, %s278
      %p284 = scmp.eq.s32.totalorder %s29, 0
      %p285 = por %p283, %p284
      %p286 = scmp.ne.s32.totalorder %s275, %s278
      %p287 = scmp.eq.s32.totalorder %s34, 3
      %p288 = por %p286, %p287
      %p289 = scmp.ne.s32.totalorder %s278, %s279
      %p290 = scmp.eq.s32.totalorder %s34, 0
      %p291 = por %p289, %p290
      %p292 = scmp.ne.s32.totalorder %s278, %s279
      %p293 = scmp.eq.s32.totalorder %s35, 3
      %p294 = por %p292, %p293
      %p296 = scmp.ne.s32.totalorder %s279, %s295
      %p297 = scmp.eq.s32.totalorder %s35, 0
      %p298 = por %p296, %p297
      %s299 = ssub.s32 %s37, %s44
      %p300 = scmp.eq.s32.totalorder %s299, 0
      %s302 = sadd.s32 %s301, 1
      %s303 = scalar_select %p300, %s301, %s302
      %p306 = pneg %p300
      %p307 = scmp.eq.s32.totalorder %s29, 3
      %p308 = por %p306, %p307
      %p309 = scmp.ne.s32.totalorder %s301, %s304
      %p310 = scmp.eq.s32.totalorder %s29, 0
      %p311 = por %p309, %p310
      %p312 = scmp.ne.s32.totalorder %s301, %s304
      %p313 = scmp.eq.s32.totalorder %s34, 3
      %p314 = por %p312, %p313
      %p315 = scmp.ne.s32.totalorder %s304, %s305
      %p316 = scmp.eq.s32.totalorder %s34, 0
      %p317 = por %p315, %p316
      %p318 = scmp.ne.s32.totalorder %s304, %s305
      %p319 = scmp.eq.s32.totalorder %s35, 3
      %p320 = por %p318, %p319
      %p322 = scmp.ne.s32.totalorder %s305, %s321
      %p323 = scmp.eq.s32.totalorder %s35, 0
      %p324 = por %p322, %p323
      %s325 = ssub.s32 %s37, %s44
      %p326 = scmp.eq.s32.totalorder %s325, 0
      %s328 = sadd.s32 %s327, 1
      %s329 = scalar_select %p326, %s327, %s328
      %p332 = pneg %p326
      %p333 = scmp.eq.s32.totalorder %s29, 3
      %p334 = por %p332, %p333
      %p335 = scmp.ne.s32.totalorder %s327, %s330
      %p336 = scmp.eq.s32.totalorder %s29, 0
      %p337 = por %p335, %p336
      %p338 = scmp.ne.s32.totalorder %s327, %s330
      %p339 = scmp.eq.s32.totalorder %s34, 3
      %p340 = por %p338, %p339
      %p341 = scmp.ne.s32.totalorder %s330, %s331
      %p342 = scmp.eq.s32.totalorder %s34, 0
      %p343 = por %p341, %p342
      %p344 = scmp.ne.s32.totalorder %s330, %s331
      %p345 = scmp.eq.s32.totalorder %s35, 3
      %p346 = por %p344, %p345
      %p348 = scmp.ne.s32.totalorder %s331, %s347
      %p349 = scmp.eq.s32.totalorder %s35, 0
      %p350 = por %p348, %p349
      %s351 = ssub.s32 %s37, %s44
      %p352 = scmp.eq.s32.totalorder %s351, 0
      %s354 = sadd.s32 %s353, 1
      %s355 = scalar_select %p352, %s353, %s354
      %p358 = pneg %p352
      %p359 = scmp.eq.s32.totalorder %s29, 3
      %p360 = por %p358, %p359
      %p361 = scmp.ne.s32.totalorder %s353, %s356
      %p362 = scmp.eq.s32.totalorder %s29, 0
      %p363 = por %p361, %p362
      %p364 = scmp.ne.s32.totalorder %s353, %s356
      %p365 = scmp.eq.s32.totalorder %s34, 3
      %p366 = por %p364, %p365
      %p367 = scmp.ne.s32.totalorder %s356, %s357
      %p368 = scmp.eq.s32.totalorder %s34, 0
      %p369 = por %p367, %p368
      %p370 = scmp.ne.s32.totalorder %s356, %s357
      %p371 = scmp.eq.s32.totalorder %s35, 3
      %p372 = por %p370, %p371
      %p374 = scmp.ne.s32.totalorder %s357, %s373
      %p375 = scmp.eq.s32.totalorder %s35, 0
      %p376 = por %p374, %p375
      %s377 = ssub.s32 %s37, %s44
      %p378 = scmp.eq.s32.totalorder %s377, 0
      %s380 = sadd.s32 %s379, 1
      %s381 = scalar_select %p378, %s379, %s380
      %p384 = pneg %p378
      %p385 = scmp.eq.s32.totalorder %s29, 3
      %p386 = por %p384, %p385
      %p387 = scmp.ne.s32.totalorder %s379, %s382
      %p388 = scmp.eq.s32.totalorder %s29, 0
      %p389 = por %p387, %p388
      %p390 = scmp.ne.s32.totalorder %s379, %s382
      %p391 = scmp.eq.s32.totalorder %s34, 3
      %p392 = por %p390, %p391
      %p393 = scmp.ne.s32.totalorder %s382, %s383
      %p394 = scmp.eq.s32.totalorder %s34, 0
      %p395 = por %p393, %p394
      %p396 = scmp.ne.s32.totalorder %s382, %s383
      %p397 = scmp.eq.s32.totalorder %s35, 3
      %p398 = por %p396, %p397
      %p400 = scmp.ne.s32.totalorder %s383, %s399
      %p401 = scmp.eq.s32.totalorder %s35, 0
      %p402 = por %p400, %p401
      %s403 = ssub.s32 %s37, %s44
      %p404 = scmp.eq.s32.totalorder %s403, 0
      %s406 = sadd.s32 %s405, 1
      %s407 = scalar_select %p404, %s405, %s406
      %p410 = pneg %p404
      %p411 = scmp.eq.s32.totalorder %s29, 3
      %p412 = por %p410, %p411
      %p413 = scmp.ne.s32.totalorder %s405, %s408
      %p414 = scmp.eq.s32.totalorder %s29, 0
      %p415 = por %p413, %p414
      %p416 = scmp.ne.s32.totalorder %s405, %s408
      %p417 = scmp.eq.s32.totalorder %s34, 3
      %p418 = por %p416, %p417
      %p419 = scmp.ne.s32.totalorder %s408, %s409
      %p420 = scmp.eq.s32.totalorder %s34, 0
      %p421 = por %p419, %p420
      %p422 = scmp.ne.s32.totalorder %s408, %s409
      %p423 = scmp.eq.s32.totalorder %s35, 3
      %p424 = por %p422, %p423
      %p426 = scmp.ne.s32.totalorder %s409, %s425
      %p427 = scmp.eq.s32.totalorder %s35, 0
      %p428 = por %p426, %p427
      %s429 = ssub.s32 %s37, %s44
      %p430 = scmp.eq.s32.totalorder %s429, 0
      %s432 = sadd.s32 %s431, 1
      %s433 = scalar_select %p430, %s431, %s432
      %p436 = pneg %p430
      %p437 = scmp.eq.s32.totalorder %s29, 3
      %p438 = por %p436, %p437
      %p439 = scmp.ne.s32.totalorder %s431, %s434
      %p440 = scmp.eq.s32.totalorder %s29, 0
      %p441 = por %p439, %p440
      %p442 = scmp.ne.s32.totalorder %s431, %s434
      %p443 = scmp.eq.s32.totalorder %s34, 3
      %p444 = por %p442, %p443
      %p445 = scmp.ne.s32.totalorder %s434, %s435
      %p446 = scmp.eq.s32.totalorder %s34, 0
      %p447 = por %p445, %p446
      %p448 = scmp.ne.s32.totalorder %s434, %s435
      %p449 = scmp.eq.s32.totalorder %s35, 3
      %p450 = por %p448, %p449
      %p452 = scmp.ne.s32.totalorder %s435, %s451
      %p453 = scmp.eq.s32.totalorder %s35, 0
      %p454 = por %p452, %p453
      %s455 = ssub.s32 %s37, %s44
      %p456 = scmp.eq.s32.totalorder %s455, 0
      %s458 = sadd.s32 %s457, 1
      %s459 = scalar_select %p456, %s457, %s458
      %p462 = pneg %p456
      %p463 = scmp.eq.s32.totalorder %s29, 3
      %p464 = por %p462, %p463
      %p465 = scmp.ne.s32.totalorder %s457, %s460
      %p466 = scmp.eq.s32.totalorder %s29, 0
      %p467 = por %p465, %p466
      %p468 = scmp.ne.s32.totalorder %s457, %s460
      %p469 = scmp.eq.s32.totalorder %s34, 3
      %p470 = por %p468, %p469
      %p471 = scmp.ne.s32.totalorder %s460, %s461
      %p472 = scmp.eq.s32.totalorder %s34, 0
      %p473 = por %p471, %p472
      %p474 = scmp.ne.s32.totalorder %s460, %s461
      %p475 = scmp.eq.s32.totalorder %s35, 3
      %p476 = por %p474, %p475
      %p478 = scmp.ne.s32.totalorder %s461, %s477
      %p479 = scmp.eq.s32.totalorder %s35, 0
      %p480 = por %p478, %p479
      %s481 = ssub.s32 %s37, %s44
      %p482 = scmp.eq.s32.totalorder %s481, 0
      %s484 = sadd.s32 %s483, 1
      %s485 = scalar_select %p482, %s483, %s484
      %p488 = pneg %p482
      %p489 = scmp.eq.s32.totalorder %s29, 3
      %p490 = por %p488, %p489
      %p491 = scmp.ne.s32.totalorder %s483, %s486
      %p492 = scmp.eq.s32.totalorder %s29, 0
      %p493 = por %p491, %p492
      %p494 = scmp.ne.s32.totalorder %s483, %s486
      %p495 = scmp.eq.s32.totalorder %s34, 3
      %p496 = por %p494, %p495
      %p497 = scmp.ne.s32.totalorder %s486, %s487
      %p498 = scmp.eq.s32.totalorder %s34, 0
      %p499 = por %p497, %p498
      %p500 = scmp.ne.s32.totalorder %s486, %s487
      %p501 = scmp.eq.s32.totalorder %s35, 3
      %p502 = por %p500, %p501
      %p504 = scmp.ne.s32.totalorder %s487, %s503
      %p505 = scmp.eq.s32.totalorder %s35, 0
      %p506 = por %p504, %p505
      %s507 = ssub.s32 %s37, %s44
      %p508 = scmp.eq.s32.totalorder %s507, 0
      %s510 = sadd.s32 %s509, 1
      %s511 = scalar_select %p508, %s509, %s510
      %p514 = pneg %p508
      %p515 = scmp.eq.s32.totalorder %s29, 3
      %p516 = por %p514, %p515
      %p517 = scmp.ne.s32.totalorder %s509, %s512
      %p518 = scmp.eq.s32.totalorder %s29, 0
      %p519 = por %p517, %p518
      %p520 = scmp.ne.s32.totalorder %s509, %s512
      %p521 = scmp.eq.s32.totalorder %s34, 3
      %p522 = por %p520, %p521
      %p523 = scmp.ne.s32.totalorder %s512, %s513
      %p524 = scmp.eq.s32.totalorder %s34, 0
      %p525 = por %p523, %p524
      %p526 = scmp.ne.s32.totalorder %s512, %s513
      %p527 = scmp.eq.s32.totalorder %s35, 3
      %p528 = por %p526, %p527
      %p530 = scmp.ne.s32.totalorder %s513, %s529
      %p531 = scmp.eq.s32.totalorder %s35, 0
      %p532 = por %p530, %p531
      %s533 = ssub.s32 %s37, %s44
      %p534 = scmp.eq.s32.totalorder %s533, 0
      %s536 = sadd.s32 %s535, 1
      %s537 = scalar_select %p534, %s535, %s536
      %p540 = pneg %p534
      %p541 = scmp.eq.s32.totalorder %s29, 3
      %p542 = por %p540, %p541
      %p543 = scmp.ne.s32.totalorder %s535, %s538
      %p544 = scmp.eq.s32.totalorder %s29, 0
      %p545 = por %p543, %p544
      %p546 = scmp.ne.s32.totalorder %s535, %s538
      %p547 = scmp.eq.s32.totalorder %s34, 3
      %p548 = por %p546, %p547
      %p549 = scmp.ne.s32.totalorder %s538, %s539
      %p550 = scmp.eq.s32.totalorder %s34, 0
      %p551 = por %p549, %p550
      %p552 = scmp.ne.s32.totalorder %s538, %s539
      %p553 = scmp.eq.s32.totalorder %s35, 3
      %p554 = por %p552, %p553
      %p556 = scmp.ne.s32.totalorder %s539, %s555
      %p557 = scmp.eq.s32.totalorder %s35, 0
      %p558 = por %p556, %p557
      %s559 = ssub.s32 %s36, %s48
      %p560 = scmp.eq.s32.totalorder %s559, 0
      %s562 = sadd.s32 %s561, 1
      %s563 = scalar_select %p560, %s561, %s562
      %p566 = pneg %p560
      %p567 = scmp.eq.s32.totalorder %s29, 3
      %p568 = por %p566, %p567
      %p569 = scmp.ne.s32.totalorder %s561, %s564
      %p570 = scmp.eq.s32.totalorder %s29, 0
      %p571 = por %p569, %p570
      %p572 = scmp.ne.s32.totalorder %s561, %s564
      %p573 = scmp.eq.s32.totalorder %s34, 3
      %p574 = por %p572, %p573
      %p575 = scmp.ne.s32.totalorder %s564, %s565
      %p576 = scmp.eq.s32.totalorder %s34, 0
      %p577 = por %p575, %p576
      %p578 = scmp.ne.s32.totalorder %s564, %s565
      %p579 = scmp.eq.s32.totalorder %s35, 3
      %p580 = por %p578, %p579
      %p582 = scmp.ne.s32.totalorder %s565, %s581
      %p583 = scmp.eq.s32.totalorder %s35, 0
      %p584 = por %p582, %p583
      %p585 = scmp.le.s32.totalorder 1, %s29
      %p586 = scmp.lt.s32.totalorder %s29, 5
      %p587 = pnand %p585, %p586
      %p588 = pneg %p587
      // Predicated region
      $region9: #{tpu_custom_call.1} parent=5 // pred_check
        _
      $region10: #{tpu_custom_call.1} parent=5 // pred_check_branch
        %590 = sbr.rel (%p587) target = $region12
      $region11: #{tpu_custom_call.1} parent=5 // pred_region
        %s591 = ssub.s32 %s29, 1
        // Predicated region
        $region13: #{tpu_custom_call.1} parent=11 // pred_check
          %p592 = pneg %p114
        $region14: #{tpu_custom_call.1} parent=11 // pred_check_branch
          %594 = sbr.rel (%p592) target = $region16
        $region15: #{tpu_custom_call.1} parent=11 // pred_region
          _
        $region16: #{tpu_custom_call.1} parent=11 // pred_fallthru
          _
        // Predicated region
        $region17: #{tpu_custom_call.1} parent=11 // pred_check
          %p595 = pneg %p135
        $region18: #{tpu_custom_call.1} parent=11 // pred_check_branch
          %597 = sbr.rel (%p595) target = $region20
        $region19: #{tpu_custom_call.1} parent=11 // pred_region
          _
        $region20: #{tpu_custom_call.1} parent=11 // pred_fallthru
          _
      $region12: #{tpu_custom_call.1} parent=5 // pred_fallthru
        _
      %p598 = scmp.lt.s32.totalorder %s29, 4
      // Predicated region
      $region21: #{tpu_custom_call.1} parent=5 // pred_check
        %p599 = pneg %p598
      $region22: #{tpu_custom_call.1} parent=5 // pred_check_branch
        %601 = sbr.rel (%p599) target = $region24
      $region23: #{tpu_custom_call.1} parent=5 // pred_region
        // Predicated region
        $region25: #{tpu_custom_call.1} parent=23 // pred_check
          %p602 = pneg %p61
        $region26: #{tpu_custom_call.1} parent=23 // pred_check_branch
          %604 = sbr.rel (%p602) target = $region28
        $region27: #{tpu_custom_call.1} parent=23 // pred_region
          %p605 = scmp.lt.s32.totalorder %s36, 1
          %s606 = scalar_select %p605, %s36, 1
          %s607 = smul.addr %s606, 8
          %s608 = scalar_lea.vmem %s0, %s607
        $region28: #{tpu_custom_call.1} parent=23 // pred_fallthru
          _
        // Predicated region
        $region29: #{tpu_custom_call.1} parent=23 // pred_check
          %p609 = pneg %p87
        $region30: #{tpu_custom_call.1} parent=23 // pred_check_branch
          %611 = sbr.rel (%p609) target = $region32
        $region31: #{tpu_custom_call.1} parent=23 // pred_region
          %p612 = scmp.lt.s32.totalorder %s36, 1
          %s613 = scalar_select %p612, %s36, 1
          %s614 = scalar_lea.vmem %s1, %s613
        $region32: #{tpu_custom_call.1} parent=23 // pred_fallthru
          _
        // Predicated region
        $region33: #{tpu_custom_call.1} parent=23 // pred_check
          %p615 = pneg %p155
        $region34: #{tpu_custom_call.1} parent=23 // pred_check_branch
          %617 = sbr.rel (%p615) target = $region36
        $region35: #{tpu_custom_call.1} parent=23 // pred_region
          %p618 = scmp.lt.s32.totalorder %s37, 1
          %s619 = scalar_select %p618, %s37, 1
          %s620 = smul.addr %s619, 64
          %s621 = smul.addr %s620, 4
          %s622 = scalar_lea.vmem %s4, %s621
        $region36: #{tpu_custom_call.1} parent=23 // pred_fallthru
          _
        // Predicated region
        $region37: #{tpu_custom_call.1} parent=23 // pred_check
          %p623 = pneg %p181
        $region38: #{tpu_custom_call.1} parent=23 // pred_check_branch
          %625 = sbr.rel (%p623) target = $region40
        $region39: #{tpu_custom_call.1} parent=23 // pred_region
          %p626 = scmp.lt.s32.totalorder %s37, 1
          %s627 = scalar_select %p626, %s37, 1
          %s628 = smul.addr %s627, 4
          %s629 = scalar_lea.vmem %s5, %s628
        $region40: #{tpu_custom_call.1} parent=23 // pred_fallthru
          _
        // Predicated region
        $region41: #{tpu_custom_call.1} parent=23 // pred_check
          %p630 = pneg %p207
        $region42: #{tpu_custom_call.1} parent=23 // pred_check_branch
          %632 = sbr.rel (%p630) target = $region44
        $region43: #{tpu_custom_call.1} parent=23 // pred_region
          %p633 = scmp.lt.s32.totalorder %s37, 1
          %s634 = scalar_select %p633, %s37, 1
          %s635 = smul.addr %s634, 64
          %s636 = smul.addr %s635, 4
          %s637 = scalar_lea.vmem %s6, %s636
        $region44: #{tpu_custom_call.1} parent=23 // pred_fallthru
          _
        // Predicated region
        $region45: #{tpu_custom_call.1} parent=23 // pred_check
          %p638 = pneg %p233
        $region46: #{tpu_custom_call.1} parent=23 // pred_check_branch
          %640 = sbr.rel (%p638) target = $region48
        $region47: #{tpu_custom_call.1} parent=23 // pred_region
          %p641 = scmp.lt.s32.totalorder %s37, 1
          %s642 = scalar_select %p641, %s37, 1
          %s643 = smul.addr %s642, 4
          %s644 = scalar_lea.vmem %s7, %s643
        $region48: #{tpu_custom_call.1} parent=23 // pred_fallthru
          _
        // Predicated region
        $region49: #{tpu_custom_call.1} parent=23 // pred_check
          %p645 = pneg %p259
        $region50: #{tpu_custom_call.1} parent=23 // pred_check_branch
          %647 = sbr.rel (%p645) target = $region52
        $region51: #{tpu_custom_call.1} parent=23 // pred_region
          %p648 = scmp.lt.s32.totalorder %s37, 1
          %s649 = scalar_select %p648, %s37, 1
          %s650 = smul.addr %s649, 64
          %s651 = smul.addr %s650, 4
          %s652 = scalar_lea.vmem %s8, %s651
        $region52: #{tpu_custom_call.1} parent=23 // pred_fallthru
          _
        // Predicated region
        $region53: #{tpu_custom_call.1} parent=23 // pred_check
          %p653 = pneg %p285
        $region54: #{tpu_custom_call.1} parent=23 // pred_check_branch
          %655 = sbr.rel (%p653) target = $region56
        $region55: #{tpu_custom_call.1} parent=23 // pred_region
          %p656 = scmp.lt.s32.totalorder %s37, 1
          %s657 = scalar_select %p656, %s37, 1
          %s658 = smul.addr %s657, 4
          %s659 = scalar_lea.vmem %s9, %s658
        $region56: #{tpu_custom_call.1} parent=23 // pred_fallthru
          _
        // Predicated region
        $region57: #{tpu_custom_call.1} parent=23 // pred_check
          %p660 = pneg %p311
        $region58: #{tpu_custom_call.1} parent=23 // pred_check_branch
          %662 = sbr.rel (%p660) target = $region60
        $region59: #{tpu_custom_call.1} parent=23 // pred_region
          %p663 = scmp.lt.s32.totalorder %s37, 1
          %s664 = scalar_select %p663, %s37, 1
          %s665 = smul.addr %s664, 16
          %s666 = smul.addr %s665, 4
          %s667 = scalar_lea.vmem %s10, %s666
        $region60: #{tpu_custom_call.1} parent=23 // pred_fallthru
          _
        // Predicated region
        $region61: #{tpu_custom_call.1} parent=23 // pred_check
          %p668 = pneg %p337
        $region62: #{tpu_custom_call.1} parent=23 // pred_check_branch
          %670 = sbr.rel (%p668) target = $region64
        $region63: #{tpu_custom_call.1} parent=23 // pred_region
          %p671 = scmp.lt.s32.totalorder %s37, 1
          %s672 = scalar_select %p671, %s37, 1
          %s673 = scalar_lea.vmem %s11, %s672
        $region64: #{tpu_custom_call.1} parent=23 // pred_fallthru
          _
        // Predicated region
        $region65: #{tpu_custom_call.1} parent=23 // pred_check
          %p674 = pneg %p363
        $region66: #{tpu_custom_call.1} parent=23 // pred_check_branch
          %676 = sbr.rel (%p674) target = $region68
        $region67: #{tpu_custom_call.1} parent=23 // pred_region
          %p677 = scmp.lt.s32.totalorder %s37, 1
          %s678 = scalar_select %p677, %s37, 1
          %s679 = scalar_lea.vmem %s12, %s678
        $region68: #{tpu_custom_call.1} parent=23 // pred_fallthru
          _
        // Predicated region
        $region69: #{tpu_custom_call.1} parent=23 // pred_check
          %p680 = pneg %p389
        $region70: #{tpu_custom_call.1} parent=23 // pred_check_branch
          %682 = sbr.rel (%p680) target = $region72
        $region71: #{tpu_custom_call.1} parent=23 // pred_region
          %p683 = scmp.lt.s32.totalorder %s37, 1
          %s684 = scalar_select %p683, %s37, 1
          %s685 = scalar_lea.vmem %s13, %s684
        $region72: #{tpu_custom_call.1} parent=23 // pred_fallthru
          _
        // Predicated region
        $region73: #{tpu_custom_call.1} parent=23 // pred_check
          %p686 = pneg %p415
        $region74: #{tpu_custom_call.1} parent=23 // pred_check_branch
          %688 = sbr.rel (%p686) target = $region76
        $region75: #{tpu_custom_call.1} parent=23 // pred_region
          %p689 = scmp.lt.s32.totalorder %s37, 1
          %s690 = scalar_select %p689, %s37, 1
          %s691 = smul.addr %s690, 64
          %s692 = smul.addr %s691, 4
          %s693 = scalar_lea.vmem %s14, %s692
        $region76: #{tpu_custom_call.1} parent=23 // pred_fallthru
          _
        // Predicated region
        $region77: #{tpu_custom_call.1} parent=23 // pred_check
          %p694 = pneg %p441
        $region78: #{tpu_custom_call.1} parent=23 // pred_check_branch
          %696 = sbr.rel (%p694) target = $region80
        $region79: #{tpu_custom_call.1} parent=23 // pred_region
          %p697 = scmp.lt.s32.totalorder %s37, 1
          %s698 = scalar_select %p697, %s37, 1
          %s699 = smul.addr %s698, 4
          %s700 = scalar_lea.vmem %s15, %s699
        $region80: #{tpu_custom_call.1} parent=23 // pred_fallthru
          _
        // Predicated region
        $region81: #{tpu_custom_call.1} parent=23 // pred_check
          %p701 = pneg %p467
        $region82: #{tpu_custom_call.1} parent=23 // pred_check_branch
          %703 = sbr.rel (%p701) target = $region84
        $region83: #{tpu_custom_call.1} parent=23 // pred_region
          %p704 = scmp.lt.s32.totalorder %s37, 1
          %s705 = scalar_select %p704, %s37, 1
          %s706 = smul.addr %s705, 64
          %s707 = smul.addr %s706, 4
          %s708 = scalar_lea.vmem %s16, %s707
        $region84: #{tpu_custom_call.1} parent=23 // pred_fallthru
          _
        // Predicated region
        $region85: #{tpu_custom_call.1} parent=23 // pred_check
          %p709 = pneg %p493
        $region86: #{tpu_custom_call.1} parent=23 // pred_check_branch
          %711 = sbr.rel (%p709) target = $region88
        $region87: #{tpu_custom_call.1} parent=23 // pred_region
          %p712 = scmp.lt.s32.totalorder %s37, 1
          %s713 = scalar_select %p712, %s37, 1
          %s714 = scalar_lea.vmem %s17, %s713
        $region88: #{tpu_custom_call.1} parent=23 // pred_fallthru
          _
        // Predicated region
        $region89: #{tpu_custom_call.1} parent=23 // pred_check
          %p715 = pneg %p519
        $region90: #{tpu_custom_call.1} parent=23 // pred_check_branch
          %717 = sbr.rel (%p715) target = $region92
        $region91: #{tpu_custom_call.1} parent=23 // pred_region
          %p718 = scmp.lt.s32.totalorder %s37, 1
          %s719 = scalar_select %p718, %s37, 1
          %s720 = scalar_lea.vmem %s18, %s719
        $region92: #{tpu_custom_call.1} parent=23 // pred_fallthru
          _
        // Predicated region
        $region93: #{tpu_custom_call.1} parent=23 // pred_check
          %p721 = pneg %p545
        $region94: #{tpu_custom_call.1} parent=23 // pred_check_branch
          %723 = sbr.rel (%p721) target = $region96
        $region95: #{tpu_custom_call.1} parent=23 // pred_region
          %p724 = scmp.lt.s32.totalorder %s37, 1
          %s725 = scalar_select %p724, %s37, 1
          %s726 = scalar_lea.vmem %s19, %s725
        $region96: #{tpu_custom_call.1} parent=23 // pred_fallthru
          _
      $region24: #{tpu_custom_call.1} parent=5 // pred_fallthru
        _
      %p727 = scmp.le.s32.totalorder 1, %s29
      %p728 = scmp.lt.s32.totalorder %s29, 5
      %p729 = pnand %p727, %p728
      %p730 = pneg %p729
      // Predicated region
      $region97: #{tpu_custom_call.1} parent=5 // pred_check
        _
      $region98: #{tpu_custom_call.1} parent=5 // pred_check_branch
        %732 = sbr.rel (%p729) target = $region100
      $region99: #{tpu_custom_call.1} parent=5 // pred_region
        %s733 = ssub.s32 %s29, 1
        %p734 = scmp.lt.s32.totalorder %s38, 1
        %s735 = scalar_select %p734, %s38, 1
        %s736 = smul.addr %s735, 8
        %s737 = scalar_lea.vmem %s0, %s736
        %p738 = pneg %p67
        %p739 = pneg %p64
        %p740 = scmp.lt.s32.totalorder %s38, 1
        %s741 = scalar_select %p740, %s38, 1
        %s742 = scalar_lea.vmem %s1, %s741
        %p743 = pneg %p93
        %p744 = pneg %p90
        %p745 = pneg %p114
        %p746 = pneg %p111
        %p747 = pneg %p135
        %p748 = pneg %p132
        %p749 = scmp.lt.s32.totalorder %s39, 1
        %s750 = scalar_select %p749, %s39, 1
        %s751 = smul.addr %s750, 64
        %s752 = smul.addr %s751, 4
        %s753 = scalar_lea.vmem %s4, %s752
        %p754 = pneg %p161
        %p755 = pneg %p158
        %p756 = scmp.lt.s32.totalorder %s39, 1
        %s757 = scalar_select %p756, %s39, 1
        %s758 = smul.addr %s757, 4
        %s759 = scalar_lea.vmem %s5, %s758
        %p760 = pneg %p187
        %p761 = pneg %p184
        %p762 = scmp.lt.s32.totalorder %s39, 1
        %s763 = scalar_select %p762, %s39, 1
        %s764 = smul.addr %s763, 64
        %s765 = smul.addr %s764, 4
        %s766 = scalar_lea.vmem %s6, %s765
        %p767 = pneg %p213
        %p768 = pneg %p210
        %p769 = scmp.lt.s32.totalorder %s39, 1
        %s770 = scalar_select %p769, %s39, 1
        %s771 = smul.addr %s770, 4
        %s772 = scalar_lea.vmem %s7, %s771
        %p773 = pneg %p239
        %p774 = pneg %p236
        %p775 = scmp.lt.s32.totalorder %s39, 1
        %s776 = scalar_select %p775, %s39, 1
        %s777 = smul.addr %s776, 64
        %s778 = smul.addr %s777, 4
        %s779 = scalar_lea.vmem %s8, %s778
        %p780 = pneg %p265
        %p781 = pneg %p262
        %p782 = scmp.lt.s32.totalorder %s39, 1
        %s783 = scalar_select %p782, %s39, 1
        %s784 = smul.addr %s783, 4
        %s785 = scalar_lea.vmem %s9, %s784
        %p786 = pneg %p291
        %p787 = pneg %p288
        %p788 = scmp.lt.s32.totalorder %s39, 1
        %s789 = scalar_select %p788, %s39, 1
        %s790 = smul.addr %s789, 16
        %s791 = smul.addr %s790, 4
        %s792 = scalar_lea.vmem %s10, %s791
        %p793 = pneg %p317
        %p794 = pneg %p314
        %p795 = scmp.lt.s32.totalorder %s39, 1
        %s796 = scalar_select %p795, %s39, 1
        %s797 = scalar_lea.vmem %s11, %s796
        %p798 = pneg %p343
        %p799 = pneg %p340
        %p800 = scmp.lt.s32.totalorder %s39, 1
        %s801 = scalar_select %p800, %s39, 1
        %s802 = scalar_lea.vmem %s12, %s801
        %p803 = pneg %p369
        %p804 = pneg %p366
        %p805 = scmp.lt.s32.totalorder %s39, 1
        %s806 = scalar_select %p805, %s39, 1
        %s807 = scalar_lea.vmem %s13, %s806
        %p808 = pneg %p395
        %p809 = pneg %p392
        %p810 = scmp.lt.s32.totalorder %s39, 1
        %s811 = scalar_select %p810, %s39, 1
        %s812 = smul.addr %s811, 64
        %s813 = smul.addr %s812, 4
        %s814 = scalar_lea.vmem %s14, %s813
        %p815 = pneg %p421
        %p816 = pneg %p418
        %p817 = scmp.lt.s32.totalorder %s39, 1
        %s818 = scalar_select %p817, %s39, 1
        %s819 = smul.addr %s818, 4
        %s820 = scalar_lea.vmem %s15, %s819
        %p821 = pneg %p447
        %p822 = pneg %p444
        %p823 = scmp.lt.s32.totalorder %s39, 1
        %s824 = scalar_select %p823, %s39, 1
        %s825 = smul.addr %s824, 64
        %s826 = smul.addr %s825, 4
        %s827 = scalar_lea.vmem %s16, %s826
        %p828 = pneg %p473
        %p829 = pneg %p470
        %p830 = scmp.lt.s32.totalorder %s39, 1
        %s831 = scalar_select %p830, %s39, 1
        %s832 = scalar_lea.vmem %s17, %s831
        %p833 = pneg %p499
        %p834 = pneg %p496
        %p835 = scmp.lt.s32.totalorder %s39, 1
        %s836 = scalar_select %p835, %s39, 1
        %s837 = scalar_lea.vmem %s18, %s836
        %p838 = pneg %p525
        %p839 = pneg %p522
        %p840 = scmp.lt.s32.totalorder %s39, 1
        %s841 = scalar_select %p840, %s39, 1
        %s842 = scalar_lea.vmem %s19, %s841
        %p843 = pneg %p551
        %p844 = pneg %p548
        %p845 = pneg %p577
        %p846 = pneg %p574
        %s847 = sand.u32 %s564, 1
        %s848 = scalar_lea.sflag [#allocation3], %s847
        %s849 = sand.u32 %s564, 1
        %s850 = smul.addr %s849, 8
        %s851 = scalar_lea.vmem [#allocation2], %s850
        %p852 = scmp.lt.s32.totalorder %s38, 1
        %s853 = scalar_select %p852, %s38, 1
        %s854 = smul.addr %s853, 8
        %s855 = scalar_lea.vmem %s0, %s854
        %p856 = scmp.lt.s32.totalorder %s38, 1
        %s857 = scalar_select %p856, %s38, 1
        %s858 = scalar_lea.vmem %s1, %s857
        %p859 = scmp.lt.s32.totalorder %s39, 1
        %s860 = scalar_select %p859, %s39, 1
        %s861 = smul.addr %s860, 64
        %s862 = smul.addr %s861, 4
        %s863 = scalar_lea.vmem %s4, %s862
        %p864 = scmp.lt.s32.totalorder %s39, 1
        %s865 = scalar_select %p864, %s39, 1
        %s866 = smul.addr %s865, 4
        %s867 = scalar_lea.vmem %s5, %s866
        %p868 = scmp.lt.s32.totalorder %s39, 1
        %s869 = scalar_select %p868, %s39, 1
        %s870 = smul.addr %s869, 64
        %s871 = smul.addr %s870, 4
        %s872 = scalar_lea.vmem %s6, %s871
        %p873 = scmp.lt.s32.totalorder %s39, 1
        %s874 = scalar_select %p873, %s39, 1
        %s875 = smul.addr %s874, 4
        %s876 = scalar_lea.vmem %s7, %s875
        %p877 = scmp.lt.s32.totalorder %s39, 1
        %s878 = scalar_select %p877, %s39, 1
        %s879 = smul.addr %s878, 64
        %s880 = smul.addr %s879, 4
        %s881 = scalar_lea.vmem %s8, %s880
        %p882 = scmp.lt.s32.totalorder %s39, 1
        %s883 = scalar_select %p882, %s39, 1
        %s884 = smul.addr %s883, 4
        %s885 = scalar_lea.vmem %s9, %s884
        %p886 = scmp.lt.s32.totalorder %s39, 1
        %s887 = scalar_select %p886, %s39, 1
        %s888 = smul.addr %s887, 16
        %s889 = smul.addr %s888, 4
        %s890 = scalar_lea.vmem %s10, %s889
        %p891 = scmp.lt.s32.totalorder %s39, 1
        %s892 = scalar_select %p891, %s39, 1
        %s893 = scalar_lea.vmem %s11, %s892
        %p894 = scmp.lt.s32.totalorder %s39, 1
        %s895 = scalar_select %p894, %s39, 1
        %s896 = scalar_lea.vmem %s12, %s895
        %p897 = scmp.lt.s32.totalorder %s39, 1
        %s898 = scalar_select %p897, %s39, 1
        %s899 = scalar_lea.vmem %s13, %s898
        %p900 = scmp.lt.s32.totalorder %s39, 1
        %s901 = scalar_select %p900, %s39, 1
        %s902 = smul.addr %s901, 64
        %s903 = smul.addr %s902, 4
        %s904 = scalar_lea.vmem %s14, %s903
        %p905 = scmp.lt.s32.totalorder %s39, 1
        %s906 = scalar_select %p905, %s39, 1
        %s907 = smul.addr %s906, 4
        %s908 = scalar_lea.vmem %s15, %s907
        %p909 = scmp.lt.s32.totalorder %s39, 1
        %s910 = scalar_select %p909, %s39, 1
        %s911 = smul.addr %s910, 64
        %s912 = smul.addr %s911, 4
        %s913 = scalar_lea.vmem %s16, %s912
        %p914 = scmp.lt.s32.totalorder %s39, 1
        %s915 = scalar_select %p914, %s39, 1
        %s916 = scalar_lea.vmem %s17, %s915
        %p917 = scmp.lt.s32.totalorder %s39, 1
        %s918 = scalar_select %p917, %s39, 1
        %s919 = scalar_lea.vmem %s18, %s918
        %p920 = scmp.lt.s32.totalorder %s39, 1
        %s921 = scalar_select %p920, %s39, 1
        %s922 = scalar_lea.vmem %s19, %s921
        %p924 = scmp.eq.s32.totalorder %s39, 0
        // Predicated region
        $region101: #{tpu_custom_call.1} parent=99 // pred_check
          %p925 = pneg %p924
        $region102: #{tpu_custom_call.1} parent=99 // pred_check_branch
          %927 = sbr.rel (%p925) target = $region104
        $region103: #{tpu_custom_call.1} parent=99 // pred_region
          %v928 = vld [vmem:[%s855] sm:$0xff]
          %v929 = vld [vmem:[%s2] sm:$0x1]
          %v930 = vld [vmem:[%s3] sm:$0x1]
          %931 = vadd.xlane.f32.xlu0 %v928
          %v932 = vpop.xlane.xlu0 %931
          %v933 = vrcp.pop 128.0
          %v934 = vmul.f32 128.0, %v933
          %v935 = vsub.f32 1.0, %v934
          %v936 = vmul.f32 %v933, %v935
          %v937 = vadd.f32 %v933, %v936
          %vm938 = vweird.f32 %v933
          %v939 = vsel %vm938, %v933, %v937
          %v940 = vmul.f32 %v932, %v939
          %v941 = vsub.f32 %v928, %v940
          %v942 = vmul.f32 %v941, %v941
          %943 = vadd.xlane.f32.xlu0 %v942
          %v944 = vpop.xlane.xlu0 %943
          %v945 = vmul.f32 %v944, %v939
          %v946 = vadd.f32 %v945, 1e-12
          %v947 = vrsqrt.pop %v946
          %v948 = vmul.f32 %v947, %v946
          %v949 = vmul.f32 %v948, %v947
          %v950 = vmul.f32 0.5, %v949
          %v951 = vsub.f32 1.5, %v950
          %v952 = vmul.f32 %v947, %v951
          %vm953 = vweird.f32 %v946
          %vm954 = vweird.f32 %v947
          %vm955 = vmor %vm953, %vm954
          %v956 = vsel %vm955, %v947, %v952
          %v957 = vmul.f32 %v941, %v956
          %v959 = vperm.slane %v929, 0
          %v961 = vmul.f32 %v957, %v959
          %v963 = vperm.slane %v930, 0
          %v965 = vadd.f32 %v961, %v963
          %966 = vst [vmem:[%s851] sm:$0xff] %v965
        $region104: #{tpu_custom_call.1} parent=99 // pred_fallthru
          _
        %v967 = vld [vmem:[%s851] sm:$0xff]
        %v968 = vpack.c.bf16 %v967, %v967
        %v969 = vld [vmem:[%s863] sm:$0xf]
        %v970 = vld [vmem:[%s863 + $0x4] sm:$0xf]
        %v971 = vld [vmem:[%s863 + $0x8] sm:$0xf]
        %v972 = vld [vmem:[%s863 + $0xc] sm:$0xf]
        %v973 = vld [vmem:[%s863 + $0x10] sm:$0xf]
        %v974 = vld [vmem:[%s863 + $0x14] sm:$0xf]
        %v975 = vld [vmem:[%s863 + $0x18] sm:$0xf]
        %v976 = vld [vmem:[%s863 + $0x1c] sm:$0xf]
        %v977 = vld [vmem:[%s863 + $0x20] sm:$0xf]
        %v978 = vld [vmem:[%s863 + $0x24] sm:$0xf]
        %v979 = vld [vmem:[%s863 + $0x28] sm:$0xf]
        %v980 = vld [vmem:[%s863 + $0x2c] sm:$0xf]
        %v981 = vld [vmem:[%s863 + $0x30] sm:$0xf]
        %v982 = vld [vmem:[%s863 + $0x34] sm:$0xf]
        %v983 = vld [vmem:[%s863 + $0x38] sm:$0xf]
        %v984 = vld [vmem:[%s863 + $0x3c] sm:$0xf]
        %v985 = vld [vmem:[%s863 + $0x40] sm:$0xf]
        %v986 = vld [vmem:[%s863 + $0x44] sm:$0xf]
        %v987 = vld [vmem:[%s863 + $0x48] sm:$0xf]
        %v988 = vld [vmem:[%s863 + $0x4c] sm:$0xf]
        %v989 = vld [vmem:[%s863 + $0x50] sm:$0xf]
        %v990 = vld [vmem:[%s863 + $0x54] sm:$0xf]
        %v991 = vld [vmem:[%s863 + $0x58] sm:$0xf]
        %v992 = vld [vmem:[%s863 + $0x5c] sm:$0xf]
        %v993 = vld [vmem:[%s863 + $0x60] sm:$0xf]
        %v994 = vld [vmem:[%s863 + $0x64] sm:$0xf]
        %v995 = vld [vmem:[%s863 + $0x68] sm:$0xf]
        %v996 = vld [vmem:[%s863 + $0x6c] sm:$0xf]
        %v997 = vld [vmem:[%s863 + $0x70] sm:$0xf]
        %v998 = vld [vmem:[%s863 + $0x74] sm:$0xf]
        %v999 = vld [vmem:[%s863 + $0x78] sm:$0xf]
        %v1000 = vld [vmem:[%s863 + $0x7c] sm:$0xf]
        %v1001 = vld [vmem:[%s863 + $0x80] sm:$0xf]
        %v1002 = vld [vmem:[%s863 + $0x84] sm:$0xf]
        %v1003 = vld [vmem:[%s863 + $0x88] sm:$0xf]
        %v1004 = vld [vmem:[%s863 + $0x8c] sm:$0xf]
        %v1005 = vld [vmem:[%s863 + $0x90] sm:$0xf]
        %v1006 = vld [vmem:[%s863 + $0x94] sm:$0xf]
        %v1007 = vld [vmem:[%s863 + $0x98] sm:$0xf]
        %v1008 = vld [vmem:[%s863 + $0x9c] sm:$0xf]
        %v1009 = vld [vmem:[%s863 + $0xa0] sm:$0xf]
        %v1010 = vld [vmem:[%s863 + $0xa4] sm:$0xf]
        %v1011 = vld [vmem:[%s863 + $0xa8] sm:$0xf]
        %v1012 = vld [vmem:[%s863 + $0xac] sm:$0xf]
        %v1013 = vld [vmem:[%s863 + $0xb0] sm:$0xf]
        %v1014 = vld [vmem:[%s863 + $0xb4] sm:$0xf]
        %v1015 = vld [vmem:[%s863 + $0xb8] sm:$0xf]
        %v1016 = vld [vmem:[%s863 + $0xbc] sm:$0xf]
        %v1017 = vld [vmem:[%s863 + $0xc0] sm:$0xf]
        %v1018 = vld [vmem:[%s863 + $0xc4] sm:$0xf]
        %v1019 = vld [vmem:[%s863 + $0xc8] sm:$0xf]
        %v1020 = vld [vmem:[%s863 + $0xcc] sm:$0xf]
        %v1021 = vld [vmem:[%s863 + $0xd0] sm:$0xf]
        %v1022 = vld [vmem:[%s863 + $0xd4] sm:$0xf]
        %v1023 = vld [vmem:[%s863 + $0xd8] sm:$0xf]
        %v1024 = vld [vmem:[%s863 + $0xdc] sm:$0xf]
        %v1025 = vld [vmem:[%s863 + $0xe0] sm:$0xf]
        %v1026 = vld [vmem:[%s863 + $0xe4] sm:$0xf]
        %v1027 = vld [vmem:[%s863 + $0xe8] sm:$0xf]
        %v1028 = vld [vmem:[%s863 + $0xec] sm:$0xf]
        %v1029 = vld [vmem:[%s863 + $0xf0] sm:$0xf]
        %v1030 = vld [vmem:[%s863 + $0xf4] sm:$0xf]
        %v1031 = vld [vmem:[%s863 + $0xf8] sm:$0xf]
        %v1032 = vld [vmem:[%s863 + $0xfc] sm:$0xf]
        %v1033 = vld [vmem:[%s867] sm:$0x1]
        %v1034 = vld [vmem:[%s867 + $0x1] sm:$0x1]
        %v1035 = vld [vmem:[%s867 + $0x2] sm:$0x1]
        %v1036 = vld [vmem:[%s867 + $0x3] sm:$0x1]
        %v1041 = vperm.slane %v1033, 0
        %v1042 = vperm.slane %v1034, 0
        %v1043 = vperm.slane %v1035, 0
        %v1044 = vperm.slane %v1036, 0
        %v1065 = vunpack.c.l.b16 %v969
        %v1066 = vunpack.c.l.b16 %v970
        %v1067 = vunpack.c.l.b16 %v971
        %v1068 = vunpack.c.l.b16 %v972
        %v1069 = vunpack.c.l.b16 %v973
        %v1070 = vunpack.c.l.b16 %v974
        %v1071 = vunpack.c.l.b16 %v975
        %v1072 = vunpack.c.l.b16 %v976
        %v1073 = vunpack.c.l.b16 %v977
        %v1074 = vunpack.c.l.b16 %v978
        %v1075 = vunpack.c.l.b16 %v979
        %v1076 = vunpack.c.l.b16 %v980
        %v1077 = vunpack.c.l.b16 %v981
        %v1078 = vunpack.c.l.b16 %v982
        %v1079 = vunpack.c.l.b16 %v983
        %v1080 = vunpack.c.l.b16 %v984
        %v1081 = vpack.c.b16 %v1066, %v1065
        %v1082 = vpack.c.b16 %v1068, %v1067
        %v1083 = vpack.c.b16 %v1070, %v1069
        %v1084 = vpack.c.b16 %v1072, %v1071
        %v1085 = vpack.c.b16 %v1074, %v1073
        %v1086 = vpack.c.b16 %v1076, %v1075
        %v1087 = vpack.c.b16 %v1078, %v1077
        %v1088 = vpack.c.b16 %v1080, %v1079
        %1097 = vmatpush.bf16.msra.mxu0 %v1088
        %1098 = vmatpush.bf16.msra.mxu0 %v1087
        %1099 = vmatpush.bf16.msra.mxu0 %v1086
        %1100 = vmatpush.bf16.msra.mxu0 %v1085
        %1101 = vmatpush.bf16.msra.mxu0 %v1084
        %1102 = vmatpush.bf16.msra.mxu0 %v1083
        %1103 = vmatpush.bf16.msra.mxu0 %v1082
        %1104 = vmatpush.bf16.msra.mxu0 %v1081
        %1105 = vmatmul.bf16.gmra.mxu0 %v968
        %v1106 = vpop.f32.mrf.mxu0
        %v1107 = vadd.f32 %v1041, %v1106
        %v1108 = vpop.f32.mrf.mxu0
        %1109 = vdwg.mxu0
        %v1126 = vunpack.c.l.b16 %v985
        %v1127 = vunpack.c.l.b16 %v986
        %v1128 = vunpack.c.l.b16 %v987
        %v1129 = vunpack.c.l.b16 %v988
        %v1130 = vunpack.c.l.b16 %v989
        %v1131 = vunpack.c.l.b16 %v990
        %v1132 = vunpack.c.l.b16 %v991
        %v1133 = vunpack.c.l.b16 %v992
        %v1134 = vunpack.c.l.b16 %v993
        %v1135 = vunpack.c.l.b16 %v994
        %v1136 = vunpack.c.l.b16 %v995
        %v1137 = vunpack.c.l.b16 %v996
        %v1138 = vunpack.c.l.b16 %v997
        %v1139 = vunpack.c.l.b16 %v998
        %v1140 = vunpack.c.l.b16 %v999
        %v1141 = vunpack.c.l.b16 %v1000
        %v1142 = vpack.c.b16 %v1127, %v1126
        %v1143 = vpack.c.b16 %v1129, %v1128
        %v1144 = vpack.c.b16 %v1131, %v1130
        %v1145 = vpack.c.b16 %v1133, %v1132
        %v1146 = vpack.c.b16 %v1135, %v1134
        %v1147 = vpack.c.b16 %v1137, %v1136
        %v1148 = vpack.c.b16 %v1139, %v1138
        %v1149 = vpack.c.b16 %v1141, %v1140
        %1158 = vmatpush.bf16.msra.mxu0 %v1149
        %1159 = vmatpush.bf16.msra.mxu0 %v1148
        %1160 = vmatpush.bf16.msra.mxu0 %v1147
        %1161 = vmatpush.bf16.msra.mxu0 %v1146
        %1162 = vmatpush.bf16.msra.mxu0 %v1145
        %1163 = vmatpush.bf16.msra.mxu0 %v1144
        %1164 = vmatpush.bf16.msra.mxu0 %v1143
        %1165 = vmatpush.bf16.msra.mxu0 %v1142
        %1166 = vmatmul.bf16.gmra.mxu0 %v968
        %v1167 = vpop.f32.mrf.mxu0
        %v1168 = vadd.f32 %v1042, %v1167
        %v1169 = vpop.f32.mrf.mxu0
        %1170 = vdwg.mxu0
        %v1187 = vunpack.c.l.b16 %v1001
        %v1188 = vunpack.c.l.b16 %v1002
        %v1189 = vunpack.c.l.b16 %v1003
        %v1190 = vunpack.c.l.b16 %v1004
        %v1191 = vunpack.c.l.b16 %v1005
        %v1192 = vunpack.c.l.b16 %v1006
        %v1193 = vunpack.c.l.b16 %v1007
        %v1194 = vunpack.c.l.b16 %v1008
        %v1195 = vunpack.c.l.b16 %v1009
        %v1196 = vunpack.c.l.b16 %v1010
        %v1197 = vunpack.c.l.b16 %v1011
        %v1198 = vunpack.c.l.b16 %v1012
        %v1199 = vunpack.c.l.b16 %v1013
        %v1200 = vunpack.c.l.b16 %v1014
        %v1201 = vunpack.c.l.b16 %v1015
        %v1202 = vunpack.c.l.b16 %v1016
        %v1203 = vpack.c.b16 %v1188, %v1187
        %v1204 = vpack.c.b16 %v1190, %v1189
        %v1205 = vpack.c.b16 %v1192, %v1191
        %v1206 = vpack.c.b16 %v1194, %v1193
        %v1207 = vpack.c.b16 %v1196, %v1195
        %v1208 = vpack.c.b16 %v1198, %v1197
        %v1209 = vpack.c.b16 %v1200, %v1199
        %v1210 = vpack.c.b16 %v1202, %v1201
        %1219 = vmatpush.bf16.msra.mxu0 %v1210
        %1220 = vmatpush.bf16.msra.mxu0 %v1209
        %1221 = vmatpush.bf16.msra.mxu0 %v1208
        %1222 = vmatpush.bf16.msra.mxu0 %v1207
        %1223 = vmatpush.bf16.msra.mxu0 %v1206
        %1224 = vmatpush.bf16.msra.mxu0 %v1205
        %1225 = vmatpush.bf16.msra.mxu0 %v1204
        %1226 = vmatpush.bf16.msra.mxu0 %v1203
        %1227 = vmatmul.bf16.gmra.mxu0 %v968
        %v1228 = vpop.f32.mrf.mxu0
        %v1229 = vadd.f32 %v1043, %v1228
        %v1230 = vpop.f32.mrf.mxu0
        %1231 = vdwg.mxu0
        %v1248 = vunpack.c.l.b16 %v1017
        %v1249 = vunpack.c.l.b16 %v1018
        %v1250 = vunpack.c.l.b16 %v1019
        %v1251 = vunpack.c.l.b16 %v1020
        %v1252 = vunpack.c.l.b16 %v1021
        %v1253 = vunpack.c.l.b16 %v1022
        %v1254 = vunpack.c.l.b16 %v1023
        %v1255 = vunpack.c.l.b16 %v1024
        %v1256 = vunpack.c.l.b16 %v1025
        %v1257 = vunpack.c.l.b16 %v1026
        %v1258 = vunpack.c.l.b16 %v1027
        %v1259 = vunpack.c.l.b16 %v1028
        %v1260 = vunpack.c.l.b16 %v1029
        %v1261 = vunpack.c.l.b16 %v1030
        %v1262 = vunpack.c.l.b16 %v1031
        %v1263 = vunpack.c.l.b16 %v1032
        %v1264 = vpack.c.b16 %v1249, %v1248
        %v1265 = vpack.c.b16 %v1251, %v1250
        %v1266 = vpack.c.b16 %v1253, %v1252
        %v1267 = vpack.c.b16 %v1255, %v1254
        %v1268 = vpack.c.b16 %v1257, %v1256
        %v1269 = vpack.c.b16 %v1259, %v1258
        %v1270 = vpack.c.b16 %v1261, %v1260
        %v1271 = vpack.c.b16 %v1263, %v1262
        %1280 = vmatpush.bf16.msra.mxu0 %v1271
        %1281 = vmatpush.bf16.msra.mxu0 %v1270
        %1282 = vmatpush.bf16.msra.mxu0 %v1269
        %1283 = vmatpush.bf16.msra.mxu0 %v1268
        %1284 = vmatpush.bf16.msra.mxu0 %v1267
        %1285 = vmatpush.bf16.msra.mxu0 %v1266
        %1286 = vmatpush.bf16.msra.mxu0 %v1265
        %1287 = vmatpush.bf16.msra.mxu0 %v1264
        %1288 = vmatmul.bf16.gmra.mxu0 %v968
        %v1289 = vpop.f32.mrf.mxu0
        %v1290 = vadd.f32 %v1044, %v1289
        %v1291 = vpop.f32.mrf.mxu0
        %1292 = vdwg.mxu0
        %v1293 = vmul.f32 %v1107, 0.17677669
        %v1294 = vmul.f32 %v1168, 0.17677669
        %v1295 = vmul.f32 %v1229, 0.17677669
        %v1296 = vmul.f32 %v1290, 0.17677669
        %v1297 = vld [vmem:[%s872] sm:$0xf]
        %v1298 = vld [vmem:[%s872 + $0x4] sm:$0xf]
        %v1299 = vld [vmem:[%s872 + $0x8] sm:$0xf]
        %v1300 = vld [vmem:[%s872 + $0xc] sm:$0xf]
        %v1301 = vld [vmem:[%s872 + $0x10] sm:$0xf]
        %v1302 = vld [vmem:[%s872 + $0x14] sm:$0xf]
        %v1303 = vld [vmem:[%s872 + $0x18] sm:$0xf]
        %v1304 = vld [vmem:[%s872 + $0x1c] sm:$0xf]
        %v1305 = vld [vmem:[%s872 + $0x20] sm:$0xf]
        %v1306 = vld [vmem:[%s872 + $0x24] sm:$0xf]
        %v1307 = vld [vmem:[%s872 + $0x28] sm:$0xf]
        %v1308 = vld [vmem:[%s872 + $0x2c] sm:$0xf]
        %v1309 = vld [vmem:[%s872 + $0x30] sm:$0xf]
        %v1310 = vld [vmem:[%s872 + $0x34] sm:$0xf]
        %v1311 = vld [vmem:[%s872 + $0x38] sm:$0xf]
        %v1312 = vld [vmem:[%s872 + $0x3c] sm:$0xf]
        %v1313 = vld [vmem:[%s872 + $0x40] sm:$0xf]
        %v1314 = vld [vmem:[%s872 + $0x44] sm:$0xf]
        %v1315 = vld [vmem:[%s872 + $0x48] sm:$0xf]
        %v1316 = vld [vmem:[%s872 + $0x4c] sm:$0xf]
        %v1317 = vld [vmem:[%s872 + $0x50] sm:$0xf]
        %v1318 = vld [vmem:[%s872 + $0x54] sm:$0xf]
        %v1319 = vld [vmem:[%s872 + $0x58] sm:$0xf]
        %v1320 = vld [vmem:[%s872 + $0x5c] sm:$0xf]
        %v1321 = vld [vmem:[%s872 + $0x60] sm:$0xf]
        %v1322 = vld [vmem:[%s872 + $0x64] sm:$0xf]
        %v1323 = vld [vmem:[%s872 + $0x68] sm:$0xf]
        %v1324 = vld [vmem:[%s872 + $0x6c] sm:$0xf]
        %v1325 = vld [vmem:[%s872 + $0x70] sm:$0xf]
        %v1326 = vld [vmem:[%s872 + $0x74] sm:$0xf]
        %v1327 = vld [vmem:[%s872 + $0x78] sm:$0xf]
        %v1328 = vld [vmem:[%s872 + $0x7c] sm:$0xf]
        %v1329 = vld [vmem:[%s872 + $0x80] sm:$0xf]
        %v1330 = vld [vmem:[%s872 + $0x84] sm:$0xf]
        %v1331 = vld [vmem:[%s872 + $0x88] sm:$0xf]
        %v1332 = vld [vmem:[%s872 + $0x8c] sm:$0xf]
        %v1333 = vld [vmem:[%s872 + $0x90] sm:$0xf]
        %v1334 = vld [vmem:[%s872 + $0x94] sm:$0xf]
        %v1335 = vld [vmem:[%s872 + $0x98] sm:$0xf]
        %v1336 = vld [vmem:[%s872 + $0x9c] sm:$0xf]
        %v1337 = vld [vmem:[%s872 + $0xa0] sm:$0xf]
        %v1338 = vld [vmem:[%s872 + $0xa4] sm:$0xf]
        %v1339 = vld [vmem:[%s872 + $0xa8] sm:$0xf]
        %v1340 = vld [vmem:[%s872 + $0xac] sm:$0xf]
        %v1341 = vld [vmem:[%s872 + $0xb0] sm:$0xf]
        %v1342 = vld [vmem:[%s872 + $0xb4] sm:$0xf]
        %v1343 = vld [vmem:[%s872 + $0xb8] sm:$0xf]
        %v1344 = vld [vmem:[%s872 + $0xbc] sm:$0xf]
        %v1345 = vld [vmem:[%s872 + $0xc0] sm:$0xf]
        %v1346 = vld [vmem:[%s872 + $0xc4] sm:$0xf]
        %v1347 = vld [vmem:[%s872 + $0xc8] sm:$0xf]
        %v1348 = vld [vmem:[%s872 + $0xcc] sm:$0xf]
        %v1349 = vld [vmem:[%s872 + $0xd0] sm:$0xf]
        %v1350 = vld [vmem:[%s872 + $0xd4] sm:$0xf]
        %v1351 = vld [vmem:[%s872 + $0xd8] sm:$0xf]
        %v1352 = vld [vmem:[%s872 + $0xdc] sm:$0xf]
        %v1353 = vld [vmem:[%s872 + $0xe0] sm:$0xf]
        %v1354 = vld [vmem:[%s872 + $0xe4] sm:$0xf]
        %v1355 = vld [vmem:[%s872 + $0xe8] sm:$0xf]
        %v1356 = vld [vmem:[%s872 + $0xec] sm:$0xf]
        %v1357 = vld [vmem:[%s872 + $0xf0] sm:$0xf]
        %v1358 = vld [vmem:[%s872 + $0xf4] sm:$0xf]
        %v1359 = vld [vmem:[%s872 + $0xf8] sm:$0xf]
        %v1360 = vld [vmem:[%s872 + $0xfc] sm:$0xf]
        %v1361 = vld [vmem:[%s876] sm:$0x1]
        %v1362 = vld [vmem:[%s876 + $0x1] sm:$0x1]
        %v1363 = vld [vmem:[%s876 + $0x2] sm:$0x1]
        %v1364 = vld [vmem:[%s876 + $0x3] sm:$0x1]
        %v1369 = vperm.slane %v1361, 0
        %v1370 = vperm.slane %v1362, 0
        %v1371 = vperm.slane %v1363, 0
        %v1372 = vperm.slane %v1364, 0
        %v1393 = vunpack.c.l.b16 %v1297
        %v1394 = vunpack.c.l.b16 %v1298
        %v1395 = vunpack.c.l.b16 %v1299
        %v1396 = vunpack.c.l.b16 %v1300
        %v1397 = vunpack.c.l.b16 %v1301
        %v1398 = vunpack.c.l.b16 %v1302
        %v1399 = vunpack.c.l.b16 %v1303
        %v1400 = vunpack.c.l.b16 %v1304
        %v1401 = vunpack.c.l.b16 %v1305
        %v1402 = vunpack.c.l.b16 %v1306
        %v1403 = vunpack.c.l.b16 %v1307
        %v1404 = vunpack.c.l.b16 %v1308
        %v1405 = vunpack.c.l.b16 %v1309
        %v1406 = vunpack.c.l.b16 %v1310
        %v1407 = vunpack.c.l.b16 %v1311
        %v1408 = vunpack.c.l.b16 %v1312
        %v1409 = vpack.c.b16 %v1394, %v1393
        %v1410 = vpack.c.b16 %v1396, %v1395
        %v1411 = vpack.c.b16 %v1398, %v1397
        %v1412 = vpack.c.b16 %v1400, %v1399
        %v1413 = vpack.c.b16 %v1402, %v1401
        %v1414 = vpack.c.b16 %v1404, %v1403
        %v1415 = vpack.c.b16 %v1406, %v1405
        %v1416 = vpack.c.b16 %v1408, %v1407
        %1425 = vmatpush.bf16.msra.mxu0 %v1416
        %1426 = vmatpush.bf16.msra.mxu0 %v1415
        %1427 = vmatpush.bf16.msra.mxu0 %v1414
        %1428 = vmatpush.bf16.msra.mxu0 %v1413
        %1429 = vmatpush.bf16.msra.mxu0 %v1412
        %1430 = vmatpush.bf16.msra.mxu0 %v1411
        %1431 = vmatpush.bf16.msra.mxu0 %v1410
        %1432 = vmatpush.bf16.msra.mxu0 %v1409
        %1433 = vmatmul.bf16.gmra.mxu0 %v968
        %v1434 = vpop.f32.mrf.mxu0
        %v1435 = vadd.f32 %v1369, %v1434
        %v1436 = vpop.f32.mrf.mxu0
        %1437 = vdwg.mxu0
        %v1454 = vunpack.c.l.b16 %v1313
        %v1455 = vunpack.c.l.b16 %v1314
        %v1456 = vunpack.c.l.b16 %v1315
        %v1457 = vunpack.c.l.b16 %v1316
        %v1458 = vunpack.c.l.b16 %v1317
        %v1459 = vunpack.c.l.b16 %v1318
        %v1460 = vunpack.c.l.b16 %v1319
        %v1461 = vunpack.c.l.b16 %v1320
        %v1462 = vunpack.c.l.b16 %v1321
        %v1463 = vunpack.c.l.b16 %v1322
        %v1464 = vunpack.c.l.b16 %v1323
        %v1465 = vunpack.c.l.b16 %v1324
        %v1466 = vunpack.c.l.b16 %v1325
        %v1467 = vunpack.c.l.b16 %v1326
        %v1468 = vunpack.c.l.b16 %v1327
        %v1469 = vunpack.c.l.b16 %v1328
        %v1470 = vpack.c.b16 %v1455, %v1454
        %v1471 = vpack.c.b16 %v1457, %v1456
        %v1472 = vpack.c.b16 %v1459, %v1458
        %v1473 = vpack.c.b16 %v1461, %v1460
        %v1474 = vpack.c.b16 %v1463, %v1462
        %v1475 = vpack.c.b16 %v1465, %v1464
        %v1476 = vpack.c.b16 %v1467, %v1466
        %v1477 = vpack.c.b16 %v1469, %v1468
        %1486 = vmatpush.bf16.msra.mxu0 %v1477
        %1487 = vmatpush.bf16.msra.mxu0 %v1476
        %1488 = vmatpush.bf16.msra.mxu0 %v1475
        %1489 = vmatpush.bf16.msra.mxu0 %v1474
        %1490 = vmatpush.bf16.msra.mxu0 %v1473
        %1491 = vmatpush.bf16.msra.mxu0 %v1472
        %1492 = vmatpush.bf16.msra.mxu0 %v1471
        %1493 = vmatpush.bf16.msra.mxu0 %v1470
        %1494 = vmatmul.bf16.gmra.mxu0 %v968
        %v1495 = vpop.f32.mrf.mxu0
        %v1496 = vadd.f32 %v1370, %v1495
        %v1497 = vpop.f32.mrf.mxu0
        %1498 = vdwg.mxu0
        %v1515 = vunpack.c.l.b16 %v1329
        %v1516 = vunpack.c.l.b16 %v1330
        %v1517 = vunpack.c.l.b16 %v1331
        %v1518 = vunpack.c.l.b16 %v1332
        %v1519 = vunpack.c.l.b16 %v1333
        %v1520 = vunpack.c.l.b16 %v1334
        %v1521 = vunpack.c.l.b16 %v1335
        %v1522 = vunpack.c.l.b16 %v1336
        %v1523 = vunpack.c.l.b16 %v1337
        %v1524 = vunpack.c.l.b16 %v1338
        %v1525 = vunpack.c.l.b16 %v1339
        %v1526 = vunpack.c.l.b16 %v1340
        %v1527 = vunpack.c.l.b16 %v1341
        %v1528 = vunpack.c.l.b16 %v1342
        %v1529 = vunpack.c.l.b16 %v1343
        %v1530 = vunpack.c.l.b16 %v1344
        %v1531 = vpack.c.b16 %v1516, %v1515
        %v1532 = vpack.c.b16 %v1518, %v1517
        %v1533 = vpack.c.b16 %v1520, %v1519
        %v1534 = vpack.c.b16 %v1522, %v1521
        %v1535 = vpack.c.b16 %v1524, %v1523
        %v1536 = vpack.c.b16 %v1526, %v1525
        %v1537 = vpack.c.b16 %v1528, %v1527
        %v1538 = vpack.c.b16 %v1530, %v1529
        %1547 = vmatpush.bf16.msra.mxu0 %v1538
        %1548 = vmatpush.bf16.msra.mxu0 %v1537
        %1549 = vmatpush.bf16.msra.mxu0 %v1536
        %1550 = vmatpush.bf16.msra.mxu0 %v1535
        %1551 = vmatpush.bf16.msra.mxu0 %v1534
        %1552 = vmatpush.bf16.msra.mxu0 %v1533
        %1553 = vmatpush.bf16.msra.mxu0 %v1532
        %1554 = vmatpush.bf16.msra.mxu0 %v1531
        %1555 = vmatmul.bf16.gmra.mxu0 %v968
        %v1556 = vpop.f32.mrf.mxu0
        %v1557 = vadd.f32 %v1371, %v1556
        %v1558 = vpop.f32.mrf.mxu0
        %1559 = vdwg.mxu0
        %v1576 = vunpack.c.l.b16 %v1345
        %v1577 = vunpack.c.l.b16 %v1346
        %v1578 = vunpack.c.l.b16 %v1347
        %v1579 = vunpack.c.l.b16 %v1348
        %v1580 = vunpack.c.l.b16 %v1349
        %v1581 = vunpack.c.l.b16 %v1350
        %v1582 = vunpack.c.l.b16 %v1351
        %v1583 = vunpack.c.l.b16 %v1352
        %v1584 = vunpack.c.l.b16 %v1353
        %v1585 = vunpack.c.l.b16 %v1354
        %v1586 = vunpack.c.l.b16 %v1355
        %v1587 = vunpack.c.l.b16 %v1356
        %v1588 = vunpack.c.l.b16 %v1357
        %v1589 = vunpack.c.l.b16 %v1358
        %v1590 = vunpack.c.l.b16 %v1359
        %v1591 = vunpack.c.l.b16 %v1360
        %v1592 = vpack.c.b16 %v1577, %v1576
        %v1593 = vpack.c.b16 %v1579, %v1578
        %v1594 = vpack.c.b16 %v1581, %v1580
        %v1595 = vpack.c.b16 %v1583, %v1582
        %v1596 = vpack.c.b16 %v1585, %v1584
        %v1597 = vpack.c.b16 %v1587, %v1586
        %v1598 = vpack.c.b16 %v1589, %v1588
        %v1599 = vpack.c.b16 %v1591, %v1590
        %1608 = vmatpush.bf16.msra.mxu0 %v1599
        %1609 = vmatpush.bf16.msra.mxu0 %v1598
        %1610 = vmatpush.bf16.msra.mxu0 %v1597
        %1611 = vmatpush.bf16.msra.mxu0 %v1596
        %1612 = vmatpush.bf16.msra.mxu0 %v1595
        %1613 = vmatpush.bf16.msra.mxu0 %v1594
        %1614 = vmatpush.bf16.msra.mxu0 %v1593
        %1615 = vmatpush.bf16.msra.mxu0 %v1592
        %1616 = vmatmul.bf16.gmra.mxu0 %v968
        %v1617 = vpop.f32.mrf.mxu0
        %v1618 = vadd.f32 %v1372, %v1617
        %v1619 = vpop.f32.mrf.mxu0
        %1620 = vdwg.mxu0
        %v1621 = vld [vmem:[%s881] sm:$0xf]
        %v1622 = vld [vmem:[%s881 + $0x4] sm:$0xf]
        %v1623 = vld [vmem:[%s881 + $0x8] sm:$0xf]
        %v1624 = vld [vmem:[%s881 + $0xc] sm:$0xf]
        %v1625 = vld [vmem:[%s881 + $0x10] sm:$0xf]
        %v1626 = vld [vmem:[%s881 + $0x14] sm:$0xf]
        %v1627 = vld [vmem:[%s881 + $0x18] sm:$0xf]
        %v1628 = vld [vmem:[%s881 + $0x1c] sm:$0xf]
        %v1629 = vld [vmem:[%s881 + $0x20] sm:$0xf]
        %v1630 = vld [vmem:[%s881 + $0x24] sm:$0xf]
        %v1631 = vld [vmem:[%s881 + $0x28] sm:$0xf]
        %v1632 = vld [vmem:[%s881 + $0x2c] sm:$0xf]
        %v1633 = vld [vmem:[%s881 + $0x30] sm:$0xf]
        %v1634 = vld [vmem:[%s881 + $0x34] sm:$0xf]
        %v1635 = vld [vmem:[%s881 + $0x38] sm:$0xf]
        %v1636 = vld [vmem:[%s881 + $0x3c] sm:$0xf]
        %v1637 = vld [vmem:[%s881 + $0x40] sm:$0xf]
        %v1638 = vld [vmem:[%s881 + $0x44] sm:$0xf]
        %v1639 = vld [vmem:[%s881 + $0x48] sm:$0xf]
        %v1640 = vld [vmem:[%s881 + $0x4c] sm:$0xf]
        %v1641 = vld [vmem:[%s881 + $0x50] sm:$0xf]
        %v1642 = vld [vmem:[%s881 + $0x54] sm:$0xf]
        %v1643 = vld [vmem:[%s881 + $0x58] sm:$0xf]
        %v1644 = vld [vmem:[%s881 + $0x5c] sm:$0xf]
        %v1645 = vld [vmem:[%s881 + $0x60] sm:$0xf]
        %v1646 = vld [vmem:[%s881 + $0x64] sm:$0xf]
        %v1647 = vld [vmem:[%s881 + $0x68] sm:$0xf]
        %v1648 = vld [vmem:[%s881 + $0x6c] sm:$0xf]
        %v1649 = vld [vmem:[%s881 + $0x70] sm:$0xf]
        %v1650 = vld [vmem:[%s881 + $0x74] sm:$0xf]
        %v1651 = vld [vmem:[%s881 + $0x78] sm:$0xf]
        %v1652 = vld [vmem:[%s881 + $0x7c] sm:$0xf]
        %v1653 = vld [vmem:[%s881 + $0x80] sm:$0xf]
        %v1654 = vld [vmem:[%s881 + $0x84] sm:$0xf]
        %v1655 = vld [vmem:[%s881 + $0x88] sm:$0xf]
        %v1656 = vld [vmem:[%s881 + $0x8c] sm:$0xf]
        %v1657 = vld [vmem:[%s881 + $0x90] sm:$0xf]
        %v1658 = vld [vmem:[%s881 + $0x94] sm:$0xf]
        %v1659 = vld [vmem:[%s881 + $0x98] sm:$0xf]
        %v1660 = vld [vmem:[%s881 + $0x9c] sm:$0xf]
        %v1661 = vld [vmem:[%s881 + $0xa0] sm:$0xf]
        %v1662 = vld [vmem:[%s881 + $0xa4] sm:$0xf]
        %v1663 = vld [vmem:[%s881 + $0xa8] sm:$0xf]
        %v1664 = vld [vmem:[%s881 + $0xac] sm:$0xf]
        %v1665 = vld [vmem:[%s881 + $0xb0] sm:$0xf]
        %v1666 = vld [vmem:[%s881 + $0xb4] sm:$0xf]
        %v1667 = vld [vmem:[%s881 + $0xb8] sm:$0xf]
        %v1668 = vld [vmem:[%s881 + $0xbc] sm:$0xf]
        %v1669 = vld [vmem:[%s881 + $0xc0] sm:$0xf]
        %v1670 = vld [vmem:[%s881 + $0xc4] sm:$0xf]
        %v1671 = vld [vmem:[%s881 + $0xc8] sm:$0xf]
        %v1672 = vld [vmem:[%s881 + $0xcc] sm:$0xf]
        %v1673 = vld [vmem:[%s881 + $0xd0] sm:$0xf]
        %v1674 = vld [vmem:[%s881 + $0xd4] sm:$0xf]
        %v1675 = vld [vmem:[%s881 + $0xd8] sm:$0xf]
        %v1676 = vld [vmem:[%s881 + $0xdc] sm:$0xf]
        %v1677 = vld [vmem:[%s881 + $0xe0] sm:$0xf]
        %v1678 = vld [vmem:[%s881 + $0xe4] sm:$0xf]
        %v1679 = vld [vmem:[%s881 + $0xe8] sm:$0xf]
        %v1680 = vld [vmem:[%s881 + $0xec] sm:$0xf]
        %v1681 = vld [vmem:[%s881 + $0xf0] sm:$0xf]
        %v1682 = vld [vmem:[%s881 + $0xf4] sm:$0xf]
        %v1683 = vld [vmem:[%s881 + $0xf8] sm:$0xf]
        %v1684 = vld [vmem:[%s881 + $0xfc] sm:$0xf]
        %v1685 = vld [vmem:[%s885] sm:$0x1]
        %v1686 = vld [vmem:[%s885 + $0x1] sm:$0x1]
        %v1687 = vld [vmem:[%s885 + $0x2] sm:$0x1]
        %v1688 = vld [vmem:[%s885 + $0x3] sm:$0x1]
        %v1693 = vperm.slane %v1685, 0
        %v1694 = vperm.slane %v1686, 0
        %v1695 = vperm.slane %v1687, 0
        %v1696 = vperm.slane %v1688, 0
        %v1717 = vunpack.c.l.b16 %v1621
        %v1718 = vunpack.c.l.b16 %v1622
        %v1719 = vunpack.c.l.b16 %v1623
        %v1720 = vunpack.c.l.b16 %v1624
        %v1721 = vunpack.c.l.b16 %v1625
        %v1722 = vunpack.c.l.b16 %v1626
        %v1723 = vunpack.c.l.b16 %v1627
        %v1724 = vunpack.c.l.b16 %v1628
        %v1725 = vunpack.c.l.b16 %v1629
        %v1726 = vunpack.c.l.b16 %v1630
        %v1727 = vunpack.c.l.b16 %v1631
        %v1728 = vunpack.c.l.b16 %v1632
        %v1729 = vunpack.c.l.b16 %v1633
        %v1730 = vunpack.c.l.b16 %v1634
        %v1731 = vunpack.c.l.b16 %v1635
        %v1732 = vunpack.c.l.b16 %v1636
        %v1733 = vpack.c.b16 %v1718, %v1717
        %v1734 = vpack.c.b16 %v1720, %v1719
        %v1735 = vpack.c.b16 %v1722, %v1721
        %v1736 = vpack.c.b16 %v1724, %v1723
        %v1737 = vpack.c.b16 %v1726, %v1725
        %v1738 = vpack.c.b16 %v1728, %v1727
        %v1739 = vpack.c.b16 %v1730, %v1729
        %v1740 = vpack.c.b16 %v1732, %v1731
        %1749 = vmatpush.bf16.msra.mxu0 %v1740
        %1750 = vmatpush.bf16.msra.mxu0 %v1739
        %1751 = vmatpush.bf16.msra.mxu0 %v1738
        %1752 = vmatpush.bf16.msra.mxu0 %v1737
        %1753 = vmatpush.bf16.msra.mxu0 %v1736
        %1754 = vmatpush.bf16.msra.mxu0 %v1735
        %1755 = vmatpush.bf16.msra.mxu0 %v1734
        %1756 = vmatpush.bf16.msra.mxu0 %v1733
        %1757 = vmatmul.bf16.gmra.mxu0 %v968
        %v1758 = vpop.f32.mrf.mxu0
        %v1759 = vadd.f32 %v1693, %v1758
        %v1760 = vpop.f32.mrf.mxu0
        %1761 = vdwg.mxu0
        %v1778 = vunpack.c.l.b16 %v1637
        %v1779 = vunpack.c.l.b16 %v1638
        %v1780 = vunpack.c.l.b16 %v1639
        %v1781 = vunpack.c.l.b16 %v1640
        %v1782 = vunpack.c.l.b16 %v1641
        %v1783 = vunpack.c.l.b16 %v1642
        %v1784 = vunpack.c.l.b16 %v1643
        %v1785 = vunpack.c.l.b16 %v1644
        %v1786 = vunpack.c.l.b16 %v1645
        %v1787 = vunpack.c.l.b16 %v1646
        %v1788 = vunpack.c.l.b16 %v1647
        %v1789 = vunpack.c.l.b16 %v1648
        %v1790 = vunpack.c.l.b16 %v1649
        %v1791 = vunpack.c.l.b16 %v1650
        %v1792 = vunpack.c.l.b16 %v1651
        %v1793 = vunpack.c.l.b16 %v1652
        %v1794 = vpack.c.b16 %v1779, %v1778
        %v1795 = vpack.c.b16 %v1781, %v1780
        %v1796 = vpack.c.b16 %v1783, %v1782
        %v1797 = vpack.c.b16 %v1785, %v1784
        %v1798 = vpack.c.b16 %v1787, %v1786
        %v1799 = vpack.c.b16 %v1789, %v1788
        %v1800 = vpack.c.b16 %v1791, %v1790
        %v1801 = vpack.c.b16 %v1793, %v1792
        %1810 = vmatpush.bf16.msra.mxu0 %v1801
        %1811 = vmatpush.bf16.msra.mxu0 %v1800
        %1812 = vmatpush.bf16.msra.mxu0 %v1799
        %1813 = vmatpush.bf16.msra.mxu0 %v1798
        %1814 = vmatpush.bf16.msra.mxu0 %v1797
        %1815 = vmatpush.bf16.msra.mxu0 %v1796
        %1816 = vmatpush.bf16.msra.mxu0 %v1795
        %1817 = vmatpush.bf16.msra.mxu0 %v1794
        %1818 = vmatmul.bf16.gmra.mxu0 %v968
        %v1819 = vpop.f32.mrf.mxu0
        %v1820 = vadd.f32 %v1694, %v1819
        %v1821 = vpop.f32.mrf.mxu0
        %1822 = vdwg.mxu0
        %v1839 = vunpack.c.l.b16 %v1653
        %v1840 = vunpack.c.l.b16 %v1654
        %v1841 = vunpack.c.l.b16 %v1655
        %v1842 = vunpack.c.l.b16 %v1656
        %v1843 = vunpack.c.l.b16 %v1657
        %v1844 = vunpack.c.l.b16 %v1658
        %v1845 = vunpack.c.l.b16 %v1659
        %v1846 = vunpack.c.l.b16 %v1660
        %v1847 = vunpack.c.l.b16 %v1661
        %v1848 = vunpack.c.l.b16 %v1662
        %v1849 = vunpack.c.l.b16 %v1663
        %v1850 = vunpack.c.l.b16 %v1664
        %v1851 = vunpack.c.l.b16 %v1665
        %v1852 = vunpack.c.l.b16 %v1666
        %v1853 = vunpack.c.l.b16 %v1667
        %v1854 = vunpack.c.l.b16 %v1668
        %v1855 = vpack.c.b16 %v1840, %v1839
        %v1856 = vpack.c.b16 %v1842, %v1841
        %v1857 = vpack.c.b16 %v1844, %v1843
        %v1858 = vpack.c.b16 %v1846, %v1845
        %v1859 = vpack.c.b16 %v1848, %v1847
        %v1860 = vpack.c.b16 %v1850, %v1849
        %v1861 = vpack.c.b16 %v1852, %v1851
        %v1862 = vpack.c.b16 %v1854, %v1853
        %1871 = vmatpush.bf16.msra.mxu0 %v1862
        %1872 = vmatpush.bf16.msra.mxu0 %v1861
        %1873 = vmatpush.bf16.msra.mxu0 %v1860
        %1874 = vmatpush.bf16.msra.mxu0 %v1859
        %1875 = vmatpush.bf16.msra.mxu0 %v1858
        %1876 = vmatpush.bf16.msra.mxu0 %v1857
        %1877 = vmatpush.bf16.msra.mxu0 %v1856
        %1878 = vmatpush.bf16.msra.mxu0 %v1855
        %1879 = vmatmul.bf16.gmra.mxu0 %v968
        %v1880 = vpop.f32.mrf.mxu0
        %v1881 = vadd.f32 %v1695, %v1880
        %v1882 = vpop.f32.mrf.mxu0
        %1883 = vdwg.mxu0
        %v1900 = vunpack.c.l.b16 %v1669
        %v1901 = vunpack.c.l.b16 %v1670
        %v1902 = vunpack.c.l.b16 %v1671
        %v1903 = vunpack.c.l.b16 %v1672
        %v1904 = vunpack.c.l.b16 %v1673
        %v1905 = vunpack.c.l.b16 %v1674
        %v1906 = vunpack.c.l.b16 %v1675
        %v1907 = vunpack.c.l.b16 %v1676
        %v1908 = vunpack.c.l.b16 %v1677
        %v1909 = vunpack.c.l.b16 %v1678
        %v1910 = vunpack.c.l.b16 %v1679
        %v1911 = vunpack.c.l.b16 %v1680
        %v1912 = vunpack.c.l.b16 %v1681
        %v1913 = vunpack.c.l.b16 %v1682
        %v1914 = vunpack.c.l.b16 %v1683
        %v1915 = vunpack.c.l.b16 %v1684
        %v1916 = vpack.c.b16 %v1901, %v1900
        %v1917 = vpack.c.b16 %v1903, %v1902
        %v1918 = vpack.c.b16 %v1905, %v1904
        %v1919 = vpack.c.b16 %v1907, %v1906
        %v1920 = vpack.c.b16 %v1909, %v1908
        %v1921 = vpack.c.b16 %v1911, %v1910
        %v1922 = vpack.c.b16 %v1913, %v1912
        %v1923 = vpack.c.b16 %v1915, %v1914
        %1932 = vmatpush.bf16.msra.mxu0 %v1923
        %1933 = vmatpush.bf16.msra.mxu0 %v1922
        %1934 = vmatpush.bf16.msra.mxu0 %v1921
        %1935 = vmatpush.bf16.msra.mxu0 %v1920
        %1936 = vmatpush.bf16.msra.mxu0 %v1919
        %1937 = vmatpush.bf16.msra.mxu0 %v1918
        %1938 = vmatpush.bf16.msra.mxu0 %v1917
        %1939 = vmatpush.bf16.msra.mxu0 %v1916
        %1940 = vmatmul.bf16.gmra.mxu0 %v968
        %v1941 = vpop.f32.mrf.mxu0
        %v1942 = vadd.f32 %v1696, %v1941
        %v1943 = vpop.f32.mrf.mxu0
        %1944 = vdwg.mxu0
        %v1945 = vpack.c.bf16 %v1293, %v1293
        %v1946 = vpack.c.bf16 %v1294, %v1294
        %v1947 = vpack.c.bf16 %v1295, %v1295
        %v1948 = vpack.c.bf16 %v1296, %v1296
        %v1949 = vpack.c.bf16 %v1435, %v1435
        %v1950 = vpack.c.bf16 %v1496, %v1496
        %v1951 = vpack.c.bf16 %v1557, %v1557
        %v1952 = vpack.c.bf16 %v1618, %v1618
        %v1953 = vld [vmem:[%s858] sm:$0x1]
        %v1955 = vperm.slane %v1953, 0
        %vm1957 = vcmask 261120
        %v1959 = vsel %vm1957, %v1945, 0
        %v1962 = vsel %vm1957, %v1949, 0
        %1964 = vmatpush.bf16.xpose.msra.mxu0 0
        %1965 = vmatpush.bf16.xpose.msra.mxu0 0
        %1966 = vmatpush.bf16.xpose.msra.mxu0 0
        %1967 = vmatpush.bf16.xpose.msra.mxu0 0
        %1968 = vmatpush.bf16.xpose.msra.mxu0 0
        %1969 = vmatpush.bf16.xpose.msra.mxu0 0
        %1970 = vmatpush.bf16.xpose.msra.mxu0 0
        %1971 = vmatpush.bf16.xpose.msra.mxu0 %v1962
        %1972 = vmatmul.bf16.gmra.mxu0 %v1959
        %v1973 = vpop.f32.mrf.mxu0
        %v1974 = vadd.f32 %v1955, %v1973
        %v1975 = vpop.f32.mrf.mxu0
        %1976 = vdwg.mxu0
        %v1978 = vsel %vm1957, %v1946, 0
        %v1981 = vsel %vm1957, %v1950, 0
        %1983 = vmatpush.bf16.xpose.msra.mxu0 0
        %1984 = vmatpush.bf16.xpose.msra.mxu0 0
        %1985 = vmatpush.bf16.xpose.msra.mxu0 0
        %1986 = vmatpush.bf16.xpose.msra.mxu0 0
        %1987 = vmatpush.bf16.xpose.msra.mxu0 0
        %1988 = vmatpush.bf16.xpose.msra.mxu0 0
        %1989 = vmatpush.bf16.xpose.msra.mxu0 0
        %1990 = vmatpush.bf16.xpose.msra.mxu0 %v1981
        %1991 = vmatmul.bf16.gmra.mxu0 %v1978
        %v1992 = vpop.f32.mrf.mxu0
        %v1993 = vadd.f32 %v1955, %v1992
        %v1994 = vpop.f32.mrf.mxu0
        %1995 = vdwg.mxu0
        %v1997 = vsel %vm1957, %v1947, 0
        %v2000 = vsel %vm1957, %v1951, 0
        %2002 = vmatpush.bf16.xpose.msra.mxu0 0
        %2003 = vmatpush.bf16.xpose.msra.mxu0 0
        %2004 = vmatpush.bf16.xpose.msra.mxu0 0
        %2005 = vmatpush.bf16.xpose.msra.mxu0 0
        %2006 = vmatpush.bf16.xpose.msra.mxu0 0
        %2007 = vmatpush.bf16.xpose.msra.mxu0 0
        %2008 = vmatpush.bf16.xpose.msra.mxu0 0
        %2009 = vmatpush.bf16.xpose.msra.mxu0 %v2000
        %2010 = vmatmul.bf16.gmra.mxu0 %v1997
        %v2011 = vpop.f32.mrf.mxu0
        %v2012 = vadd.f32 %v1955, %v2011
        %v2013 = vpop.f32.mrf.mxu0
        %2014 = vdwg.mxu0
        %v2016 = vsel %vm1957, %v1948, 0
        %v2019 = vsel %vm1957, %v1952, 0
        %2021 = vmatpush.bf16.xpose.msra.mxu0 0
        %2022 = vmatpush.bf16.xpose.msra.mxu0 0
        %2023 = vmatpush.bf16.xpose.msra.mxu0 0
        %2024 = vmatpush.bf16.xpose.msra.mxu0 0
        %2025 = vmatpush.bf16.xpose.msra.mxu0 0
        %2026 = vmatpush.bf16.xpose.msra.mxu0 0
        %2027 = vmatpush.bf16.xpose.msra.mxu0 0
        %2028 = vmatpush.bf16.xpose.msra.mxu0 %v2019
        %2029 = vmatmul.bf16.gmra.mxu0 %v2016
        %v2030 = vpop.f32.mrf.mxu0
        %v2031 = vadd.f32 %v1955, %v2030
        %v2032 = vpop.f32.mrf.mxu0
        %2033 = vdwg.mxu0
        %vm2034 = vcmask 64512
        %v2035 = vsel %vm2034, %v1974, -inf
        %2036 = vmax.xlane.f32.xlu0 %v2035
        %v2037 = vpop.xlane.xlu0 %2036
        %v2038 = vsel %vm2034, %v1993, -inf
        %2039 = vmax.xlane.f32.xlu0 %v2038
        %v2040 = vpop.xlane.xlu0 %2039
        %v2041 = vsel %vm2034, %v2012, -inf
        %2042 = vmax.xlane.f32.xlu0 %v2041
        %v2043 = vpop.xlane.xlu0 %2042
        %v2044 = vsel %vm2034, %v2031, -inf
        %2045 = vmax.xlane.f32.xlu0 %v2044
        %v2046 = vpop.xlane.xlu0 %2045
        %v2047 = vsub.f32 %v1974, %v2037
        %v2048 = vsub.f32 %v1993, %v2040
        %v2049 = vsub.f32 %v2012, %v2043
        %v2050 = vsub.f32 %v2031, %v2046
        %v2051 = vmul.f32 %v2047, 1.442695
        %v2052 = vpow.pop %v2051
        %v2053 = vmul.f32 %v2048, 1.442695
        %v2054 = vpow.pop %v2053
        %v2055 = vmul.f32 %v2049, 1.442695
        %v2056 = vpow.pop %v2055
        %v2057 = vmul.f32 %v2050, 1.442695
        %v2058 = vpow.pop %v2057
        %v2059 = vsel %vm2034, %v2052, 0.0
        %2060 = vadd.xlane.f32.xlu0 %v2059
        %v2061 = vpop.xlane.xlu0 %2060
        %v2062 = vsel %vm2034, %v2054, 0.0
        %2063 = vadd.xlane.f32.xlu0 %v2062
        %v2064 = vpop.xlane.xlu0 %2063
        %v2065 = vsel %vm2034, %v2056, 0.0
        %2066 = vadd.xlane.f32.xlu0 %v2065
        %v2067 = vpop.xlane.xlu0 %2066
        %v2068 = vsel %vm2034, %v2058, 0.0
        %2069 = vadd.xlane.f32.xlu0 %v2068
        %v2070 = vpop.xlane.xlu0 %2069
        %v2071 = vrcp.pop %v2061
        %v2072 = vrcp.pop %v2064
        %v2073 = vrcp.pop %v2067
        %v2074 = vrcp.pop %v2070
        %v2075 = vmul.f32 %v2052, %v2071
        %v2076 = vmul.f32 %v2054, %v2072
        %v2077 = vmul.f32 %v2056, %v2073
        %v2078 = vmul.f32 %v2058, %v2074
        %v2079 = vpack.c.bf16 %v2075, %v2075
        %v2080 = vpack.c.bf16 %v2076, %v2076
        %v2081 = vpack.c.bf16 %v2077, %v2077
        %v2082 = vpack.c.bf16 %v2078, %v2078
        %v2083 = vpack.c.bf16 %v1759, %v1759
        %v2084 = vpack.c.bf16 %v1820, %v1820
        %v2085 = vpack.c.bf16 %v1881, %v1881
        %v2086 = vpack.c.bf16 %v1942, %v1942
        %v2088 = vsel %vm2034, %v2079, 0
        %vm2090 = vcmask 1043456
        %v2092 = vsel %vm2090, %v2083, 0
        %2094 = vmatpush.bf16.msra.mxu0 0
        %2095 = vmatpush.bf16.msra.mxu0 0
        %2096 = vmatpush.bf16.msra.mxu0 0
        %2097 = vmatpush.bf16.msra.mxu0 0
        %2098 = vmatpush.bf16.msra.mxu0 0
        %2099 = vmatpush.bf16.msra.mxu0 0
        %2100 = vmatpush.bf16.msra.mxu0 0
        %2101 = vmatpush.bf16.msra.mxu0 %v2092
        %2102 = vmatmul.bf16.gmra.mxu0 %v2088
        %v2103 = vpop.f32.mrf.mxu0
        %v2104 = vadd.f32 0.0, %v2103
        %v2105 = vpop.f32.mrf.mxu0
        %2106 = vdwg.mxu0
        %v2108 = vsel %vm2034, %v2080, 0
        %v2111 = vsel %vm2090, %v2084, 0
        %2113 = vmatpush.bf16.msra.mxu0 0
        %2114 = vmatpush.bf16.msra.mxu0 0
        %2115 = vmatpush.bf16.msra.mxu0 0
        %2116 = vmatpush.bf16.msra.mxu0 0
        %2117 = vmatpush.bf16.msra.mxu0 0
        %2118 = vmatpush.bf16.msra.mxu0 0
        %2119 = vmatpush.bf16.msra.mxu0 0
        %2120 = vmatpush.bf16.msra.mxu0 %v2111
        %2121 = vmatmul.bf16.gmra.mxu0 %v2108
        %v2122 = vpop.f32.mrf.mxu0
        %v2123 = vadd.f32 0.0, %v2122
        %v2124 = vpop.f32.mrf.mxu0
        %2125 = vdwg.mxu0
        %v2127 = vsel %vm2034, %v2081, 0
        %v2130 = vsel %vm2090, %v2085, 0
        %2132 = vmatpush.bf16.msra.mxu0 0
        %2133 = vmatpush.bf16.msra.mxu0 0
        %2134 = vmatpush.bf16.msra.mxu0 0
        %2135 = vmatpush.bf16.msra.mxu0 0
        %2136 = vmatpush.bf16.msra.mxu0 0
        %2137 = vmatpush.bf16.msra.mxu0 0
        %2138 = vmatpush.bf16.msra.mxu0 0
        %2139 = vmatpush.bf16.msra.mxu0 %v2130
        %2140 = vmatmul.bf16.gmra.mxu0 %v2127
        %v2141 = vpop.f32.mrf.mxu0
        %v2142 = vadd.f32 0.0, %v2141
        %v2143 = vpop.f32.mrf.mxu0
        %2144 = vdwg.mxu0
        %v2146 = vsel %vm2034, %v2082, 0
        %v2149 = vsel %vm2090, %v2086, 0
        %2151 = vmatpush.bf16.msra.mxu0 0
        %2152 = vmatpush.bf16.msra.mxu0 0
        %2153 = vmatpush.bf16.msra.mxu0 0
        %2154 = vmatpush.bf16.msra.mxu0 0
        %2155 = vmatpush.bf16.msra.mxu0 0
        %2156 = vmatpush.bf16.msra.mxu0 0
        %2157 = vmatpush.bf16.msra.mxu0 0
        %2158 = vmatpush.bf16.msra.mxu0 %v2149
        %2159 = vmatmul.bf16.gmra.mxu0 %v2146
        %v2160 = vpop.f32.mrf.mxu0
        %v2161 = vadd.f32 0.0, %v2160
        %v2162 = vpop.f32.mrf.mxu0
        %2163 = vdwg.mxu0
        %v2164 = vpack.c.bf16 %v2104, %v2104
        %v2165 = vpack.c.bf16 %v2123, %v2123
        %v2166 = vpack.c.bf16 %v2142, %v2142
        %v2167 = vpack.c.bf16 %v2161, %v2161
        %v2168 = vld [vmem:[%s890] sm:$0xf]
        %v2169 = vld [vmem:[%s890 + $0x4] sm:$0xf]
        %v2170 = vld [vmem:[%s890 + $0x8] sm:$0xf]
        %v2171 = vld [vmem:[%s890 + $0xc] sm:$0xf]
        %v2172 = vld [vmem:[%s890 + $0x10] sm:$0xf]
        %v2173 = vld [vmem:[%s890 + $0x14] sm:$0xf]
        %v2174 = vld [vmem:[%s890 + $0x18] sm:$0xf]
        %v2175 = vld [vmem:[%s890 + $0x1c] sm:$0xf]
        %v2176 = vld [vmem:[%s890 + $0x20] sm:$0xf]
        %v2177 = vld [vmem:[%s890 + $0x24] sm:$0xf]
        %v2178 = vld [vmem:[%s890 + $0x28] sm:$0xf]
        %v2179 = vld [vmem:[%s890 + $0x2c] sm:$0xf]
        %v2180 = vld [vmem:[%s890 + $0x30] sm:$0xf]
        %v2181 = vld [vmem:[%s890 + $0x34] sm:$0xf]
        %v2182 = vld [vmem:[%s890 + $0x38] sm:$0xf]
        %v2183 = vld [vmem:[%s890 + $0x3c] sm:$0xf]
        %v2188 = vunpack.c.l.b16 %v2168
        %v2189 = vunpack.c.l.b16 %v2169
        %v2190 = vunpack.c.l.b16 %v2170
        %v2191 = vunpack.c.l.b16 %v2171
        %v2192 = vpack.c.b16 %v2189, %v2188
        %v2193 = vpack.c.b16 %v2191, %v2190
        %v2197 = vsel %vm1957, %v2164, 0
        %2199 = vmatpush.bf16.msra.mxu0 0
        %2200 = vmatpush.bf16.msra.mxu0 0
        %2201 = vmatpush.bf16.msra.mxu0 0
        %2202 = vmatpush.bf16.msra.mxu0 0
        %2203 = vmatpush.bf16.msra.mxu0 0
        %2204 = vmatpush.bf16.msra.mxu0 0
        %2205 = vmatpush.bf16.msra.mxu0 %v2193
        %2206 = vmatpush.bf16.msra.mxu0 %v2192
        %2207 = vmatmul.bf16.gmra.mxu0 %v2197
        %v2208 = vpop.f32.mrf.mxu0
        %v2209 = vadd.f32 0.0, %v2208
        %v2210 = vpop.f32.mrf.mxu0
        %2211 = vdwg.mxu0
        %v2216 = vunpack.c.l.b16 %v2172
        %v2217 = vunpack.c.l.b16 %v2173
        %v2218 = vunpack.c.l.b16 %v2174
        %v2219 = vunpack.c.l.b16 %v2175
        %v2220 = vpack.c.b16 %v2217, %v2216
        %v2221 = vpack.c.b16 %v2219, %v2218
        %v2225 = vsel %vm1957, %v2165, 0
        %2227 = vmatpush.bf16.msra.mxu0 0
        %2228 = vmatpush.bf16.msra.mxu0 0
        %2229 = vmatpush.bf16.msra.mxu0 0
        %2230 = vmatpush.bf16.msra.mxu0 0
        %2231 = vmatpush.bf16.msra.mxu0 0
        %2232 = vmatpush.bf16.msra.mxu0 0
        %2233 = vmatpush.bf16.msra.mxu0 %v2221
        %2234 = vmatpush.bf16.msra.mxu0 %v2220
        %2235 = vmatmul.bf16.gmra.mxu0 %v2225
        %v2236 = vpop.f32.mrf.mxu0
        %v2237 = vadd.f32 0.0, %v2236
        %v2238 = vpop.f32.mrf.mxu0
        %2239 = vdwg.mxu0
        %v2244 = vunpack.c.l.b16 %v2176
        %v2245 = vunpack.c.l.b16 %v2177
        %v2246 = vunpack.c.l.b16 %v2178
        %v2247 = vunpack.c.l.b16 %v2179
        %v2248 = vpack.c.b16 %v2245, %v2244
        %v2249 = vpack.c.b16 %v2247, %v2246
        %v2253 = vsel %vm1957, %v2166, 0
        %2255 = vmatpush.bf16.msra.mxu0 0
        %2256 = vmatpush.bf16.msra.mxu0 0
        %2257 = vmatpush.bf16.msra.mxu0 0
        %2258 = vmatpush.bf16.msra.mxu0 0
        %2259 = vmatpush.bf16.msra.mxu0 0
        %2260 = vmatpush.bf16.msra.mxu0 0
        %2261 = vmatpush.bf16.msra.mxu0 %v2249
        %2262 = vmatpush.bf16.msra.mxu0 %v2248
        %2263 = vmatmul.bf16.gmra.mxu0 %v2253
        %v2264 = vpop.f32.mrf.mxu0
        %v2265 = vadd.f32 0.0, %v2264
        %v2266 = vpop.f32.mrf.mxu0
        %2267 = vdwg.mxu0
        %v2272 = vunpack.c.l.b16 %v2180
        %v2273 = vunpack.c.l.b16 %v2181
        %v2274 = vunpack.c.l.b16 %v2182
        %v2275 = vunpack.c.l.b16 %v2183
        %v2276 = vpack.c.b16 %v2273, %v2272
        %v2277 = vpack.c.b16 %v2275, %v2274
        %v2281 = vsel %vm1957, %v2167, 0
        %2283 = vmatpush.bf16.msra.mxu0 0
        %2284 = vmatpush.bf16.msra.mxu0 0
        %2285 = vmatpush.bf16.msra.mxu0 0
        %2286 = vmatpush.bf16.msra.mxu0 0
        %2287 = vmatpush.bf16.msra.mxu0 0
        %2288 = vmatpush.bf16.msra.mxu0 0
        %2289 = vmatpush.bf16.msra.mxu0 %v2277
        %2290 = vmatpush.bf16.msra.mxu0 %v2276
        %2291 = vmatmul.bf16.gmra.mxu0 %v2281
        %v2292 = vpop.f32.mrf.mxu0
        %v2293 = vadd.f32 0.0, %v2292
        %v2294 = vpop.f32.mrf.mxu0
        %2295 = vdwg.mxu0
        %v2296 = vadd.f32 %v2209, %v2237
        %v2297 = vadd.f32 %v2296, %v2265
        %v2298 = vadd.f32 %v2297, %v2293
        %v2299 = vld [vmem:[%s893] sm:$0x1]
        %v2301 = vperm.slane %v2299, 0
        %v2303 = vadd.f32 %v2298, %v2301
        %v2304 = vadd.f32 %v967, %v2303
        %v2305 = vld [vmem:[%s896] sm:$0x1]
        %v2306 = vld [vmem:[%s899] sm:$0x1]
        %2307 = vadd.xlane.f32.xlu0 %v2304
        %v2308 = vpop.xlane.xlu0 %2307
        %v2309 = vrcp.pop 128.0
        %v2310 = vmul.f32 128.0, %v2309
        %v2311 = vsub.f32 1.0, %v2310
        %v2312 = vmul.f32 %v2309, %v2311
        %v2313 = vadd.f32 %v2309, %v2312
        %vm2314 = vweird.f32 %v2309
        %v2315 = vsel %vm2314, %v2309, %v2313
        %v2316 = vmul.f32 %v2308, %v2315
        %v2317 = vsub.f32 %v2304, %v2316
        %v2318 = vmul.f32 %v2317, %v2317
        %2319 = vadd.xlane.f32.xlu0 %v2318
        %v2320 = vpop.xlane.xlu0 %2319
        %v2321 = vmul.f32 %v2320, %v2315
        %v2322 = vadd.f32 %v2321, 1e-12
        %v2323 = vrsqrt.pop %v2322
        %v2324 = vmul.f32 %v2323, %v2322
        %v2325 = vmul.f32 %v2324, %v2323
        %v2326 = vmul.f32 0.5, %v2325
        %v2327 = vsub.f32 1.5, %v2326
        %v2328 = vmul.f32 %v2323, %v2327
        %vm2329 = vweird.f32 %v2322
        %vm2330 = vweird.f32 %v2323
        %vm2331 = vmor %vm2329, %vm2330
        %v2332 = vsel %vm2331, %v2323, %v2328
        %v2333 = vmul.f32 %v2317, %v2332
        %v2335 = vperm.slane %v2305, 0
        %v2337 = vmul.f32 %v2333, %v2335
        %v2339 = vperm.slane %v2306, 0
        %v2341 = vadd.f32 %v2337, %v2339
        %v2342 = vpack.c.bf16 %v2341, %v2341
        %v2343 = vld [vmem:[%s904] sm:$0xff]
        %v2344 = vld [vmem:[%s904 + $0x8] sm:$0xff]
        %v2345 = vld [vmem:[%s904 + $0x10] sm:$0xff]
        %v2346 = vld [vmem:[%s904 + $0x18] sm:$0xff]
        %v2347 = vld [vmem:[%s904 + $0x20] sm:$0xff]
        %v2348 = vld [vmem:[%s904 + $0x28] sm:$0xff]
        %v2349 = vld [vmem:[%s904 + $0x30] sm:$0xff]
        %v2350 = vld [vmem:[%s904 + $0x38] sm:$0xff]
        %v2351 = vld [vmem:[%s904 + $0x40] sm:$0xff]
        %v2352 = vld [vmem:[%s904 + $0x48] sm:$0xff]
        %v2353 = vld [vmem:[%s904 + $0x50] sm:$0xff]
        %v2354 = vld [vmem:[%s904 + $0x58] sm:$0xff]
        %v2355 = vld [vmem:[%s904 + $0x60] sm:$0xff]
        %v2356 = vld [vmem:[%s904 + $0x68] sm:$0xff]
        %v2357 = vld [vmem:[%s904 + $0x70] sm:$0xff]
        %v2358 = vld [vmem:[%s904 + $0x78] sm:$0xff]
        %v2359 = vld [vmem:[%s904 + $0x80] sm:$0xff]
        %v2360 = vld [vmem:[%s904 + $0x88] sm:$0xff]
        %v2361 = vld [vmem:[%s904 + $0x90] sm:$0xff]
        %v2362 = vld [vmem:[%s904 + $0x98] sm:$0xff]
        %v2363 = vld [vmem:[%s904 + $0xa0] sm:$0xff]
        %v2364 = vld [vmem:[%s904 + $0xa8] sm:$0xff]
        %v2365 = vld [vmem:[%s904 + $0xb0] sm:$0xff]
        %v2366 = vld [vmem:[%s904 + $0xb8] sm:$0xff]
        %v2367 = vld [vmem:[%s904 + $0xc0] sm:$0xff]
        %v2368 = vld [vmem:[%s904 + $0xc8] sm:$0xff]
        %v2369 = vld [vmem:[%s904 + $0xd0] sm:$0xff]
        %v2370 = vld [vmem:[%s904 + $0xd8] sm:$0xff]
        %v2371 = vld [vmem:[%s904 + $0xe0] sm:$0xff]
        %v2372 = vld [vmem:[%s904 + $0xe8] sm:$0xff]
        %v2373 = vld [vmem:[%s904 + $0xf0] sm:$0xff]
        %v2374 = vld [vmem:[%s904 + $0xf8] sm:$0xff]
        %v2375 = vld [vmem:[%s908] sm:$0xf]
        %v2377 = vperm.slane %v2375, 0
        %v2378 = vperm.slane %v2375, 1
        %v2379 = vperm.slane %v2375, 2
        %v2380 = vperm.slane %v2375, 3
        %v2417 = vunpack.c.l.b16 %v2343
        %v2418 = vunpack.c.h.b16 %v2343
        %v2419 = vunpack.c.l.b16 %v2344
        %v2420 = vunpack.c.h.b16 %v2344
        %v2421 = vunpack.c.l.b16 %v2345
        %v2422 = vunpack.c.h.b16 %v2345
        %v2423 = vunpack.c.l.b16 %v2346
        %v2424 = vunpack.c.h.b16 %v2346
        %v2425 = vunpack.c.l.b16 %v2347
        %v2426 = vunpack.c.h.b16 %v2347
        %v2427 = vunpack.c.l.b16 %v2348
        %v2428 = vunpack.c.h.b16 %v2348
        %v2429 = vunpack.c.l.b16 %v2349
        %v2430 = vunpack.c.h.b16 %v2349
        %v2431 = vunpack.c.l.b16 %v2350
        %v2432 = vunpack.c.h.b16 %v2350
        %v2433 = vunpack.c.l.b16 %v2351
        %v2434 = vunpack.c.h.b16 %v2351
        %v2435 = vunpack.c.l.b16 %v2352
        %v2436 = vunpack.c.h.b16 %v2352
        %v2437 = vunpack.c.l.b16 %v2353
        %v2438 = vunpack.c.h.b16 %v2353
        %v2439 = vunpack.c.l.b16 %v2354
        %v2440 = vunpack.c.h.b16 %v2354
        %v2441 = vunpack.c.l.b16 %v2355
        %v2442 = vunpack.c.h.b16 %v2355
        %v2443 = vunpack.c.l.b16 %v2356
        %v2444 = vunpack.c.h.b16 %v2356
        %v2445 = vunpack.c.l.b16 %v2357
        %v2446 = vunpack.c.h.b16 %v2357
        %v2447 = vunpack.c.l.b16 %v2358
        %v2448 = vunpack.c.h.b16 %v2358
        %v2449 = vunpack.c.l.b16 %v2359
        %v2450 = vunpack.c.h.b16 %v2359
        %v2451 = vunpack.c.l.b16 %v2360
        %v2452 = vunpack.c.h.b16 %v2360
        %v2453 = vunpack.c.l.b16 %v2361
        %v2454 = vunpack.c.h.b16 %v2361
        %v2455 = vunpack.c.l.b16 %v2362
        %v2456 = vunpack.c.h.b16 %v2362
        %v2457 = vunpack.c.l.b16 %v2363
        %v2458 = vunpack.c.h.b16 %v2363
        %v2459 = vunpack.c.l.b16 %v2364
        %v2460 = vunpack.c.h.b16 %v2364
        %v2461 = vunpack.c.l.b16 %v2365
        %v2462 = vunpack.c.h.b16 %v2365
        %v2463 = vunpack.c.l.b16 %v2366
        %v2464 = vunpack.c.h.b16 %v2366
        %v2465 = vunpack.c.l.b16 %v2367
        %v2466 = vunpack.c.h.b16 %v2367
        %v2467 = vunpack.c.l.b16 %v2368
        %v2468 = vunpack.c.h.b16 %v2368
        %v2469 = vunpack.c.l.b16 %v2369
        %v2470 = vunpack.c.h.b16 %v2369
        %v2471 = vunpack.c.l.b16 %v2370
        %v2472 = vunpack.c.h.b16 %v2370
        %v2473 = vunpack.c.l.b16 %v2371
        %v2474 = vunpack.c.h.b16 %v2371
        %v2475 = vunpack.c.l.b16 %v2372
        %v2476 = vunpack.c.h.b16 %v2372
        %v2477 = vunpack.c.l.b16 %v2373
        %v2478 = vunpack.c.h.b16 %v2373
        %v2479 = vunpack.c.l.b16 %v2374
        %v2480 = vunpack.c.h.b16 %v2374
        %v2481 = vpack.c.b16 %v2421, %v2417
        %v2482 = vpack.c.b16 %v2422, %v2418
        %v2483 = vpack.c.b16 %v2423, %v2419
        %v2484 = vpack.c.b16 %v2424, %v2420
        %v2485 = vpack.c.b16 %v2429, %v2425
        %v2486 = vpack.c.b16 %v2430, %v2426
        %v2487 = vpack.c.b16 %v2431, %v2427
        %v2488 = vpack.c.b16 %v2432, %v2428
        %v2489 = vpack.c.b16 %v2437, %v2433
        %v2490 = vpack.c.b16 %v2438, %v2434
        %v2491 = vpack.c.b16 %v2439, %v2435
        %v2492 = vpack.c.b16 %v2440, %v2436
        %v2493 = vpack.c.b16 %v2445, %v2441
        %v2494 = vpack.c.b16 %v2446, %v2442
        %v2495 = vpack.c.b16 %v2447, %v2443
        %v2496 = vpack.c.b16 %v2448, %v2444
        %v2497 = vpack.c.b16 %v2453, %v2449
        %v2498 = vpack.c.b16 %v2454, %v2450
        %v2499 = vpack.c.b16 %v2455, %v2451
        %v2500 = vpack.c.b16 %v2456, %v2452
        %v2501 = vpack.c.b16 %v2461, %v2457
        %v2502 = vpack.c.b16 %v2462, %v2458
        %v2503 = vpack.c.b16 %v2463, %v2459
        %v2504 = vpack.c.b16 %v2464, %v2460
        %v2505 = vpack.c.b16 %v2469, %v2465
        %v2506 = vpack.c.b16 %v2470, %v2466
        %v2507 = vpack.c.b16 %v2471, %v2467
        %v2508 = vpack.c.b16 %v2472, %v2468
        %v2509 = vpack.c.b16 %v2477, %v2473
        %v2510 = vpack.c.b16 %v2478, %v2474
        %v2511 = vpack.c.b16 %v2479, %v2475
        %v2512 = vpack.c.b16 %v2480, %v2476
        %2545 = vmatpush.bf16.msra.mxu0 %v2509
        %2546 = vmatpush.bf16.msra.mxu0 %v2505
        %2547 = vmatpush.bf16.msra.mxu0 %v2501
        %2548 = vmatpush.bf16.msra.mxu0 %v2497
        %2549 = vmatpush.bf16.msra.mxu0 %v2493
        %2550 = vmatpush.bf16.msra.mxu0 %v2489
        %2551 = vmatpush.bf16.msra.mxu0 %v2485
        %2552 = vmatpush.bf16.msra.mxu0 %v2481
        %2553 = vmatmul.bf16.gmra.mxu0 %v2342
        %v2554 = vpop.f32.mrf.mxu0
        %v2555 = vadd.f32 %v2377, %v2554
        %v2556 = vpop.f32.mrf.mxu0
        %2557 = vdwg.mxu0
        %2558 = vmatpush.bf16.msra.mxu0 %v2510
        %2559 = vmatpush.bf16.msra.mxu0 %v2506
        %2560 = vmatpush.bf16.msra.mxu0 %v2502
        %2561 = vmatpush.bf16.msra.mxu0 %v2498
        %2562 = vmatpush.bf16.msra.mxu0 %v2494
        %2563 = vmatpush.bf16.msra.mxu0 %v2490
        %2564 = vmatpush.bf16.msra.mxu0 %v2486
        %2565 = vmatpush.bf16.msra.mxu0 %v2482
        %2566 = vmatmul.bf16.gmra.mxu0 %v2342
        %v2567 = vpop.f32.mrf.mxu0
        %v2568 = vadd.f32 %v2378, %v2567
        %v2569 = vpop.f32.mrf.mxu0
        %2570 = vdwg.mxu0
        %2571 = vmatpush.bf16.msra.mxu0 %v2511
        %2572 = vmatpush.bf16.msra.mxu0 %v2507
        %2573 = vmatpush.bf16.msra.mxu0 %v2503
        %2574 = vmatpush.bf16.msra.mxu0 %v2499
        %2575 = vmatpush.bf16.msra.mxu0 %v2495
        %2576 = vmatpush.bf16.msra.mxu0 %v2491
        %2577 = vmatpush.bf16.msra.mxu0 %v2487
        %2578 = vmatpush.bf16.msra.mxu0 %v2483
        %2579 = vmatmul.bf16.gmra.mxu0 %v2342
        %v2580 = vpop.f32.mrf.mxu0
        %v2581 = vadd.f32 %v2379, %v2580
        %v2582 = vpop.f32.mrf.mxu0
        %2583 = vdwg.mxu0
        %2584 = vmatpush.bf16.msra.mxu0 %v2512
        %2585 = vmatpush.bf16.msra.mxu0 %v2508
        %2586 = vmatpush.bf16.msra.mxu0 %v2504
        %2587 = vmatpush.bf16.msra.mxu0 %v2500
        %2588 = vmatpush.bf16.msra.mxu0 %v2496
        %2589 = vmatpush.bf16.msra.mxu0 %v2492
        %2590 = vmatpush.bf16.msra.mxu0 %v2488
        %2591 = vmatpush.bf16.msra.mxu0 %v2484
        %2592 = vmatmul.bf16.gmra.mxu0 %v2342
        %v2593 = vpop.f32.mrf.mxu0
        %v2594 = vadd.f32 %v2380, %v2593
        %v2595 = vpop.f32.mrf.mxu0
        %2596 = vdwg.mxu0
        %v2597 = vmul.f32 %v2555, %v2555
        %v2598 = vmul.f32 %v2568, %v2568
        %v2599 = vmul.f32 %v2581, %v2581
        %v2600 = vmul.f32 %v2594, %v2594
        %v2601 = vmul.f32 %v2555, %v2597
        %v2602 = vmul.f32 %v2568, %v2598
        %v2603 = vmul.f32 %v2581, %v2599
        %v2604 = vmul.f32 %v2594, %v2600
        %v2605 = vmul.f32 %v2601, 0.044715
        %v2606 = vmul.f32 %v2602, 0.044715
        %v2607 = vmul.f32 %v2603, 0.044715
        %v2608 = vmul.f32 %v2604, 0.044715
        %v2609 = vadd.f32 %v2555, %v2605
        %v2610 = vadd.f32 %v2568, %v2606
        %v2611 = vadd.f32 %v2581, %v2607
        %v2612 = vadd.f32 %v2594, %v2608
        %v2613 = vmul.f32 %v2609, 0.7978846
        %v2614 = vmul.f32 %v2610, 0.7978846
        %v2615 = vmul.f32 %v2611, 0.7978846
        %v2616 = vmul.f32 %v2612, 0.7978846
        %v2617 = vtanh.pop %v2613
        %v2618 = vtanh.pop %v2614
        %v2619 = vtanh.pop %v2615
        %v2620 = vtanh.pop %v2616
        %v2621 = vadd.f32 %v2617, 1.0
        %v2622 = vadd.f32 %v2618, 1.0
        %v2623 = vadd.f32 %v2619, 1.0
        %v2624 = vadd.f32 %v2620, 1.0
        %v2625 = vmul.f32 %v2621, 0.5
        %v2626 = vmul.f32 %v2622, 0.5
        %v2627 = vmul.f32 %v2623, 0.5
        %v2628 = vmul.f32 %v2624, 0.5
        %v2629 = vmul.f32 %v2555, %v2625
        %v2630 = vmul.f32 %v2568, %v2626
        %v2631 = vmul.f32 %v2581, %v2627
        %v2632 = vmul.f32 %v2594, %v2628
        %v2633 = vpack.c.bf16 %v2629, %v2629
        %v2634 = vpack.c.bf16 %v2630, %v2630
        %v2635 = vpack.c.bf16 %v2631, %v2631
        %v2636 = vpack.c.bf16 %v2632, %v2632
        %v2637 = vld [vmem:[%s913] sm:$0xf]
        %v2638 = vld [vmem:[%s913 + $0x4] sm:$0xf]
        %v2639 = vld [vmem:[%s913 + $0x8] sm:$0xf]
        %v2640 = vld [vmem:[%s913 + $0xc] sm:$0xf]
        %v2641 = vld [vmem:[%s913 + $0x10] sm:$0xf]
        %v2642 = vld [vmem:[%s913 + $0x14] sm:$0xf]
        %v2643 = vld [vmem:[%s913 + $0x18] sm:$0xf]
        %v2644 = vld [vmem:[%s913 + $0x1c] sm:$0xf]
        %v2645 = vld [vmem:[%s913 + $0x20] sm:$0xf]
        %v2646 = vld [vmem:[%s913 + $0x24] sm:$0xf]
        %v2647 = vld [vmem:[%s913 + $0x28] sm:$0xf]
        %v2648 = vld [vmem:[%s913 + $0x2c] sm:$0xf]
        %v2649 = vld [vmem:[%s913 + $0x30] sm:$0xf]
        %v2650 = vld [vmem:[%s913 + $0x34] sm:$0xf]
        %v2651 = vld [vmem:[%s913 + $0x38] sm:$0xf]
        %v2652 = vld [vmem:[%s913 + $0x3c] sm:$0xf]
        %v2653 = vld [vmem:[%s913 + $0x40] sm:$0xf]
        %v2654 = vld [vmem:[%s913 + $0x44] sm:$0xf]
        %v2655 = vld [vmem:[%s913 + $0x48] sm:$0xf]
        %v2656 = vld [vmem:[%s913 + $0x4c] sm:$0xf]
        %v2657 = vld [vmem:[%s913 + $0x50] sm:$0xf]
        %v2658 = vld [vmem:[%s913 + $0x54] sm:$0xf]
        %v2659 = vld [vmem:[%s913 + $0x58] sm:$0xf]
        %v2660 = vld [vmem:[%s913 + $0x5c] sm:$0xf]
        %v2661 = vld [vmem:[%s913 + $0x60] sm:$0xf]
        %v2662 = vld [vmem:[%s913 + $0x64] sm:$0xf]
        %v2663 = vld [vmem:[%s913 + $0x68] sm:$0xf]
        %v2664 = vld [vmem:[%s913 + $0x6c] sm:$0xf]
        %v2665 = vld [vmem:[%s913 + $0x70] sm:$0xf]
        %v2666 = vld [vmem:[%s913 + $0x74] sm:$0xf]
        %v2667 = vld [vmem:[%s913 + $0x78] sm:$0xf]
        %v2668 = vld [vmem:[%s913 + $0x7c] sm:$0xf]
        %v2669 = vld [vmem:[%s913 + $0x80] sm:$0xf]
        %v2670 = vld [vmem:[%s913 + $0x84] sm:$0xf]
        %v2671 = vld [vmem:[%s913 + $0x88] sm:$0xf]
        %v2672 = vld [vmem:[%s913 + $0x8c] sm:$0xf]
        %v2673 = vld [vmem:[%s913 + $0x90] sm:$0xf]
        %v2674 = vld [vmem:[%s913 + $0x94] sm:$0xf]
        %v2675 = vld [vmem:[%s913 + $0x98] sm:$0xf]
        %v2676 = vld [vmem:[%s913 + $0x9c] sm:$0xf]
        %v2677 = vld [vmem:[%s913 + $0xa0] sm:$0xf]
        %v2678 = vld [vmem:[%s913 + $0xa4] sm:$0xf]
        %v2679 = vld [vmem:[%s913 + $0xa8] sm:$0xf]
        %v2680 = vld [vmem:[%s913 + $0xac] sm:$0xf]
        %v2681 = vld [vmem:[%s913 + $0xb0] sm:$0xf]
        %v2682 = vld [vmem:[%s913 + $0xb4] sm:$0xf]
        %v2683 = vld [vmem:[%s913 + $0xb8] sm:$0xf]
        %v2684 = vld [vmem:[%s913 + $0xbc] sm:$0xf]
        %v2685 = vld [vmem:[%s913 + $0xc0] sm:$0xf]
        %v2686 = vld [vmem:[%s913 + $0xc4] sm:$0xf]
        %v2687 = vld [vmem:[%s913 + $0xc8] sm:$0xf]
        %v2688 = vld [vmem:[%s913 + $0xcc] sm:$0xf]
        %v2689 = vld [vmem:[%s913 + $0xd0] sm:$0xf]
        %v2690 = vld [vmem:[%s913 + $0xd4] sm:$0xf]
        %v2691 = vld [vmem:[%s913 + $0xd8] sm:$0xf]
        %v2692 = vld [vmem:[%s913 + $0xdc] sm:$0xf]
        %v2693 = vld [vmem:[%s913 + $0xe0] sm:$0xf]
        %v2694 = vld [vmem:[%s913 + $0xe4] sm:$0xf]
        %v2695 = vld [vmem:[%s913 + $0xe8] sm:$0xf]
        %v2696 = vld [vmem:[%s913 + $0xec] sm:$0xf]
        %v2697 = vld [vmem:[%s913 + $0xf0] sm:$0xf]
        %v2698 = vld [vmem:[%s913 + $0xf4] sm:$0xf]
        %v2699 = vld [vmem:[%s913 + $0xf8] sm:$0xf]
        %v2700 = vld [vmem:[%s913 + $0xfc] sm:$0xf]
        %v2701 = vld [vmem:[%s916] sm:$0x1]
        %v2703 = vperm.slane %v2701, 0
        %v2769 = vunpack.c.l.b16 %v2637
        %v2770 = vunpack.c.l.b16 %v2638
        %v2771 = vunpack.c.l.b16 %v2639
        %v2772 = vunpack.c.l.b16 %v2640
        %v2773 = vunpack.c.l.b16 %v2641
        %v2774 = vunpack.c.l.b16 %v2642
        %v2775 = vunpack.c.l.b16 %v2643
        %v2776 = vunpack.c.l.b16 %v2644
        %v2777 = vunpack.c.l.b16 %v2645
        %v2778 = vunpack.c.l.b16 %v2646
        %v2779 = vunpack.c.l.b16 %v2647
        %v2780 = vunpack.c.l.b16 %v2648
        %v2781 = vunpack.c.l.b16 %v2649
        %v2782 = vunpack.c.l.b16 %v2650
        %v2783 = vunpack.c.l.b16 %v2651
        %v2784 = vunpack.c.l.b16 %v2652
        %v2785 = vunpack.c.l.b16 %v2653
        %v2786 = vunpack.c.l.b16 %v2654
        %v2787 = vunpack.c.l.b16 %v2655
        %v2788 = vunpack.c.l.b16 %v2656
        %v2789 = vunpack.c.l.b16 %v2657
        %v2790 = vunpack.c.l.b16 %v2658
        %v2791 = vunpack.c.l.b16 %v2659
        %v2792 = vunpack.c.l.b16 %v2660
        %v2793 = vunpack.c.l.b16 %v2661
        %v2794 = vunpack.c.l.b16 %v2662
        %v2795 = vunpack.c.l.b16 %v2663
        %v2796 = vunpack.c.l.b16 %v2664
        %v2797 = vunpack.c.l.b16 %v2665
        %v2798 = vunpack.c.l.b16 %v2666
        %v2799 = vunpack.c.l.b16 %v2667
        %v2800 = vunpack.c.l.b16 %v2668
        %v2801 = vunpack.c.l.b16 %v2669
        %v2802 = vunpack.c.l.b16 %v2670
        %v2803 = vunpack.c.l.b16 %v2671
        %v2804 = vunpack.c.l.b16 %v2672
        %v2805 = vunpack.c.l.b16 %v2673
        %v2806 = vunpack.c.l.b16 %v2674
        %v2807 = vunpack.c.l.b16 %v2675
        %v2808 = vunpack.c.l.b16 %v2676
        %v2809 = vunpack.c.l.b16 %v2677
        %v2810 = vunpack.c.l.b16 %v2678
        %v2811 = vunpack.c.l.b16 %v2679
        %v2812 = vunpack.c.l.b16 %v2680
        %v2813 = vunpack.c.l.b16 %v2681
        %v2814 = vunpack.c.l.b16 %v2682
        %v2815 = vunpack.c.l.b16 %v2683
        %v2816 = vunpack.c.l.b16 %v2684
        %v2817 = vunpack.c.l.b16 %v2685
        %v2818 = vunpack.c.l.b16 %v2686
        %v2819 = vunpack.c.l.b16 %v2687
        %v2820 = vunpack.c.l.b16 %v2688
        %v2821 = vunpack.c.l.b16 %v2689
        %v2822 = vunpack.c.l.b16 %v2690
        %v2823 = vunpack.c.l.b16 %v2691
        %v2824 = vunpack.c.l.b16 %v2692
        %v2825 = vunpack.c.l.b16 %v2693
        %v2826 = vunpack.c.l.b16 %v2694
        %v2827 = vunpack.c.l.b16 %v2695
        %v2828 = vunpack.c.l.b16 %v2696
        %v2829 = vunpack.c.l.b16 %v2697
        %v2830 = vunpack.c.l.b16 %v2698
        %v2831 = vunpack.c.l.b16 %v2699
        %v2832 = vunpack.c.l.b16 %v2700
        %v2833 = vpack.c.b16 %v2770, %v2769
        %v2834 = vpack.c.b16 %v2772, %v2771
        %v2835 = vpack.c.b16 %v2774, %v2773
        %v2836 = vpack.c.b16 %v2776, %v2775
        %v2837 = vpack.c.b16 %v2778, %v2777
        %v2838 = vpack.c.b16 %v2780, %v2779
        %v2839 = vpack.c.b16 %v2782, %v2781
        %v2840 = vpack.c.b16 %v2784, %v2783
        %v2841 = vpack.c.b16 %v2786, %v2785
        %v2842 = vpack.c.b16 %v2788, %v2787
        %v2843 = vpack.c.b16 %v2790, %v2789
        %v2844 = vpack.c.b16 %v2792, %v2791
        %v2845 = vpack.c.b16 %v2794, %v2793
        %v2846 = vpack.c.b16 %v2796, %v2795
        %v2847 = vpack.c.b16 %v2798, %v2797
        %v2848 = vpack.c.b16 %v2800, %v2799
        %v2849 = vpack.c.b16 %v2802, %v2801
        %v2850 = vpack.c.b16 %v2804, %v2803
        %v2851 = vpack.c.b16 %v2806, %v2805
        %v2852 = vpack.c.b16 %v2808, %v2807
        %v2853 = vpack.c.b16 %v2810, %v2809
        %v2854 = vpack.c.b16 %v2812, %v2811
        %v2855 = vpack.c.b16 %v2814, %v2813
        %v2856 = vpack.c.b16 %v2816, %v2815
        %v2857 = vpack.c.b16 %v2818, %v2817
        %v2858 = vpack.c.b16 %v2820, %v2819
        %v2859 = vpack.c.b16 %v2822, %v2821
        %v2860 = vpack.c.b16 %v2824, %v2823
        %v2861 = vpack.c.b16 %v2826, %v2825
        %v2862 = vpack.c.b16 %v2828, %v2827
        %v2863 = vpack.c.b16 %v2830, %v2829
        %v2864 = vpack.c.b16 %v2832, %v2831
        %2897 = vmatpush.bf16.msra.mxu0 %v2840
        %2898 = vmatpush.bf16.msra.mxu0 %v2839
        %2899 = vmatpush.bf16.msra.mxu0 %v2838
        %2900 = vmatpush.bf16.msra.mxu0 %v2837
        %2901 = vmatpush.bf16.msra.mxu0 %v2836
        %2902 = vmatpush.bf16.msra.mxu0 %v2835
        %2903 = vmatpush.bf16.msra.mxu0 %v2834
        %2904 = vmatpush.bf16.msra.mxu0 %v2833
        %2905 = vmatmul.bf16.gmra.mxu0 %v2633
        %v2906 = vpop.f32.mrf.mxu0
        %v2907 = vadd.f32 %v2703, %v2906
        %v2908 = vpop.f32.mrf.mxu0
        %2909 = vdwg.mxu0
        %2910 = vmatpush.bf16.msra.mxu0 %v2848
        %2911 = vmatpush.bf16.msra.mxu0 %v2847
        %2912 = vmatpush.bf16.msra.mxu0 %v2846
        %2913 = vmatpush.bf16.msra.mxu0 %v2845
        %2914 = vmatpush.bf16.msra.mxu0 %v2844
        %2915 = vmatpush.bf16.msra.mxu0 %v2843
        %2916 = vmatpush.bf16.msra.mxu0 %v2842
        %2917 = vmatpush.bf16.msra.mxu0 %v2841
        %2918 = vmatmul.bf16.gmra.mxu0 %v2634
        %v2919 = vpop.f32.mrf.mxu0
        %v2920 = vadd.f32 %v2907, %v2919
        %v2921 = vpop.f32.mrf.mxu0
        %2922 = vdwg.mxu0
        %2923 = vmatpush.bf16.msra.mxu0 %v2856
        %2924 = vmatpush.bf16.msra.mxu0 %v2855
        %2925 = vmatpush.bf16.msra.mxu0 %v2854
        %2926 = vmatpush.bf16.msra.mxu0 %v2853
        %2927 = vmatpush.bf16.msra.mxu0 %v2852
        %2928 = vmatpush.bf16.msra.mxu0 %v2851
        %2929 = vmatpush.bf16.msra.mxu0 %v2850
        %2930 = vmatpush.bf16.msra.mxu0 %v2849
        %2931 = vmatmul.bf16.gmra.mxu0 %v2635
        %v2932 = vpop.f32.mrf.mxu0
        %v2933 = vadd.f32 %v2920, %v2932
        %v2934 = vpop.f32.mrf.mxu0
        %2935 = vdwg.mxu0
        %2936 = vmatpush.bf16.msra.mxu0 %v2864
        %2937 = vmatpush.bf16.msra.mxu0 %v2863
        %2938 = vmatpush.bf16.msra.mxu0 %v2862
        %2939 = vmatpush.bf16.msra.mxu0 %v2861
        %2940 = vmatpush.bf16.msra.mxu0 %v2860
        %2941 = vmatpush.bf16.msra.mxu0 %v2859
        %2942 = vmatpush.bf16.msra.mxu0 %v2858
        %2943 = vmatpush.bf16.msra.mxu0 %v2857
        %2944 = vmatmul.bf16.gmra.mxu0 %v2636
        %v2945 = vpop.f32.mrf.mxu0
        %v2946 = vadd.f32 %v2933, %v2945
        %v2947 = vpop.f32.mrf.mxu0
        %2948 = vdwg.mxu0
        %v2949 = vadd.f32 %v2341, %v2946
        %v2950 = vld [vmem:[%s919] sm:$0x1]
        %v2951 = vld [vmem:[%s922] sm:$0x1]
        %2952 = vadd.xlane.f32.xlu0 %v2949
        %v2953 = vpop.xlane.xlu0 %2952
        %v2954 = vmul.f32 %v2953, %v2315
        %v2955 = vsub.f32 %v2949, %v2954
        %v2956 = vmul.f32 %v2955, %v2955
        %2957 = vadd.xlane.f32.xlu0 %v2956
        %v2958 = vpop.xlane.xlu0 %2957
        %v2959 = vmul.f32 %v2958, %v2315
        %v2960 = vadd.f32 %v2959, 1e-12
        %v2961 = vrsqrt.pop %v2960
        %v2962 = vmul.f32 %v2961, %v2960
        %v2963 = vmul.f32 %v2962, %v2961
        %v2964 = vmul.f32 0.5, %v2963
        %v2965 = vsub.f32 1.5, %v2964
        %v2966 = vmul.f32 %v2961, %v2965
        %vm2967 = vweird.f32 %v2960
        %vm2968 = vweird.f32 %v2961
        %vm2969 = vmor %vm2967, %vm2968
        %v2970 = vsel %vm2969, %v2961, %v2966
        %v2971 = vmul.f32 %v2955, %v2970
        %v2973 = vperm.slane %v2950, 0
        %v2975 = vmul.f32 %v2971, %v2973
        %v2977 = vperm.slane %v2951, 0
        %v2979 = vadd.f32 %v2975, %v2977
        %2980 = vst [vmem:[%s851] sm:$0xff] %v2979
        %s2981 = sand.u32 %s564, 1
        %s2982 = scalar_lea.sflag [#allocation3], %s2981
        %s2983 = sand.u32 %s564, 1
        %s2984 = smul.addr %s2983, 8
        %s2985 = scalar_lea.vmem [#allocation2], %s2984
        // Predicated region
        $region105: #{tpu_custom_call.1} parent=99 // pred_check
          %p2986 = pneg %p574
        $region106: #{tpu_custom_call.1} parent=99 // pred_check_branch
          %2988 = sbr.rel (%p2986) target = $region108
        $region107: #{tpu_custom_call.1} parent=99 // pred_region
          %2990 = vsyncadd %s2982, 0
          %s2991 = smul.addr %s38, 8
          %s2992 = scalar_lea.hbm %s20, %s2991
          %s2994 = sshll.u32 %s2985, 4
          %s2995 = int_to_ptr.vmem [resolvable:$true] %s2994
          %s2996 = sshll.u32 %s2992, 4
          %s2997 = int_to_ptr.hbm [resolvable:$true] %s2996
          %2999 = dma.vmem_to_hbm [thread:$0]  %s2995, 128, %s2997, %s2982
        $region108: #{tpu_custom_call.1} parent=99 // pred_fallthru
          _
      $region100: #{tpu_custom_call.1} parent=5 // pred_fallthru
        _
      %p3000 = scmp.le.s32.totalorder 2, %s29
      // Predicated region
      $region109: #{tpu_custom_call.1} parent=5 // pred_check
        %p3001 = pneg %p3000
      $region110: #{tpu_custom_call.1} parent=5 // pred_check_branch
        %3003 = sbr.rel (%p3001) target = $region112
      $region111: #{tpu_custom_call.1} parent=5 // pred_region
        %s3004 = ssub.s32 %s29, 2
        // Predicated region
        $region113: #{tpu_custom_call.1} parent=111 // pred_check
          %p3005 = pneg %p580
        $region114: #{tpu_custom_call.1} parent=111 // pred_check_branch
          %3007 = sbr.rel (%p3005) target = $region116
        $region115: #{tpu_custom_call.1} parent=111 // pred_region
          %s3008 = sand.u32 %s565, 1
          %s3009 = scalar_lea.sflag [#allocation3], %s3008
          %s3010 = sand.u32 %s565, 1
          %s3011 = smul.addr %s3010, 8
          %s3012 = scalar_lea.vmem [#allocation2], %s3011
          %3014 = dma.done %s3009, 128
        $region116: #{tpu_custom_call.1} parent=111 // pred_fallthru
          _
      $region112: #{tpu_custom_call.1} parent=5 // pred_fallthru
        _
    $region6: #{tpu_custom_call.1} parent=1 // loop_footer
      %s33 = sadd.s32 1, %s29
    $region7: #{tpu_custom_call.1} parent=1 // loop_footer_branch
      %28 = sbr.rel target = $region3
    $region8: #{tpu_custom_call.1} parent=1 // loop_exit
      _
    %3015 = vsyncpa [#allocation3], 1
    %s3016 = scalar_lea.sflag [#allocation3], 1
    %3017 = vsyncpa %s3016, 1

</llo_original>
